<compile_context>
chip_gen: v7x
topology: tpu7x:2x2x1
jax: 0.10.0
libtpu: 0.0.40
codegen_flags: <defaults>
</compile_context>

<pallas_src>
import functools

import jax
import jax.numpy as jnp
from jax.experimental import pallas as pl
from jax.experimental.pallas import tpu as pltpu

# Model dimensions from the PyTorch __init__.
L1, L2, L3, L4, L5, L6, L7 = 5, 64, 128, 94, 64, 32, 1
K_NEIGHBORS = 4
GRU_IN = 4 * L5          # 256
GRU_H = L6               # 32
GRU_LAYERS = 2

# Padded layout (zero padding -> numerically identical).
L4_PAD = 128             # nn1 output 94 -> 128 lanes

GRU_VMEM_LIMIT = 48 * 1024 * 1024


def _tpu_budgets():
    """(max_edge_rows, kernel-1 vmem limit, GRU t_chunk byte budget), per gen."""
    try:
        kind = jax.devices()[0].device_kind.lower()
    except Exception:  # pragma: no cover - be conservative if query fails
        kind = ""
    if "v5" in kind or "v6" in kind:
        # 128 MiB physical VMEM: big tiles amortize per-step overhead.
        return 16384, 80 * 1024 * 1024, 24 * 1024 * 1024
    # v7x (64 MiB VMEM per TC) or unknown: conservative.
    return 8192, 48 * 1024 * 1024, 12 * 1024 * 1024


# ---------------------------------------------------------------------------
# Kernel 1 (fused): EdgeConv MLP (shared by max/mean/add aggr) + nn1/nn2 +
# per-graph max/min/sum/mean pool + ReLU.  Grid over graph tiles, resident
# bf16 weights, f32 accumulation.
# ---------------------------------------------------------------------------
def _edgeconv_pool_kernel(ef_ref, w1_ref, b1_ref, w2_ref, b2_ref,
                          nwmax_ref, nwsum_ref, nb1_ref, nw2_ref, nb2_ref,
                          out_ref):
    gtile, pk, f2 = ef_ref.shape
    p_nodes = pk // K_NEIGHBORS

    ef = ef_ref[...].reshape(gtile * pk, f2)                       # bf16 [E, 10]
    h = jnp.dot(ef, w1_ref[...], preferred_element_type=jnp.float32) + b1_ref[...]
    h = jnp.maximum(h, 0.0)
    m = (jnp.dot(h.astype(jnp.bfloat16), w2_ref[...],
                 preferred_element_type=jnp.float32) + b2_ref[...])
    m = jnp.maximum(m, 0.0)                                        # f32 [E, 128]

    # Per-node aggregation over the K neighbours (EdgeConv aggr= max/mean/add).
    # mean = add / K is folded into the nn1 weight, so only max + sum here.
    m = m.reshape(gtile * p_nodes, K_NEIGHBORS, L3)
    x_max = jnp.max(m, axis=1)
    x_add = jnp.sum(m, axis=1)
    # (The two ReLUs on cat(max, mean, add) are no-ops: inputs are >= 0.)

    y = (jnp.dot(x_max.astype(jnp.bfloat16), nwmax_ref[...],
                 preferred_element_type=jnp.float32)
         + jnp.dot(x_add.astype(jnp.bfloat16), nwsum_ref[...],
                   preferred_element_type=jnp.float32)
         + nb1_ref[...])
    y = jnp.maximum(y, 0.0)                                        # nn1 + ReLU (94->128 padded)
    y = (jnp.dot(y.astype(jnp.bfloat16), nw2_ref[...],
                 preferred_element_type=jnp.float32) + nb2_ref[...])
    # nn2 (no ReLU before scatter); padded rows of nw2 are zero -> exact.

    # scatter_{max,min,sum,mean} over the batch vector == per-graph reduction
    # (constant nodes-per-graph); mean derived from the sum.
    yg = y.reshape(gtile, p_nodes, L5)
    a = jnp.max(yg, axis=1)
    b = jnp.min(yg, axis=1)
    c = jnp.sum(yg, axis=1)
    d = c * (1.0 / p_nodes)
    out_ref[...] = jnp.maximum(jnp.concatenate([a, b, c, d], axis=1), 0.0)  # [g, 256]


def _pick_gtile(num_graphs, nodes_per_graph, max_edge_rows):
    """Largest divisor of G that keeps edge rows per step bounded and respects
    the (8, sublane) constraint of the [gtile, 256] output block."""
    valid = [d for d in range(1, num_graphs + 1)
             if num_graphs % d == 0 and (d % 8 == 0 or d == num_graphs)]
    within = [d for d in valid
              if d * nodes_per_graph * K_NEIGHBORS <= max_edge_rows]
    return max(within) if within else min(valid)


def edgeconv_pool(ef, p, num_graphs, nodes_per_graph, gtile, vmem_limit):
    pk = nodes_per_graph * K_NEIGHBORS

    def full(shape):
        return pl.BlockSpec(shape, lambda *_: (0,) * len(shape))

    grid_spec = pltpu.PrefetchScalarGridSpec(
        num_scalar_prefetch=0,
        grid=(num_graphs // gtile,),
        in_specs=[
            pl.BlockSpec((gtile, pk, 2 * L1), lambda g: (g, 0, 0)),
            full((2 * L1, L2)), full((1, L2)),
            full((L2, L3)), full((1, L3)),
            full((L3, L4_PAD)), full((L3, L4_PAD)), full((1, L4_PAD)),
            full((L4_PAD, L5)), full((1, L5)),
        ],
        out_specs=pl.BlockSpec((gtile, 4 * L5), lambda g: (g, 0)),
    )
    return pl.pallas_call(
        _edgeconv_pool_kernel,
        out_shape=jax.ShapeDtypeStruct((num_graphs, 4 * L5), jnp.float32),
        grid_spec=grid_spec,
        compiler_params=pltpu.CompilerParams(
            dimension_semantics=("parallel",),          # v7x: shard over both TCs
            vmem_limit_bytes=vmem_limit,
        ),
    )(ef, p['w1'], p['b1'], p['w2'], p['b2'],
      p['nn1_wmax'], p['nn1_wsum'], p['nn1_b'], p['nn2_w'], p['nn2_b'])


# ---------------------------------------------------------------------------
# Kernel 2: 2-layer GRU in transposed layout (gates on sublanes, batch on
# lanes).  Grid over timestep chunks; layer-0 input projections for the whole
# chunk are precomputed into VMEM scratch, the recurrent loop is a fori_loop,
# and the layer-1 ih+hh matmuls are fused into one stacked MXU call.
# ---------------------------------------------------------------------------
def _gru_kernel(x_ref, h0_ref, wih0_ref, bih0_ref, whh0_ref, bhh0_ref,
                wl1_ref, bl1rz_ref, bl1in_ref, bl1hn_ref,
                out_ref, hout_ref, hstate, gi_scr):
    chunk = pl.program_id(0)
    t_chunk = x_ref.shape[0]
    H = GRU_H

    @pl.when(chunk == 0)
    def _():
        hstate[...] = h0_ref[...]

    # Resident weights / biases (loaded once per grid step).
    wih0 = wih0_ref[...]
    bih0 = bih0_ref[...]
    whh0 = whh0_ref[...]
    bhh0 = bhh0_ref[...]
    wl1 = wl1_ref[...]
    bl1rz = bl1rz_ref[...]
    bl1in = bl1in_ref[...]
    bl1hn = bl1hn_ref[...]

    # Hoisted layer-0 input->hidden projections for every timestep in the
    # chunk (no serial dependence; keeps the MXU busy before the recurrence).
    @pl.loop(0, t_chunk)
    def _(t):
        gi_scr[t] = (jnp.dot(wih0, x_ref[t],
                             preferred_element_type=jnp.float32) + bih0)

    def step(t, carry):
        h0p, h1p = carry                                      # f32 [32, B]

        # Layer 0 recurrent part.
        gi0 = gi_scr[t]                                       # f32 [96, B]
        gh0 = (jnp.dot(whh0, h0p.astype(jnp.bfloat16),
                       preferred_element_type=jnp.float32) + bhh0)
        r0 = jax.nn.sigmoid(gi0[0:H] + gh0[0:H])
        z0 = jax.nn.sigmoid(gi0[H:2 * H] + gh0[H:2 * H])
        n0 = jnp.tanh(gi0[2 * H:] + r0 * gh0[2 * H:])         # b_hn inside r*(...)
        h0n = (1.0 - z0) * n0 + z0 * h0p

        # Layer 1: single fused MXU call for the ih and hh contributions
        # (r,z sums combined; n-gate ih/hh kept in separate row blocks).
        hcat = jnp.concatenate([h0n, h1p], axis=0).astype(jnp.bfloat16)  # [64, B]
        g1 = jnp.dot(wl1, hcat, preferred_element_type=jnp.float32)      # [128, B]
        rz = jax.nn.sigmoid(g1[0:2 * H] + bl1rz)
        r1, z1 = rz[0:H], rz[H:2 * H]
        n1 = jnp.tanh(g1[2 * H:3 * H] + bl1in + r1 * (g1[3 * H:4 * H] + bl1hn))
        h1n = (1.0 - z1) * n1 + z1 * h1p

        out_ref[t] = h1n                                      # lane-dense [32, B]
        return (h0n, h1n)

    h0f, h1f = jax.lax.fori_loop(0, t_chunk, step,
                                 (hstate[0], hstate[1]),
                                 unroll=(t_chunk <= 8))
    hstate[0] = h0f
    hstate[1] = h1f

    @pl.when(chunk == pl.num_programs(0) - 1)
    def _():
        hout_ref[...] = hstate[...]


def _pick_t_chunk(seq, bsz, budget_bytes, max_chunk=16):
    # bf16 x (double-buffered) + f32 gi scratch + f32 out (double-buffered).
    per_t = bsz * (GRU_IN * 2 * 2 + 3 * GRU_H * 4 + GRU_H * 4 * 2)
    best = 1
    for d in range(1, seq + 1):
        if seq % d or d > max_chunk:
            continue
        if d * per_t <= budget_bytes:
            best = max(best, d)
    return best


def gru_forward(x_seq, h0_t, p, t_chunk):
    seq, fin, bsz = x_seq.shape

    def full(shape):
        return pl.BlockSpec(shape, lambda *_: (0,) * len(shape))

    grid_spec = pltpu.PrefetchScalarGridSpec(
        num_scalar_prefetch=0,
        grid=(seq // t_chunk,),
        in_specs=[
            pl.BlockSpec((t_chunk, fin, bsz), lambda c: (c, 0, 0)),
            full((GRU_LAYERS, GRU_H, bsz)),
            full((3 * GRU_H, GRU_IN)), full((3 * GRU_H, 1)),
            full((3 * GRU_H, GRU_H)), full((3 * GRU_H, 1)),
            full((4 * GRU_H, 2 * GRU_H)),
            full((2 * GRU_H, 1)), full((GRU_H, 1)), full((GRU_H, 1)),
        ],
        out_specs=(
            pl.BlockSpec((t_chunk, GRU_H, bsz), lambda c: (c, 0, 0)),
            pl.BlockSpec((GRU_LAYERS, GRU_H, bsz), lambda c: (0, 0, 0)),
        ),
        scratch_shapes=[
            pltpu.VMEM((GRU_LAYERS, GRU_H, bsz), jnp.float32),   # hidden state
            pltpu.VMEM((t_chunk, 3 * GRU_H, bsz), jnp.float32),  # hoisted gi
        ],
    )
    return pl.pallas_call(
        _gru_kernel,
        out_shape=(jax.ShapeDtypeStruct((seq, GRU_H, bsz), jnp.float32),
                   jax.ShapeDtypeStruct((GRU_LAYERS, GRU_H, bsz), jnp.float32)),
        grid_spec=grid_spec,
        compiler_params=pltpu.CompilerParams(
            dimension_semantics=("arbitrary",),          # serial recurrence
            vmem_limit_bytes=GRU_VMEM_LIMIT,
        ),
    )(x_seq, h0_t, p['gru_wih0'], p['gru_bih0'], p['gru_whh0'], p['gru_bhh0'],
      p['gru_wl1'], p['gru_bl1_rz'], p['gru_bl1_in'], p['gru_bl1_hn'])


# ---------------------------------------------------------------------------
# Glue: per-graph KNN (block-diagonal batch mask exploited -> G*P^2, not N^2).
# ---------------------------------------------------------------------------
# TODO(synk): knn top-k + neighbour gather are data-dependent indexing with no
# clean Pallas equivalent at these sizes; done in plain JAX, everything that
# consumes the edges runs in the Pallas kernels.
def knn_neighbors_per_graph(pos_g):
    g, p_nodes, _ = pos_g.shape
    d2 = jnp.sum((pos_g[:, :, None, :] - pos_g[:, None, :, :]) ** 2, axis=-1)
    big = jnp.asarray(jnp.finfo(jnp.float32).max, jnp.float32)
    d2 = jnp.where(jnp.eye(p_nodes, dtype=bool)[None], big, d2)    # exclude self
    _, idx = jax.lax.top_k(-d2, K_NEIGHBORS)                       # [G, P, K]
    return idx


# ---------------------------------------------------------------------------
# Full forward pass
# ---------------------------------------------------------------------------
@functools.partial(jax.jit, static_argnums=(4, 5))
def net_forward(params, x, batch, h0, num_graphs, gru_batch_size):
    # TODO(synk): constant nodes-per-graph assumed (matches the reference
    # pipeline's fixed-size reshape); ragged `batch` segments are not handled.
    del batch
    n = x.shape[0]
    nodes_per_graph = n // num_graphs

    # KNNAmp(4, x, batch): knn graph over pos = x[:, 0:3], per graph.
    x_g = x.reshape(num_graphs, nodes_per_graph, L1)
    idx = knn_neighbors_per_graph(x_g[:, :, :3])                   # [G, P, K]
    x_j = jax.vmap(lambda xg, ig: xg[ig])(x_g, idx)                # [G, P, K, L1]
    x_i = jnp.broadcast_to(x_g[:, :, None, :], x_j.shape)
    # EdgeConv message input: cat([x_i, x_j - x_i]); bf16 halves its DMA cost.
    # TODO(synk): ef is still materialised in HBM (~8x the node-feature bytes);
    # the neighbour gather is data-dependent and stays in XLA for now.
    ef = jnp.concatenate([x_i, x_j - x_i], axis=-1)                # [G, P, K, 10]
    ef = ef.reshape(num_graphs, nodes_per_graph * K_NEIGHBORS,
                    2 * L1).astype(jnp.bfloat16)

    max_edge_rows, vmem_k1, t_budget = _tpu_budgets()
    gtile = _pick_gtile(num_graphs, nodes_per_graph, max_edge_rows)
    pooled = edgeconv_pool(ef, params, num_graphs, nodes_per_graph,
                           gtile, vmem_k1)                         # [G, 256] f32

    seq_length = num_graphs // gru_batch_size
    # Mirrors: torch.reshape(x, (seq, 256, batch_size)).  The GRU kernel works
    # directly in this transposed layout (batch on lanes), so no transpose.
    x_seq = pooled.reshape(seq_length, 4 * L5,
                           gru_batch_size).astype(jnp.bfloat16)
    h0_t = jnp.transpose(h0, (0, 2, 1))                            # [layers, H, B]

    t_chunk = _pick_t_chunk(seq_length, gru_batch_size, t_budget)
    gru_out_t, h_out_t = gru_forward(x_seq, h0_t, params, t_chunk)

    # Mirrors: torch.reshape(x.transpose(1, 2), (-1, x.shape[2]));
    # gru_out_t is already [seq, H, B].
    x_flat = gru_out_t.reshape(-1, GRU_H)

    # Head: ReLU -> nn4 (32->1) -> ReLU.  Left to XLA (1-lane output, tiny
    # matmul; a dedicated Pallas kernel is slower than the XLA fusion).
    out = jnp.maximum(
        jnp.dot(jnp.maximum(x_flat, 0.0), params['nn4_w']) + params['nn4_b'], 0.0)
    h_out = jnp.transpose(h_out_t, (0, 2, 1))                      # [layers, B, H]
    return out, h_out


# ---------------------------------------------------------------------------
# Parameters: raw shapes follow the PyTorch __init__ (stored as [in, out],
# GRU gates column-ordered [r | z | n]); prepare_params produces the padded,
# bf16, kernel-ready layouts.
# ---------------------------------------------------------------------------
def init_params(key):
    def dense(k, fan_in, fan_out):
        kw, kb = jax.random.split(k)
        w = jax.random.normal(kw, (fan_in, fan_out), jnp.float32) * 0.1
        b = jax.random.normal(kb, (1, fan_out), jnp.float32) * 0.05
        return w, b

    keys = jax.random.split(key, 9)
    p = {}
    p['w1'], p['b1'] = dense(keys[0], 2 * L1, L2)            # nn_conv1 Linear(10, 64)
    p['w2'], p['b2'] = dense(keys[1], L2, L3)                # nn_conv1 Linear(64, 128)
    p['nn1_w'], p['nn1_b'] = dense(keys[2], 3 * L3, L4)      # Linear(384, 94)
    p['nn2_w'], p['nn2_b'] = dense(keys[3], L4, L5)          # Linear(94, 64)
    # GRU weights stored as [in, 3*H], gate column order [r | z | n]
    # (real PyTorch checkpoints are [3H, in] row blocks: transpose + keep order).
    p['gru_wih0'], p['gru_bih0'] = dense(keys[4], GRU_IN, 3 * GRU_H)
    p['gru_whh0'], p['gru_bhh0'] = dense(keys[5], GRU_H, 3 * GRU_H)
    p['gru_wih1'], p['gru_bih1'] = dense(keys[6], GRU_H, 3 * GRU_H)
    p['gru_whh1'], p['gru_bhh1'] = dense(keys[7], GRU_H, 3 * GRU_H)
    p['nn4_w'], p['nn4_b'] = dense(keys[8], GRU_H, L7)       # Linear(32, 1)
    return p


def prepare_params(raw):
    bf = jnp.bfloat16
    p = {
        'w1': raw['w1'].astype(bf), 'b1': raw['b1'],
        'w2': raw['w2'].astype(bf), 'b2': raw['b2'],
        'nn2_b': raw['nn2_b'],
        'nn4_w': raw['nn4_w'], 'nn4_b': raw['nn4_b'],
    }
    # nn1: split per aggregation branch, fold the /K of the neighbour-mean
    # branch into the weight, merge with the add branch; pad 94 -> 128 output
    # cols (zeros => exact).  nn2: pad 94 input rows -> 128 (zeros => exact).
    w_max = raw['nn1_w'][:L3]
    w_sum = raw['nn1_w'][L3:2 * L3] * (1.0 / K_NEIGHBORS) + raw['nn1_w'][2 * L3:]
    p['nn1_wmax'] = (jnp.zeros((L3, L4_PAD), jnp.float32)
                     .at[:, :L4].set(w_max).astype(bf))
    p['nn1_wsum'] = (jnp.zeros((L3, L4_PAD), jnp.float32)
                     .at[:, :L4].set(w_sum).astype(bf))
    p['nn1_b'] = jnp.zeros((1, L4_PAD), jnp.float32).at[:, :L4].set(raw['nn1_b'])
    p['nn2_w'] = (jnp.zeros((L4_PAD, L5), jnp.float32)
                  .at[:L4, :].set(raw['nn2_w']).astype(bf))

    # GRU: transposed ([3H, in], i.e. PyTorch-native) orientation; gates land
    # on sublanes (multiples of 32), batch on lanes -> no 128-lane gate pad.
    wih0 = raw['gru_wih0'].T                                  # [96, 256]
    whh0 = raw['gru_whh0'].T                                  # [96, 32]
    wih1 = raw['gru_wih1'].T                                  # [96, 32]
    whh1 = raw['gru_whh1'].T                                  # [96, 32]
    p['gru_wih0'] = wih0.astype(bf)
    p['gru_whh0'] = whh0.astype(bf)
    p['gru_bih0'] = raw['gru_bih0'].reshape(3 * GRU_H, 1)
    p['gru_bhh0'] = raw['gru_bhh0'].reshape(3 * GRU_H, 1)
    # Layer-1 fused weight [128, 64] acting on concat([h0; h1]):
    #   rows  0: 64 -> r,z gate sums (ih | hh)
    #   rows 64: 96 -> n-gate ih contribution
    #   rows 96:128 -> n-gate hh contribution (kept separate: n = tanh(gi_n + r*gh_n))
    zero = jnp.zeros((GRU_H, GRU_H), jnp.float32)
    wl1 = jnp.concatenate([
        jnp.concatenate([wih1[:2 * GRU_H], whh1[:2 * GRU_H]], axis=1),
        jnp.concatenate([wih1[2 * GRU_H:], zero], axis=1),
        jnp.concatenate([zero, whh1[2 * GRU_H:]], axis=1),
    ], axis=0)
    p['gru_wl1'] = wl1.astype(bf)
    bih1 = raw['gru_bih1'].reshape(3 * GRU_H)
    bhh1 = raw['gru_bhh1'].reshape(3 * GRU_H)
    p['gru_bl1_rz'] = (bih1[:2 * GRU_H] + bhh1[:2 * GRU_H]).reshape(2 * GRU_H, 1)
    p['gru_bl1_in'] = bih1[2 * GRU_H:].reshape(GRU_H, 1)
    p['gru_bl1_hn'] = bhh1[2 * GRU_H:].reshape(GRU_H, 1)
    return p


if __name__ == "__main__":
    # Small shapes (the module-level batch_size=1024 is shrunk to 4 here).
    GRU_BATCH = 4
    SEQ_LEN = 2
    NODES_PER_GRAPH = 8
    num_graphs = SEQ_LEN * GRU_BATCH           # 8 graphs
    n_nodes = num_graphs * NODES_PER_GRAPH     # 64 nodes total

    key = jax.random.PRNGKey(0)
    kx, kh, kp = jax.random.split(key, 3)
    params = prepare_params(init_params(kp))

    x = jax.random.normal(kx, (n_nodes, L1), jnp.float32)              # data.x
    batch = jnp.repeat(jnp.arange(num_graphs, dtype=jnp.int32),
                       NODES_PER_GRAPH)                                # data.batch
    h0 = jax.random.normal(kh, (GRU_LAYERS, GRU_BATCH, GRU_H),
                           jnp.float32) * 0.1                          # h_1

    out, h_out = net_forward(params, x, batch, h0, num_graphs, GRU_BATCH)
    jax.block_until_ready((out, h_out))

    assert out.shape == (SEQ_LEN * GRU_BATCH, L7)
    assert h_out.shape == (GRU_LAYERS, GRU_BATCH, GRU_H)
    print("KERNEL_OK")
</pallas_src>

<mosaic_0001>
module attributes {stable_mosaic.version = 11 : i64} {
  func.func @_edgeconv_pool_kernel(%arg0: i32, %arg1: memref<8x32x10xbf16, #tpu.memory_space<vmem>>, %arg2: memref<10x64xbf16, #tpu.memory_space<vmem>>, %arg3: memref<1x64xf32, #tpu.memory_space<vmem>>, %arg4: memref<64x128xbf16, #tpu.memory_space<vmem>>, %arg5: memref<1x128xf32, #tpu.memory_space<vmem>>, %arg6: memref<128x128xbf16, #tpu.memory_space<vmem>>, %arg7: memref<128x128xbf16, #tpu.memory_space<vmem>>, %arg8: memref<1x128xf32, #tpu.memory_space<vmem>>, %arg9: memref<128x64xbf16, #tpu.memory_space<vmem>>, %arg10: memref<1x64xf32, #tpu.memory_space<vmem>>, %arg11: memref<8x256xf32, #tpu.memory_space<vmem>>) attributes {dimension_semantics = [#tpu.dimension_semantics<parallel>], iteration_bounds = array<i64: 1>, scalar_prefetch = 0 : i64, scratch_operands = 0 : i64, tpu.core_type = #tpu.core_type<tc>, window_params = [{transform_indices = @transform_0, window_bounds = array<i64: 8, 32, 10>}, {pipeline_mode = #tpu.pipeline_mode<synchronous>, transform_indices = @transform_1, window_bounds = array<i64: 10, 64>}, {pipeline_mode = #tpu.pipeline_mode<synchronous>, transform_indices = @transform_2, window_bounds = array<i64: 1, 64>}, {pipeline_mode = #tpu.pipeline_mode<synchronous>, transform_indices = @transform_3, window_bounds = array<i64: 64, 128>}, {pipeline_mode = #tpu.pipeline_mode<synchronous>, transform_indices = @transform_4, window_bounds = array<i64: 1, 128>}, {pipeline_mode = #tpu.pipeline_mode<synchronous>, transform_indices = @transform_5, window_bounds = array<i64: 128, 128>}, {pipeline_mode = #tpu.pipeline_mode<synchronous>, transform_indices = @transform_6, window_bounds = array<i64: 128, 128>}, {pipeline_mode = #tpu.pipeline_mode<synchronous>, transform_indices = @transform_7, window_bounds = array<i64: 1, 128>}, {pipeline_mode = #tpu.pipeline_mode<synchronous>, transform_indices = @transform_8, window_bounds = array<i64: 128, 64>}, {pipeline_mode = #tpu.pipeline_mode<synchronous>, transform_indices = @transform_9, window_bounds = array<i64: 1, 64>}, {transform_indices = @transform_10, window_bounds = array<i64: 8, 256>}]} {
    %c0 = arith.constant 0 : index
    %c0_0 = arith.constant 0 : index
    %c0_1 = arith.constant 0 : index
    %0 = vector.load %arg1[%c0, %c0_0, %c0_1] : memref<8x32x10xbf16, #tpu.memory_space<vmem>>, vector<8x32x10xbf16>
    %1 = vector.shape_cast %0 : vector<8x32x10xbf16> to vector<256x10xbf16>
    %c0_2 = arith.constant 0 : index
    %c0_3 = arith.constant 0 : index
    %2 = vector.load %arg2[%c0_2, %c0_3] : memref<10x64xbf16, #tpu.memory_space<vmem>>, vector<10x64xbf16>
    %cst = arith.constant dense<0.000000e+00> : vector<256x64xf32>
    %3 = tpu.matmul %1, %2, %cst {dimension_numbers = #tpu.dot_dimension_numbers<[1], [0], [0], [1], [0, 0, 1, 1], [], []>} : vector<256x10xbf16>, vector<10x64xbf16>, vector<256x64xf32> -> vector<256x64xf32>
    %c0_4 = arith.constant 0 : index
    %c0_5 = arith.constant 0 : index
    %4 = vector.load %arg3[%c0_4, %c0_5] : memref<1x64xf32, #tpu.memory_space<vmem>>, vector<1x64xf32>
    %5 = vector.broadcast %4 : vector<1x64xf32> to vector<256x64xf32>
    %6 = arith.addf %3, %5 : vector<256x64xf32>
    %cst_6 = arith.constant 0.000000e+00 : f32
    %7 = vector.broadcast %cst_6 : f32 to vector<256x64xf32>
    %8 = arith.maximumf %6, %7 : vector<256x64xf32>
    %9 = arith.truncf %8 : vector<256x64xf32> to vector<256x64xbf16>
    %c0_7 = arith.constant 0 : index
    %c0_8 = arith.constant 0 : index
    %10 = vector.load %arg4[%c0_7, %c0_8] : memref<64x128xbf16, #tpu.memory_space<vmem>>, vector<64x128xbf16>
    %cst_9 = arith.constant dense<0.000000e+00> : vector<256x128xf32>
    %11 = tpu.matmul %9, %10, %cst_9 {dimension_numbers = #tpu.dot_dimension_numbers<[1], [0], [0], [1], [0, 0, 1, 1], [], []>} : vector<256x64xbf16>, vector<64x128xbf16>, vector<256x128xf32> -> vector<256x128xf32>
    %c0_10 = arith.constant 0 : index
    %c0_11 = arith.constant 0 : index
    %12 = vector.load %arg5[%c0_10, %c0_11] : memref<1x128xf32, #tpu.memory_space<vmem>>, vector<1x128xf32>
    %13 = vector.broadcast %12 : vector<1x128xf32> to vector<256x128xf32>
    %14 = arith.addf %11, %13 : vector<256x128xf32>
    %cst_12 = arith.constant 0.000000e+00 : f32
    %15 = vector.broadcast %cst_12 : f32 to vector<256x128xf32>
    %16 = arith.maximumf %14, %15 : vector<256x128xf32>
    %17 = vector.shape_cast %16 : vector<256x128xf32> to vector<64x4x128xf32>
    %cst_13 = arith.constant dense<0xFF800000> : vector<64x128xf32>
    %18 = vector.multi_reduction <maximumf>, %17, %cst_13 [1] : vector<64x4x128xf32> to vector<64x128xf32>
    %cst_14 = arith.constant dense<0.000000e+00> : vector<64x128xf32>
    %19 = vector.multi_reduction <add>, %17, %cst_14 [1] : vector<64x4x128xf32> to vector<64x128xf32>
    %20 = arith.truncf %18 : vector<64x128xf32> to vector<64x128xbf16>
    %c0_15 = arith.constant 0 : index
    %c0_16 = arith.constant 0 : index
    %21 = vector.load %arg6[%c0_15, %c0_16] : memref<128x128xbf16, #tpu.memory_space<vmem>>, vector<128x128xbf16>
    %cst_17 = arith.constant dense<0.000000e+00> : vector<64x128xf32>
    %22 = tpu.matmul %20, %21, %cst_17 {dimension_numbers = #tpu.dot_dimension_numbers<[1], [0], [0], [1], [0, 0, 1, 1], [], []>} : vector<64x128xbf16>, vector<128x128xbf16>, vector<64x128xf32> -> vector<64x128xf32>
    %23 = arith.truncf %19 : vector<64x128xf32> to vector<64x128xbf16>
    %c0_18 = arith.constant 0 : index
    %c0_19 = arith.constant 0 : index
    %24 = vector.load %arg7[%c0_18, %c0_19] : memref<128x128xbf16, #tpu.memory_space<vmem>>, vector<128x128xbf16>
    %cst_20 = arith.constant dense<0.000000e+00> : vector<64x128xf32>
    %25 = tpu.matmul %23, %24, %cst_20 {dimension_numbers = #tpu.dot_dimension_numbers<[1], [0], [0], [1], [0, 0, 1, 1], [], []>} : vector<64x128xbf16>, vector<128x128xbf16>, vector<64x128xf32> -> vector<64x128xf32>
    %26 = arith.addf %22, %25 : vector<64x128xf32>
    %c0_21 = arith.constant 0 : index
    %c0_22 = arith.constant 0 : index
    %27 = vector.load %arg8[%c0_21, %c0_22] : memref<1x128xf32, #tpu.memory_space<vmem>>, vector<1x128xf32>
    %28 = vector.broadcast %27 : vector<1x128xf32> to vector<64x128xf32>
    %29 = arith.addf %26, %28 : vector<64x128xf32>
    %cst_23 = arith.constant 0.000000e+00 : f32
    %30 = vector.broadcast %cst_23 : f32 to vector<64x128xf32>
    %31 = arith.maximumf %29, %30 : vector<64x128xf32>
    %32 = arith.truncf %31 : vector<64x128xf32> to vector<64x128xbf16>
    %c0_24 = arith.constant 0 : index
    %c0_25 = arith.constant 0 : index
    %33 = vector.load %arg9[%c0_24, %c0_25] : memref<128x64xbf16, #tpu.memory_space<vmem>>, vector<128x64xbf16>
    %cst_26 = arith.constant dense<0.000000e+00> : vector<64x64xf32>
    %34 = tpu.matmul %32, %33, %cst_26 {dimension_numbers = #tpu.dot_dimension_numbers<[1], [0], [0], [1], [0, 0, 1, 1], [], []>} : vector<64x128xbf16>, vector<128x64xbf16>, vector<64x64xf32> -> vector<64x64xf32>
    %c0_27 = arith.constant 0 : index
    %c0_28 = arith.constant 0 : index
    %35 = vector.load %arg10[%c0_27, %c0_28] : memref<1x64xf32, #tpu.memory_space<vmem>>, vector<1x64xf32>
    %36 = vector.broadcast %35 : vector<1x64xf32> to vector<64x64xf32>
    %37 = arith.addf %34, %36 : vector<64x64xf32>
    %38 = vector.shape_cast %37 : vector<64x64xf32> to vector<8x8x64xf32>
    %cst_29 = arith.constant dense<0xFF800000> : vector<8x64xf32>
    %39 = vector.multi_reduction <maximumf>, %38, %cst_29 [1] : vector<8x8x64xf32> to vector<8x64xf32>
    %cst_30 = arith.constant dense<0x7F800000> : vector<8x64xf32>
    %40 = vector.multi_reduction <minimumf>, %38, %cst_30 [1] : vector<8x8x64xf32> to vector<8x64xf32>
    %cst_31 = arith.constant dense<0.000000e+00> : vector<8x64xf32>
    %41 = vector.multi_reduction <add>, %38, %cst_31 [1] : vector<8x8x64xf32> to vector<8x64xf32>
    %cst_32 = arith.constant 1.250000e-01 : f32
    %42 = vector.broadcast %cst_32 : f32 to vector<8x64xf32>
    %43 = arith.mulf %41, %42 : vector<8x64xf32>
    %44 = tpu.concatenate %39, %40, %41, %43 in 1 : vector<8x64xf32>, vector<8x64xf32>, vector<8x64xf32>, vector<8x64xf32> -> vector<8x256xf32>
    %cst_33 = arith.constant 0.000000e+00 : f32
    %45 = vector.broadcast %cst_33 : f32 to vector<8x256xf32>
    %46 = arith.maximumf %44, %45 : vector<8x256xf32>
    %c0_34 = arith.constant 0 : index
    %c0_35 = arith.constant 0 : index
    %47 = vector.load %arg11[%c0_34, %c0_35] : memref<8x256xf32, #tpu.memory_space<vmem>>, vector<8x256xf32>
    tpu.vector_store %arg11[%c0_34, %c0_35], %46 {strides = array<i32>} : memref<8x256xf32, #tpu.memory_space<vmem>>, vector<8x256xf32>,
    return
  }
  func.func @transform_0(%arg0: i32) -> (i32, i32, i32) {
    %c0_i32 = arith.constant 0 : i32
    %c0_i32_0 = arith.constant 0 : i32
    %c0_i32_1 = arith.constant 0 : i32
    return %arg0, %c0_i32, %c0_i32_0 : i32, i32, i32
  }
  func.func @transform_1(%arg0: i32) -> (i32, i32) {
    %c0_i32 = arith.constant 0 : i32
    %c0_i32_0 = arith.constant 0 : i32
    %c0_i32_1 = arith.constant 0 : i32
    return %c0_i32, %c0_i32_0 : i32, i32
  }
  func.func @transform_2(%arg0: i32) -> (i32, i32) {
    %c0_i32 = arith.constant 0 : i32
    %c0_i32_0 = arith.constant 0 : i32
    %c0_i32_1 = arith.constant 0 : i32
    return %c0_i32, %c0_i32_0 : i32, i32
  }
  func.func @transform_3(%arg0: i32) -> (i32, i32) {
    %c0_i32 = arith.constant 0 : i32
    %c0_i32_0 = arith.constant 0 : i32
    %c0_i32_1 = arith.constant 0 : i32
    return %c0_i32, %c0_i32_0 : i32, i32
  }
  func.func @transform_4(%arg0: i32) -> (i32, i32) {
    %c0_i32 = arith.constant 0 : i32
    %c0_i32_0 = arith.constant 0 : i32
    %c0_i32_1 = arith.constant 0 : i32
    return %c0_i32, %c0_i32_0 : i32, i32
  }
  func.func @transform_5(%arg0: i32) -> (i32, i32) {
    %c0_i32 = arith.constant 0 : i32
    %c0_i32_0 = arith.constant 0 : i32
    %c0_i32_1 = arith.constant 0 : i32
    return %c0_i32, %c0_i32_0 : i32, i32
  }
  func.func @transform_6(%arg0: i32) -> (i32, i32) {
    %c0_i32 = arith.constant 0 : i32
    %c0_i32_0 = arith.constant 0 : i32
    %c0_i32_1 = arith.constant 0 : i32
    return %c0_i32, %c0_i32_0 : i32, i32
  }
  func.func @transform_7(%arg0: i32) -> (i32, i32) {
    %c0_i32 = arith.constant 0 : i32
    %c0_i32_0 = arith.constant 0 : i32
    %c0_i32_1 = arith.constant 0 : i32
    return %c0_i32, %c0_i32_0 : i32, i32
  }
  func.func @transform_8(%arg0: i32) -> (i32, i32) {
    %c0_i32 = arith.constant 0 : i32
    %c0_i32_0 = arith.constant 0 : i32
    %c0_i32_1 = arith.constant 0 : i32
    return %c0_i32, %c0_i32_0 : i32, i32
  }
  func.func @transform_9(%arg0: i32) -> (i32, i32) {
    %c0_i32 = arith.constant 0 : i32
    %c0_i32_0 = arith.constant 0 : i32
    %c0_i32_1 = arith.constant 0 : i32
    return %c0_i32, %c0_i32_0 : i32, i32
  }
  func.func @transform_10(%arg0: i32) -> (i32, i32) {
    %c0_i32 = arith.constant 0 : i32
    %c0_i32_0 = arith.constant 0 : i32
    return %arg0, %c0_i32 : i32, i32
  }
}

module attributes {stable_mosaic.version = 11 : i64} {
  func.func @_gru_kernel(%arg0: i32, %arg1: memref<2x256x4xbf16, #tpu.memory_space<vmem>>, %arg2: memref<2x32x4xf32, #tpu.memory_space<vmem>>, %arg3: memref<96x256xbf16, #tpu.memory_space<vmem>>, %arg4: memref<96x1xf32, #tpu.memory_space<vmem>>, %arg5: memref<96x32xbf16, #tpu.memory_space<vmem>>, %arg6: memref<96x1xf32, #tpu.memory_space<vmem>>, %arg7: memref<128x64xbf16, #tpu.memory_space<vmem>>, %arg8: memref<64x1xf32, #tpu.memory_space<vmem>>, %arg9: memref<32x1xf32, #tpu.memory_space<vmem>>, %arg10: memref<32x1xf32, #tpu.memory_space<vmem>>, %arg11: memref<2x32x4xf32, #tpu.memory_space<vmem>>, %arg12: memref<2x32x4xf32, #tpu.memory_space<vmem>>, %arg13: memref<2x32x4xf32, #tpu.memory_space<vmem>>, %arg14: memref<2x96x4xf32, #tpu.memory_space<vmem>>) attributes {dimension_semantics = [#tpu.dimension_semantics<arbitrary>], iteration_bounds = array<i64: 1>, scalar_prefetch = 0 : i64, scratch_operands = 2 : i64, tpu.core_type = #tpu.core_type<tc>, window_params = [{transform_indices = @transform_0, window_bounds = array<i64: 2, 256, 4>}, {pipeline_mode = #tpu.pipeline_mode<synchronous>, transform_indices = @transform_1, window_bounds = array<i64: 2, 32, 4>}, {pipeline_mode = #tpu.pipeline_mode<synchronous>, transform_indices = @transform_2, window_bounds = array<i64: 96, 256>}, {pipeline_mode = #tpu.pipeline_mode<synchronous>, transform_indices = @transform_3, window_bounds = array<i64: 96, 1>}, {pipeline_mode = #tpu.pipeline_mode<synchronous>, transform_indices = @transform_4, window_bounds = array<i64: 96, 32>}, {pipeline_mode = #tpu.pipeline_mode<synchronous>, transform_indices = @transform_5, window_bounds = array<i64: 96, 1>}, {pipeline_mode = #tpu.pipeline_mode<synchronous>, transform_indices = @transform_6, window_bounds = array<i64: 128, 64>}, {pipeline_mode = #tpu.pipeline_mode<synchronous>, transform_indices = @transform_7, window_bounds = array<i64: 64, 1>}, {pipeline_mode = #tpu.pipeline_mode<synchronous>, transform_indices = @transform_8, window_bounds = array<i64: 32, 1>}, {pipeline_mode = #tpu.pipeline_mode<synchronous>, transform_indices = @transform_9, window_bounds = array<i64: 32, 1>}, {transform_indices = @transform_10, window_bounds = array<i64: 2, 32, 4>}, {pipeline_mode = #tpu.pipeline_mode<synchronous>, transform_indices = @transform_11, window_bounds = array<i64: 2, 32, 4>}]} {
    %c0_i32 = arith.constant 0 : i32
    %0 = arith.cmpi eq, %arg0, %c0_i32 : i32
    %1 = arith.extui %0 : i1 to i32
    %c0_i32_0 = arith.constant 0 : i32
    %2 = arith.cmpi ne, %1, %c0_i32_0 : i32
    scf.if %2 {
      %c0_55 = arith.constant 0 : index
      %c0_56 = arith.constant 0 : index
      %c0_57 = arith.constant 0 : index
      %153 = vector.load %arg2[%c0_55, %c0_56, %c0_57] : memref<2x32x4xf32, #tpu.memory_space<vmem>>, vector<2x32x4xf32>
      %c0_58 = arith.constant 0 : index
      %c0_59 = arith.constant 0 : index
      %c0_60 = arith.constant 0 : index
      %154 = vector.load %arg13[%c0_58, %c0_59, %c0_60] : memref<2x32x4xf32, #tpu.memory_space<vmem>>, vector<2x32x4xf32>
      tpu.vector_store %arg13[%c0_58, %c0_59, %c0_60], %153 {strides = array<i32>} : memref<2x32x4xf32, #tpu.memory_space<vmem>>, vector<2x32x4xf32>,
    } else {
    }
    %c0 = arith.constant 0 : index
    %c0_1 = arith.constant 0 : index
    %3 = vector.load %arg3[%c0, %c0_1] : memref<96x256xbf16, #tpu.memory_space<vmem>>, vector<96x256xbf16>
    %c0_2 = arith.constant 0 : index
    %c0_3 = arith.constant 0 : index
    %4 = vector.load %arg4[%c0_2, %c0_3] : memref<96x1xf32, #tpu.memory_space<vmem>>, vector<96x1xf32>
    %c0_4 = arith.constant 0 : index
    %c0_5 = arith.constant 0 : index
    %5 = vector.load %arg5[%c0_4, %c0_5] : memref<96x32xbf16, #tpu.memory_space<vmem>>, vector<96x32xbf16>
    %c0_6 = arith.constant 0 : index
    %c0_7 = arith.constant 0 : index
    %6 = vector.load %arg6[%c0_6, %c0_7] : memref<96x1xf32, #tpu.memory_space<vmem>>, vector<96x1xf32>
    %c0_8 = arith.constant 0 : index
    %c0_9 = arith.constant 0 : index
    %7 = vector.load %arg7[%c0_8, %c0_9] : memref<128x64xbf16, #tpu.memory_space<vmem>>, vector<128x64xbf16>
    %c0_10 = arith.constant 0 : index
    %c0_11 = arith.constant 0 : index
    %8 = vector.load %arg8[%c0_10, %c0_11] : memref<64x1xf32, #tpu.memory_space<vmem>>, vector<64x1xf32>
    %c0_12 = arith.constant 0 : index
    %c0_13 = arith.constant 0 : index
    %9 = vector.load %arg9[%c0_12, %c0_13] : memref<32x1xf32, #tpu.memory_space<vmem>>, vector<32x1xf32>
    %c0_14 = arith.constant 0 : index
    %c0_15 = arith.constant 0 : index
    %10 = vector.load %arg10[%c0_14, %c0_15] : memref<32x1xf32, #tpu.memory_space<vmem>>, vector<32x1xf32>
    %c0_i32_16 = arith.constant 0 : i32
    %c2_i32 = arith.constant 2 : i32
    %11 = arith.addi %c0_i32_16, %c2_i32 : i32
    %c1_i32 = arith.constant 1 : i32
    scf.for %arg15 = %c0_i32_16 to %11 step %c1_i32  : i32 {
      %c1_i32_55 = arith.constant 1 : i32
      %153 = arith.muli %arg15, %c1_i32_55 : i32
      %c0_i32_56 = arith.constant 0 : i32
      %154 = arith.addi %c0_i32_56, %153 : i32
      %155 = arith.index_cast %154 : i32 to index
      %c0_57 = arith.constant 0 : index
      %c0_58 = arith.constant 0 : index
      %156 = vector.load %arg1[%155, %c0_57, %c0_58] : memref<2x256x4xbf16, #tpu.memory_space<vmem>>, vector<1x256x4xbf16>
      %157 = vector.shape_cast %156 : vector<1x256x4xbf16> to vector<256x4xbf16>
      %cst_59 = arith.constant dense<0.000000e+00> : vector<96x4xf32>
      %158 = tpu.matmul %3, %157, %cst_59 {dimension_numbers = #tpu.dot_dimension_numbers<[1], [0], [0], [1], [0, 0, 1, 1], [], []>} : vector<96x256xbf16>, vector<256x4xbf16>, vector<96x4xf32> -> vector<96x4xf32>
      %159 = vector.broadcast %4 : vector<96x1xf32> to vector<96x4xf32>
      %160 = arith.addf %158, %159 : vector<96x4xf32>
      %161 = arith.index_cast %154 : i32 to index
      %c0_60 = arith.constant 0 : index
      %c0_61 = arith.constant 0 : index
      %162 = vector.load %arg14[%161, %c0_60, %c0_61] : memref<2x96x4xf32, #tpu.memory_space<vmem>>, vector<1x96x4xf32>
      %163 = vector.shape_cast %162 : vector<1x96x4xf32> to vector<96x4xf32>
      %164 = vector.shape_cast %160 : vector<96x4xf32> to vector<1x96x4xf32>
      tpu.vector_store %arg14[%161, %c0_60, %c0_61], %164 {strides = array<i32>} : memref<2x96x4xf32, #tpu.memory_space<vmem>>, vector<1x96x4xf32>,
    }
    %c2_i32_17 = arith.constant 2 : i32
    %c0_18 = arith.constant 0 : index
    %c0_19 = arith.constant 0 : index
    %c0_20 = arith.constant 0 : index
    %12 = vector.load %arg13[%c0_18, %c0_19, %c0_20] : memref<2x32x4xf32, #tpu.memory_space<vmem>>, vector<1x32x4xf32>
    %13 = vector.shape_cast %12 : vector<1x32x4xf32> to vector<32x4xf32>
    %c1 = arith.constant 1 : index
    %c0_21 = arith.constant 0 : index
    %c0_22 = arith.constant 0 : index
    %14 = vector.load %arg13[%c1, %c0_21, %c0_22] : memref<2x32x4xf32, #tpu.memory_space<vmem>>, vector<1x32x4xf32>
    %15 = vector.shape_cast %14 : vector<1x32x4xf32> to vector<32x4xf32>
    %c0_i32_23 = arith.constant 0 : i32
    %16 = arith.index_cast %c0_i32_23 : i32 to index
    %c0_24 = arith.constant 0 : index
    %c0_25 = arith.constant 0 : index
    %17 = vector.load %arg14[%16, %c0_24, %c0_25] : memref<2x96x4xf32, #tpu.memory_space<vmem>>, vector<1x96x4xf32>
    %18 = vector.shape_cast %17 : vector<1x96x4xf32> to vector<96x4xf32>
    %19 = arith.truncf %13 : vector<32x4xf32> to vector<32x4xbf16>
    %cst = arith.constant dense<0.000000e+00> : vector<96x4xf32>
    %20 = tpu.matmul %5, %19, %cst {dimension_numbers = #tpu.dot_dimension_numbers<[1], [0], [0], [1], [0, 0, 1, 1], [], []>} : vector<96x32xbf16>, vector<32x4xbf16>, vector<96x4xf32> -> vector<96x4xf32>
    %21 = vector.broadcast %6 : vector<96x1xf32> to vector<96x4xf32>
    %22 = arith.addf %20, %21 : vector<96x4xf32>
    %23 = vector.extract_strided_slice %18 {offsets = [0, 0], sizes = [32, 4], strides = [1, 1]} : vector<96x4xf32> to vector<32x4xf32>
    %24 = vector.extract_strided_slice %22 {offsets = [0, 0], sizes = [32, 4], strides = [1, 1]} : vector<96x4xf32> to vector<32x4xf32>
    %25 = arith.addf %23, %24 : vector<32x4xf32>
    %26 = arith.negf %25 : vector<32x4xf32>
    %27 = math.exp %26 : vector<32x4xf32>
    %cst_26 = arith.constant 1.000000e+00 : f32
    %28 = vector.broadcast %cst_26 : f32 to vector<32x4xf32>
    %29 = arith.addf %28, %27 : vector<32x4xf32>
    %30 = arith.divf %28, %29 : vector<32x4xf32>
    %31 = vector.extract_strided_slice %18 {offsets = [32, 0], sizes = [32, 4], strides = [1, 1]} : vector<96x4xf32> to vector<32x4xf32>
    %32 = vector.extract_strided_slice %22 {offsets = [32, 0], sizes = [32, 4], strides = [1, 1]} : vector<96x4xf32> to vector<32x4xf32>
    %33 = arith.addf %31, %32 : vector<32x4xf32>
    %34 = arith.negf %33 : vector<32x4xf32>
    %35 = math.exp %34 : vector<32x4xf32>
    %cst_27 = arith.constant 1.000000e+00 : f32
    %36 = vector.broadcast %cst_27 : f32 to vector<32x4xf32>
    %37 = arith.addf %36, %35 : vector<32x4xf32>
    %38 = arith.divf %36, %37 : vector<32x4xf32>
    %39 = vector.extract_strided_slice %18 {offsets = [64, 0], sizes = [32, 4], strides = [1, 1]} : vector<96x4xf32> to vector<32x4xf32>
    %40 = vector.extract_strided_slice %22 {offsets = [64, 0], sizes = [32, 4], strides = [1, 1]} : vector<96x4xf32> to vector<32x4xf32>
    %41 = arith.mulf %30, %40 : vector<32x4xf32>
    %42 = arith.addf %39, %41 : vector<32x4xf32>
    %43 = math.tanh %42 : vector<32x4xf32>
    %cst_28 = arith.constant 1.000000e+00 : f32
    %44 = vector.broadcast %cst_28 : f32 to vector<32x4xf32>
    %45 = arith.subf %44, %38 : vector<32x4xf32>
    %46 = arith.mulf %45, %43 : vector<32x4xf32>
    %47 = arith.mulf %38, %13 : vector<32x4xf32>
    %48 = arith.addf %46, %47 : vector<32x4xf32>
    %49 = tpu.concatenate %48, %15 in 0 : vector<32x4xf32>, vector<32x4xf32> -> vector<64x4xf32>
    %50 = arith.truncf %49 : vector<64x4xf32> to vector<64x4xbf16>
    %cst_29 = arith.constant dense<0.000000e+00> : vector<128x4xf32>
    %51 = tpu.matmul %7, %50, %cst_29 {dimension_numbers = #tpu.dot_dimension_numbers<[1], [0], [0], [1], [0, 0, 1, 1], [], []>} : vector<128x64xbf16>, vector<64x4xbf16>, vector<128x4xf32> -> vector<128x4xf32>
    %52 = vector.extract_strided_slice %51 {offsets = [0, 0], sizes = [64, 4], strides = [1, 1]} : vector<128x4xf32> to vector<64x4xf32>
    %53 = vector.broadcast %8 : vector<64x1xf32> to vector<64x4xf32>
    %54 = arith.addf %52, %53 : vector<64x4xf32>
    %55 = arith.negf %54 : vector<64x4xf32>
    %56 = math.exp %55 : vector<64x4xf32>
    %cst_30 = arith.constant 1.000000e+00 : f32
    %57 = vector.broadcast %cst_30 : f32 to vector<64x4xf32>
    %58 = arith.addf %57, %56 : vector<64x4xf32>
    %59 = arith.divf %57, %58 : vector<64x4xf32>
    %60 = vector.extract_strided_slice %59 {offsets = [0, 0], sizes = [32, 4], strides = [1, 1]} : vector<64x4xf32> to vector<32x4xf32>
    %61 = vector.extract_strided_slice %59 {offsets = [32, 0], sizes = [32, 4], strides = [1, 1]} : vector<64x4xf32> to vector<32x4xf32>
    %62 = vector.extract_strided_slice %51 {offsets = [64, 0], sizes = [32, 4], strides = [1, 1]} : vector<128x4xf32> to vector<32x4xf32>
    %63 = vector.broadcast %9 : vector<32x1xf32> to vector<32x4xf32>
    %64 = arith.addf %62, %63 : vector<32x4xf32>
    %65 = vector.extract_strided_slice %51 {offsets = [96, 0], sizes = [32, 4], strides = [1, 1]} : vector<128x4xf32> to vector<32x4xf32>
    %66 = vector.broadcast %10 : vector<32x1xf32> to vector<32x4xf32>
    %67 = arith.addf %65, %66 : vector<32x4xf32>
    %68 = arith.mulf %60, %67 : vector<32x4xf32>
    %69 = arith.addf %64, %68 : vector<32x4xf32>
    %70 = math.tanh %69 : vector<32x4xf32>
    %cst_31 = arith.constant 1.000000e+00 : f32
    %71 = vector.broadcast %cst_31 : f32 to vector<32x4xf32>
    %72 = arith.subf %71, %61 : vector<32x4xf32>
    %73 = arith.mulf %72, %70 : vector<32x4xf32>
    %74 = arith.mulf %61, %15 : vector<32x4xf32>
    %75 = arith.addf %73, %74 : vector<32x4xf32>
    %76 = arith.index_cast %c0_i32_23 : i32 to index
    %c0_32 = arith.constant 0 : index
    %c0_33 = arith.constant 0 : index
    %77 = vector.load %arg11[%76, %c0_32, %c0_33] : memref<2x32x4xf32, #tpu.memory_space<vmem>>, vector<1x32x4xf32>
    %78 = vector.shape_cast %77 : vector<1x32x4xf32> to vector<32x4xf32>
    %79 = vector.shape_cast %75 : vector<32x4xf32> to vector<1x32x4xf32>
    tpu.vector_store %arg11[%76, %c0_32, %c0_33], %79 {strides = array<i32>} : memref<2x32x4xf32, #tpu.memory_space<vmem>>, vector<1x32x4xf32>,
    %c1_i32_34 = arith.constant 1 : i32
    %80 = arith.index_cast %c1_i32_34 : i32 to index
    %c0_35 = arith.constant 0 : index
    %c0_36 = arith.constant 0 : index
    %81 = vector.load %arg14[%80, %c0_35, %c0_36] : memref<2x96x4xf32, #tpu.memory_space<vmem>>, vector<1x96x4xf32>
    %82 = vector.shape_cast %81 : vector<1x96x4xf32> to vector<96x4xf32>
    %83 = arith.truncf %48 : vector<32x4xf32> to vector<32x4xbf16>
    %cst_37 = arith.constant dense<0.000000e+00> : vector<96x4xf32>
    %84 = tpu.matmul %5, %83, %cst_37 {dimension_numbers = #tpu.dot_dimension_numbers<[1], [0], [0], [1], [0, 0, 1, 1], [], []>} : vector<96x32xbf16>, vector<32x4xbf16>, vector<96x4xf32> -> vector<96x4xf32>
    %85 = vector.broadcast %6 : vector<96x1xf32> to vector<96x4xf32>
    %86 = arith.addf %84, %85 : vector<96x4xf32>
    %87 = vector.extract_strided_slice %82 {offsets = [0, 0], sizes = [32, 4], strides = [1, 1]} : vector<96x4xf32> to vector<32x4xf32>
    %88 = vector.extract_strided_slice %86 {offsets = [0, 0], sizes = [32, 4], strides = [1, 1]} : vector<96x4xf32> to vector<32x4xf32>
    %89 = arith.addf %87, %88 : vector<32x4xf32>
    %90 = arith.negf %89 : vector<32x4xf32>
    %91 = math.exp %90 : vector<32x4xf32>
    %cst_38 = arith.constant 1.000000e+00 : f32
    %92 = vector.broadcast %cst_38 : f32 to vector<32x4xf32>
    %93 = arith.addf %92, %91 : vector<32x4xf32>
    %94 = arith.divf %92, %93 : vector<32x4xf32>
    %95 = vector.extract_strided_slice %82 {offsets = [32, 0], sizes = [32, 4], strides = [1, 1]} : vector<96x4xf32> to vector<32x4xf32>
    %96 = vector.extract_strided_slice %86 {offsets = [32, 0], sizes = [32, 4], strides = [1, 1]} : vector<96x4xf32> to vector<32x4xf32>
    %97 = arith.addf %95, %96 : vector<32x4xf32>
    %98 = arith.negf %97 : vector<32x4xf32>
    %99 = math.exp %98 : vector<32x4xf32>
    %cst_39 = arith.constant 1.000000e+00 : f32
    %100 = vector.broadcast %cst_39 : f32 to vector<32x4xf32>
    %101 = arith.addf %100, %99 : vector<32x4xf32>
    %102 = arith.divf %100, %101 : vector<32x4xf32>
    %103 = vector.extract_strided_slice %82 {offsets = [64, 0], sizes = [32, 4], strides = [1, 1]} : vector<96x4xf32> to vector<32x4xf32>
    %104 = vector.extract_strided_slice %86 {offsets = [64, 0], sizes = [32, 4], strides = [1, 1]} : vector<96x4xf32> to vector<32x4xf32>
    %105 = arith.mulf %94, %104 : vector<32x4xf32>
    %106 = arith.addf %103, %105 : vector<32x4xf32>
    %107 = math.tanh %106 : vector<32x4xf32>
    %cst_40 = arith.constant 1.000000e+00 : f32
    %108 = vector.broadcast %cst_40 : f32 to vector<32x4xf32>
    %109 = arith.subf %108, %102 : vector<32x4xf32>
    %110 = arith.mulf %109, %107 : vector<32x4xf32>
    %111 = arith.mulf %102, %48 : vector<32x4xf32>
    %112 = arith.addf %110, %111 : vector<32x4xf32>
    %113 = tpu.concatenate %112, %75 in 0 : vector<32x4xf32>, vector<32x4xf32> -> vector<64x4xf32>
    %114 = arith.truncf %113 : vector<64x4xf32> to vector<64x4xbf16>
    %cst_41 = arith.constant dense<0.000000e+00> : vector<128x4xf32>
    %115 = tpu.matmul %7, %114, %cst_41 {dimension_numbers = #tpu.dot_dimension_numbers<[1], [0], [0], [1], [0, 0, 1, 1], [], []>} : vector<128x64xbf16>, vector<64x4xbf16>, vector<128x4xf32> -> vector<128x4xf32>
    %116 = vector.extract_strided_slice %115 {offsets = [0, 0], sizes = [64, 4], strides = [1, 1]} : vector<128x4xf32> to vector<64x4xf32>
    %117 = vector.broadcast %8 : vector<64x1xf32> to vector<64x4xf32>
    %118 = arith.addf %116, %117 : vector<64x4xf32>
    %119 = arith.negf %118 : vector<64x4xf32>
    %120 = math.exp %119 : vector<64x4xf32>
    %cst_42 = arith.constant 1.000000e+00 : f32
    %121 = vector.broadcast %cst_42 : f32 to vector<64x4xf32>
    %122 = arith.addf %121, %120 : vector<64x4xf32>
    %123 = arith.divf %121, %122 : vector<64x4xf32>
    %124 = vector.extract_strided_slice %123 {offsets = [0, 0], sizes = [32, 4], strides = [1, 1]} : vector<64x4xf32> to vector<32x4xf32>
    %125 = vector.extract_strided_slice %123 {offsets = [32, 0], sizes = [32, 4], strides = [1, 1]} : vector<64x4xf32> to vector<32x4xf32>
    %126 = vector.extract_strided_slice %115 {offsets = [64, 0], sizes = [32, 4], strides = [1, 1]} : vector<128x4xf32> to vector<32x4xf32>
    %127 = vector.broadcast %9 : vector<32x1xf32> to vector<32x4xf32>
    %128 = arith.addf %126, %127 : vector<32x4xf32>
    %129 = vector.extract_strided_slice %115 {offsets = [96, 0], sizes = [32, 4], strides = [1, 1]} : vector<128x4xf32> to vector<32x4xf32>
    %130 = vector.broadcast %10 : vector<32x1xf32> to vector<32x4xf32>
    %131 = arith.addf %129, %130 : vector<32x4xf32>
    %132 = arith.mulf %124, %131 : vector<32x4xf32>
    %133 = arith.addf %128, %132 : vector<32x4xf32>
    %134 = math.tanh %133 : vector<32x4xf32>
    %cst_43 = arith.constant 1.000000e+00 : f32
    %135 = vector.broadcast %cst_43 : f32 to vector<32x4xf32>
    %136 = arith.subf %135, %125 : vector<32x4xf32>
    %137 = arith.mulf %136, %134 : vector<32x4xf32>
    %138 = arith.mulf %125, %75 : vector<32x4xf32>
    %139 = arith.addf %137, %138 : vector<32x4xf32>
    %140 = arith.index_cast %c1_i32_34 : i32 to index
    %c0_44 = arith.constant 0 : index
    %c0_45 = arith.constant 0 : index
    %141 = vector.load %arg11[%140, %c0_44, %c0_45] : memref<2x32x4xf32, #tpu.memory_space<vmem>>, vector<1x32x4xf32>
    %142 = vector.shape_cast %141 : vector<1x32x4xf32> to vector<32x4xf32>
    %143 = vector.shape_cast %139 : vector<32x4xf32> to vector<1x32x4xf32>
    tpu.vector_store %arg11[%140, %c0_44, %c0_45], %143 {strides = array<i32>} : memref<2x32x4xf32, #tpu.memory_space<vmem>>, vector<1x32x4xf32>,
    %c2_i32_46 = arith.constant 2 : i32
    %c0_47 = arith.constant 0 : index
    %c0_48 = arith.constant 0 : index
    %c0_49 = arith.constant 0 : index
    %144 = vector.load %arg13[%c0_47, %c0_48, %c0_49] : memref<2x32x4xf32, #tpu.memory_space<vmem>>, vector<1x32x4xf32>
    %145 = vector.shape_cast %144 : vector<1x32x4xf32> to vector<32x4xf32>
    %146 = vector.shape_cast %112 : vector<32x4xf32> to vector<1x32x4xf32>
    tpu.vector_store %arg13[%c0_47, %c0_48, %c0_49], %146 {strides = array<i32>} : memref<2x32x4xf32, #tpu.memory_space<vmem>>, vector<1x32x4xf32>,
    %c1_50 = arith.constant 1 : index
    %c0_51 = arith.constant 0 : index
    %c0_52 = arith.constant 0 : index
    %147 = vector.load %arg13[%c1_50, %c0_51, %c0_52] : memref<2x32x4xf32, #tpu.memory_space<vmem>>, vector<1x32x4xf32>
    %148 = vector.shape_cast %147 : vector<1x32x4xf32> to vector<32x4xf32>
    %149 = vector.shape_cast %139 : vector<32x4xf32> to vector<1x32x4xf32>
    tpu.vector_store %arg13[%c1_50, %c0_51, %c0_52], %149 {strides = array<i32>} : memref<2x32x4xf32, #tpu.memory_space<vmem>>, vector<1x32x4xf32>,
    %c0_i32_53 = arith.constant 0 : i32
    %150 = arith.cmpi eq, %arg0, %c0_i32_53 : i32
    %151 = arith.extui %150 : i1 to i32
    %c0_i32_54 = arith.constant 0 : i32
    %152 = arith.cmpi ne, %151, %c0_i32_54 : i32
    scf.if %152 {
      %c0_55 = arith.constant 0 : index
      %c0_56 = arith.constant 0 : index
      %c0_57 = arith.constant 0 : index
      %153 = vector.load %arg13[%c0_55, %c0_56, %c0_57] : memref<2x32x4xf32, #tpu.memory_space<vmem>>, vector<2x32x4xf32>
      %c0_58 = arith.constant 0 : index
      %c0_59 = arith.constant 0 : index
      %c0_60 = arith.constant 0 : index
      %154 = vector.load %arg12[%c0_58, %c0_59, %c0_60] : memref<2x32x4xf32, #tpu.memory_space<vmem>>, vector<2x32x4xf32>
      tpu.vector_store %arg12[%c0_58, %c0_59, %c0_60], %153 {strides = array<i32>} : memref<2x32x4xf32, #tpu.memory_space<vmem>>, vector<2x32x4xf32>,
    } else {
    }
    return
  }
  func.func @transform_0(%arg0: i32) -> (i32, i32, i32) {
    %c0_i32 = arith.constant 0 : i32
    %c0_i32_0 = arith.constant 0 : i32
    %c0_i32_1 = arith.constant 0 : i32
    return %arg0, %c0_i32, %c0_i32_0 : i32, i32, i32
  }
  func.func @transform_1(%arg0: i32) -> (i32, i32, i32) {
    %c0_i32 = arith.constant 0 : i32
    %c0_i32_0 = arith.constant 0 : i32
    %c0_i32_1 = arith.constant 0 : i32
    %c0_i32_2 = arith.constant 0 : i32
    return %c0_i32, %c0_i32_0, %c0_i32_1 : i32, i32, i32
  }
  func.func @transform_2(%arg0: i32) -> (i32, i32) {
    %c0_i32 = arith.constant 0 : i32
    %c0_i32_0 = arith.constant 0 : i32
    %c0_i32_1 = arith.constant 0 : i32
    return %c0_i32, %c0_i32_0 : i32, i32
  }
  func.func @transform_3(%arg0: i32) -> (i32, i32) {
    %c0_i32 = arith.constant 0 : i32
    %c0_i32_0 = arith.constant 0 : i32
    %c0_i32_1 = arith.constant 0 : i32
    return %c0_i32, %c0_i32_0 : i32, i32
  }
  func.func @transform_4(%arg0: i32) -> (i32, i32) {
    %c0_i32 = arith.constant 0 : i32
    %c0_i32_0 = arith.constant 0 : i32
    %c0_i32_1 = arith.constant 0 : i32
    return %c0_i32, %c0_i32_0 : i32, i32
  }
  func.func @transform_5(%arg0: i32) -> (i32, i32) {
    %c0_i32 = arith.constant 0 : i32
    %c0_i32_0 = arith.constant 0 : i32
    %c0_i32_1 = arith.constant 0 : i32
    return %c0_i32, %c0_i32_0 : i32, i32
  }
  func.func @transform_6(%arg0: i32) -> (i32, i32) {
    %c0_i32 = arith.constant 0 : i32
    %c0_i32_0 = arith.constant 0 : i32
    %c0_i32_1 = arith.constant 0 : i32
    return %c0_i32, %c0_i32_0 : i32, i32
  }
  func.func @transform_7(%arg0: i32) -> (i32, i32) {
    %c0_i32 = arith.constant 0 : i32
    %c0_i32_0 = arith.constant 0 : i32
    %c0_i32_1 = arith.constant 0 : i32
    return %c0_i32, %c0_i32_0 : i32, i32
  }
  func.func @transform_8(%arg0: i32) -> (i32, i32) {
    %c0_i32 = arith.constant 0 : i32
    %c0_i32_0 = arith.constant 0 : i32
    %c0_i32_1 = arith.constant 0 : i32
    return %c0_i32, %c0_i32_0 : i32, i32
  }
  func.func @transform_9(%arg0: i32) -> (i32, i32) {
    %c0_i32 = arith.constant 0 : i32
    %c0_i32_0 = arith.constant 0 : i32
    %c0_i32_1 = arith.constant 0 : i32
    return %c0_i32, %c0_i32_0 : i32, i32
  }
  func.func @transform_10(%arg0: i32) -> (i32, i32, i32) {
    %c0_i32 = arith.constant 0 : i32
    %c0_i32_0 = arith.constant 0 : i32
    %c0_i32_1 = arith.constant 0 : i32
    return %arg0, %c0_i32, %c0_i32_0 : i32, i32, i32
  }
  func.func @transform_11(%arg0: i32) -> (i32, i32, i32) {
    %c0_i32 = arith.constant 0 : i32
    %c0_i32_0 = arith.constant 0 : i32
    %c0_i32_1 = arith.constant 0 : i32
    %c0_i32_2 = arith.constant 0 : i32
    return %c0_i32, %c0_i32_0, %c0_i32_1 : i32, i32, i32
  }
}

</mosaic_0001>

<llo_original>
// kernel: net_forward.3
$region0: #{net_forward.3}
  #allocation0 [shape = 'u32[]', space=smem, size = 0x4, offset = 0x4, fixed_abs, tag = 'smem constant byte address 0x4 - core index']
  #allocation1 [shape = 'u32[144,128]{1,0:T(1,128)}', space=vmem, size = 0x12000, scoped, tag = 'internal scratch']
  #allocation2 [shape = 'f32[2,32,4]{2,1,0:T(8,128)}', space=vmem, size = 0x8000, scoped, tag = 'scratch operand']
  #allocation3 [shape = 'f32[2,96,4]{2,1,0:T(8,128)}', space=vmem, size = 0x18000, scoped, tag = 'scratch operand']
  %s0 = inlined_call_operand.vmem [shape: bf16[2,256,4], index: 0, kind: input, shape index: {}]
  %s1 = inlined_call_operand.vmem [shape: f32[2,32,4], index: 1, kind: input, shape index: {}]
  %s2 = inlined_call_operand.vmem [shape: bf16[96,256], index: 2, kind: input, shape index: {}]
  %s3 = inlined_call_operand.vmem [shape: f32[96,1], index: 3, kind: input, shape index: {}]
  %s4 = inlined_call_operand.vmem [shape: bf16[96,32], index: 4, kind: input, shape index: {}]
  %s5 = inlined_call_operand.vmem [shape: f32[96,1], index: 5, kind: input, shape index: {}]
  %s6 = inlined_call_operand.vmem [shape: bf16[128,64], index: 6, kind: input, shape index: {}]
  %s7 = inlined_call_operand.vmem [shape: f32[64,1], index: 7, kind: input, shape index: {}]
  %s8 = inlined_call_operand.vmem [shape: f32[32,1], index: 8, kind: input, shape index: {}]
  %s9 = inlined_call_operand.vmem [shape: f32[32,1], index: 9, kind: input, shape index: {}]
  %s10 = inlined_call_operand.vmem [shape: f32[2,32,4], index: 10, kind: output, shape index: {0}]
  %s11 = inlined_call_operand.vmem [shape: f32[2,32,4], index: 11, kind: output, shape index: {1}]
  %12 = xla_tuple %s10, %s11
  %s13 = sld [smem:[#allocation0]]
  $region73: #{net_forward.3} parent=0
    _
  %s15 = ssub.s32 1, %s13
  %s16 = scalar_select 0, %s15, %s13
  // Predicated region
  $region2: #{net_forward.3} parent=0 // pred_check
    _
  $region3: #{net_forward.3} parent=0 // pred_check_branch
    %18 = sbr.rel (0) target = $region5
  $region4: #{net_forward.3} parent=0 // pred_region
    _
  $region5: #{net_forward.3} parent=0 // pred_fallthru
    _
  // Predicated region
  $region6: #{net_forward.3} parent=0 // pred_check
    _
  $region7: #{net_forward.3} parent=0 // pred_check_branch
    %20 = sbr.rel (0) target = $region9
  $region8: #{net_forward.3} parent=0 // pred_region
    _
  $region9: #{net_forward.3} parent=0 // pred_fallthru
    _
  // Predicated region
  $region10: #{net_forward.3} parent=0 // pred_check
    _
  $region11: #{net_forward.3} parent=0 // pred_check_branch
    %22 = sbr.rel (0) target = $region13
  $region12: #{net_forward.3} parent=0 // pred_region
    _
  $region13: #{net_forward.3} parent=0 // pred_fallthru
    _
  // Predicated region
  $region14: #{net_forward.3} parent=0 // pred_check
    _
  $region15: #{net_forward.3} parent=0 // pred_check_branch
    %24 = sbr.rel (0) target = $region17
  $region16: #{net_forward.3} parent=0 // pred_region
    _
  $region17: #{net_forward.3} parent=0 // pred_fallthru
    _
  // Predicated region
  $region18: #{net_forward.3} parent=0 // pred_check
    _
  $region19: #{net_forward.3} parent=0 // pred_check_branch
    %26 = sbr.rel (0) target = $region21
  $region20: #{net_forward.3} parent=0 // pred_region
    _
  $region21: #{net_forward.3} parent=0 // pred_fallthru
    _
  // Predicated region
  $region22: #{net_forward.3} parent=0 // pred_check
    _
  $region23: #{net_forward.3} parent=0 // pred_check_branch
    %28 = sbr.rel (0) target = $region25
  $region24: #{net_forward.3} parent=0 // pred_region
    _
  $region25: #{net_forward.3} parent=0 // pred_fallthru
    _
  // Predicated region
  $region26: #{net_forward.3} parent=0 // pred_check
    _
  $region27: #{net_forward.3} parent=0 // pred_check_branch
    %30 = sbr.rel (0) target = $region29
  $region28: #{net_forward.3} parent=0 // pred_region
    _
  $region29: #{net_forward.3} parent=0 // pred_fallthru
    _
  // Predicated region
  $region30: #{net_forward.3} parent=0 // pred_check
    _
  $region31: #{net_forward.3} parent=0 // pred_check_branch
    %32 = sbr.rel (0) target = $region33
  $region32: #{net_forward.3} parent=0 // pred_region
    _
  $region33: #{net_forward.3} parent=0 // pred_fallthru
    _
  // Predicated region
  $region34: #{net_forward.3} parent=0 // pred_check
    _
  $region35: #{net_forward.3} parent=0 // pred_check_branch
    %34 = sbr.rel (0) target = $region37
  $region36: #{net_forward.3} parent=0 // pred_region
    _
  $region37: #{net_forward.3} parent=0 // pred_fallthru
    _
  // Predicated region
  $region38: #{net_forward.3} parent=0 // pred_check
    _
  $region39: #{net_forward.3} parent=0 // pred_check_branch
    %36 = sbr.rel (0) target = $region41
  $region40: #{net_forward.3} parent=0 // pred_region
    _
  $region41: #{net_forward.3} parent=0 // pred_fallthru
    _
  %p38 = scmp.eq.s32.totalorder 0, 0
  // Predicated region
  $region42: #{net_forward.3} parent=0 // pred_check
    %p39 = pneg %p38
  $region43: #{net_forward.3} parent=0 // pred_check_branch
    %41 = sbr.rel (%p39) target = $region45
  $region44: #{net_forward.3} parent=0 // pred_region
    %v42 = vld [vmem:[%s1] sm:$0xff]
    %v43 = vld [vmem:[%s1 + $0x8] sm:$0xff]
    %v44 = vld [vmem:[%s1 + $0x10] sm:$0xff]
    %v45 = vld [vmem:[%s1 + $0x18] sm:$0xff]
    %v46 = vld [vmem:[%s1 + $0x20] sm:$0xff]
    %v47 = vld [vmem:[%s1 + $0x28] sm:$0xff]
    %v48 = vld [vmem:[%s1 + $0x30] sm:$0xff]
    %v49 = vld [vmem:[%s1 + $0x38] sm:$0xff]
    %vm50 = vcmask 31744
    %51 = vst.msk [vmem:[#allocation2] sm:$0xff] %vm50, %v42
    %52 = vst.msk [vmem:[#allocation2 + $0x8] sm:$0xff] %vm50, %v43
    %53 = vst.msk [vmem:[#allocation2 + $0x10] sm:$0xff] %vm50, %v44
    %54 = vst.msk [vmem:[#allocation2 + $0x18] sm:$0xff] %vm50, %v45
    %55 = vst.msk [vmem:[#allocation2 + $0x20] sm:$0xff] %vm50, %v46
    %56 = vst.msk [vmem:[#allocation2 + $0x28] sm:$0xff] %vm50, %v47
    %57 = vst.msk [vmem:[#allocation2 + $0x30] sm:$0xff] %vm50, %v48
    %58 = vst.msk [vmem:[#allocation2 + $0x38] sm:$0xff] %vm50, %v49
  $region45: #{net_forward.3} parent=0 // pred_fallthru
    _
  %v59 = vld [vmem:[%s2] sm:$0xff]
  %v60 = vld [vmem:[%s2 + $0x8] sm:$0xff]
  %v61 = vld [vmem:[%s2 + $0x10] sm:$0xff]
  %v62 = vld [vmem:[%s2 + $0x18] sm:$0xff]
  %v63 = vld [vmem:[%s2 + $0x20] sm:$0xff]
  %v64 = vld [vmem:[%s2 + $0x28] sm:$0xff]
  %v65 = vld [vmem:[%s2 + $0x30] sm:$0xff]
  %v66 = vld [vmem:[%s2 + $0x38] sm:$0xff]
  %v67 = vld [vmem:[%s2 + $0x40] sm:$0xff]
  %v68 = vld [vmem:[%s2 + $0x48] sm:$0xff]
  %v69 = vld [vmem:[%s2 + $0x50] sm:$0xff]
  %v70 = vld [vmem:[%s2 + $0x58] sm:$0xff]
  %v71 = vld [vmem:[%s3] sm:$0xff]
  %v72 = vld [vmem:[%s3 + $0x8] sm:$0xff]
  %v73 = vld [vmem:[%s3 + $0x10] sm:$0xff]
  %v74 = vld [vmem:[%s3 + $0x18] sm:$0xff]
  %v75 = vld [vmem:[%s3 + $0x20] sm:$0xff]
  %v76 = vld [vmem:[%s3 + $0x28] sm:$0xff]
  %v77 = vld [vmem:[%s3 + $0x30] sm:$0xff]
  %v78 = vld [vmem:[%s3 + $0x38] sm:$0xff]
  %v79 = vld [vmem:[%s3 + $0x40] sm:$0xff]
  %v80 = vld [vmem:[%s3 + $0x48] sm:$0xff]
  %v81 = vld [vmem:[%s3 + $0x50] sm:$0xff]
  %v82 = vld [vmem:[%s3 + $0x58] sm:$0xff]
  %v83 = vld [vmem:[%s4] sm:$0xf]
  %v84 = vld [vmem:[%s4 + $0x4] sm:$0xf]
  %v85 = vld [vmem:[%s4 + $0x8] sm:$0xf]
  %v86 = vld [vmem:[%s4 + $0xc] sm:$0xf]
  %v87 = vld [vmem:[%s4 + $0x10] sm:$0xf]
  %v88 = vld [vmem:[%s4 + $0x14] sm:$0xf]
  %v89 = vld [vmem:[%s4 + $0x18] sm:$0xf]
  %v90 = vld [vmem:[%s4 + $0x1c] sm:$0xf]
  %v91 = vld [vmem:[%s4 + $0x20] sm:$0xf]
  %v92 = vld [vmem:[%s4 + $0x24] sm:$0xf]
  %v93 = vld [vmem:[%s4 + $0x28] sm:$0xf]
  %v94 = vld [vmem:[%s4 + $0x2c] sm:$0xf]
  %v95 = vld [vmem:[%s5] sm:$0xff]
  %v96 = vld [vmem:[%s5 + $0x8] sm:$0xff]
  %v97 = vld [vmem:[%s5 + $0x10] sm:$0xff]
  %v98 = vld [vmem:[%s5 + $0x18] sm:$0xff]
  %v99 = vld [vmem:[%s5 + $0x20] sm:$0xff]
  %v100 = vld [vmem:[%s5 + $0x28] sm:$0xff]
  %v101 = vld [vmem:[%s5 + $0x30] sm:$0xff]
  %v102 = vld [vmem:[%s5 + $0x38] sm:$0xff]
  %v103 = vld [vmem:[%s5 + $0x40] sm:$0xff]
  %v104 = vld [vmem:[%s5 + $0x48] sm:$0xff]
  %v105 = vld [vmem:[%s5 + $0x50] sm:$0xff]
  %v106 = vld [vmem:[%s5 + $0x58] sm:$0xff]
  %v107 = vld [vmem:[%s6] sm:$0xf]
  %v108 = vld [vmem:[%s6 + $0x4] sm:$0xf]
  %v109 = vld [vmem:[%s6 + $0x8] sm:$0xf]
  %v110 = vld [vmem:[%s6 + $0xc] sm:$0xf]
  %v111 = vld [vmem:[%s6 + $0x10] sm:$0xf]
  %v112 = vld [vmem:[%s6 + $0x14] sm:$0xf]
  %v113 = vld [vmem:[%s6 + $0x18] sm:$0xf]
  %v114 = vld [vmem:[%s6 + $0x1c] sm:$0xf]
  %v115 = vld [vmem:[%s6 + $0x20] sm:$0xf]
  %v116 = vld [vmem:[%s6 + $0x24] sm:$0xf]
  %v117 = vld [vmem:[%s6 + $0x28] sm:$0xf]
  %v118 = vld [vmem:[%s6 + $0x2c] sm:$0xf]
  %v119 = vld [vmem:[%s6 + $0x30] sm:$0xf]
  %v120 = vld [vmem:[%s6 + $0x34] sm:$0xf]
  %v121 = vld [vmem:[%s6 + $0x38] sm:$0xf]
  %v122 = vld [vmem:[%s6 + $0x3c] sm:$0xf]
  %v123 = vld [vmem:[%s7] sm:$0xff]
  %v124 = vld [vmem:[%s7 + $0x8] sm:$0xff]
  %v125 = vld [vmem:[%s7 + $0x10] sm:$0xff]
  %v126 = vld [vmem:[%s7 + $0x18] sm:$0xff]
  %v127 = vld [vmem:[%s7 + $0x20] sm:$0xff]
  %v128 = vld [vmem:[%s7 + $0x28] sm:$0xff]
  %v129 = vld [vmem:[%s7 + $0x30] sm:$0xff]
  %v130 = vld [vmem:[%s7 + $0x38] sm:$0xff]
  %v131 = vld [vmem:[%s8] sm:$0xff]
  %v132 = vld [vmem:[%s8 + $0x8] sm:$0xff]
  %v133 = vld [vmem:[%s8 + $0x10] sm:$0xff]
  %v134 = vld [vmem:[%s8 + $0x18] sm:$0xff]
  %v135 = vld [vmem:[%s9] sm:$0xff]
  %v136 = vld [vmem:[%s9 + $0x8] sm:$0xff]
  %v137 = vld [vmem:[%s9 + $0x10] sm:$0xff]
  %v138 = vld [vmem:[%s9 + $0x18] sm:$0xff]
  loop: start=0, step=1, limit=2
  $region46: #{net_forward.3} parent=0 // loop_pre_header
    _
  $region47: #{net_forward.3} parent=0 // loop_header
    %s140 = sphi 0, %s144
    %p141 = scmp.ge.s32.totalorder %s140, 2
  $region48: #{net_forward.3} parent=0 // loop_header_branch
    %143 = sbr.rel (%p141) target = $region52
  $region49: #{net_forward.3} parent=0 // loop_body
    %s145 = smul.u32 %s140, 32
    %s146 = smul.addr %s145, 4
    %s147 = scalar_lea.vmem %s0, %s146
    %v148 = vld [vmem:[%s147] sm:$0xf]
    %v149 = vld [vmem:[%s147 + $0x4] sm:$0xf]
    %v150 = vld [vmem:[%s147 + $0x8] sm:$0xf]
    %v151 = vld [vmem:[%s147 + $0xc] sm:$0xf]
    %v152 = vld [vmem:[%s147 + $0x10] sm:$0xf]
    %v153 = vld [vmem:[%s147 + $0x14] sm:$0xf]
    %v154 = vld [vmem:[%s147 + $0x18] sm:$0xf]
    %v155 = vld [vmem:[%s147 + $0x1c] sm:$0xf]
    %v156 = vld [vmem:[%s147 + $0x20] sm:$0xf]
    %v157 = vld [vmem:[%s147 + $0x24] sm:$0xf]
    %v158 = vld [vmem:[%s147 + $0x28] sm:$0xf]
    %v159 = vld [vmem:[%s147 + $0x2c] sm:$0xf]
    %v160 = vld [vmem:[%s147 + $0x30] sm:$0xf]
    %v161 = vld [vmem:[%s147 + $0x34] sm:$0xf]
    %v162 = vld [vmem:[%s147 + $0x38] sm:$0xf]
    %v163 = vld [vmem:[%s147 + $0x3c] sm:$0xf]
    %v164 = vld [vmem:[%s147 + $0x40] sm:$0xf]
    %v165 = vld [vmem:[%s147 + $0x44] sm:$0xf]
    %v166 = vld [vmem:[%s147 + $0x48] sm:$0xf]
    %v167 = vld [vmem:[%s147 + $0x4c] sm:$0xf]
    %v168 = vld [vmem:[%s147 + $0x50] sm:$0xf]
    %v169 = vld [vmem:[%s147 + $0x54] sm:$0xf]
    %v170 = vld [vmem:[%s147 + $0x58] sm:$0xf]
    %v171 = vld [vmem:[%s147 + $0x5c] sm:$0xf]
    %v172 = vld [vmem:[%s147 + $0x60] sm:$0xf]
    %v173 = vld [vmem:[%s147 + $0x64] sm:$0xf]
    %v174 = vld [vmem:[%s147 + $0x68] sm:$0xf]
    %v175 = vld [vmem:[%s147 + $0x6c] sm:$0xf]
    %v176 = vld [vmem:[%s147 + $0x70] sm:$0xf]
    %v177 = vld [vmem:[%s147 + $0x74] sm:$0xf]
    %v178 = vld [vmem:[%s147 + $0x78] sm:$0xf]
    %v179 = vld [vmem:[%s147 + $0x7c] sm:$0xf]
    %181 = vset.pattern.permute.xlu0 0
    %182 = vperm.xlu0 %181, %v71
    %v183 = vpop.permute.xlu0 %182
    %186 = vset.pattern.permute.xlu0 0
    %187 = vperm.xlu0 %186, %v72
    %v188 = vpop.permute.xlu0 %187
    %191 = vset.pattern.permute.xlu0 0
    %192 = vperm.xlu0 %191, %v73
    %v193 = vpop.permute.xlu0 %192
    %196 = vset.pattern.permute.xlu0 0
    %197 = vperm.xlu0 %196, %v74
    %v198 = vpop.permute.xlu0 %197
    %201 = vset.pattern.permute.xlu0 0
    %202 = vperm.xlu0 %201, %v75
    %v203 = vpop.permute.xlu0 %202
    %206 = vset.pattern.permute.xlu0 0
    %207 = vperm.xlu0 %206, %v76
    %v208 = vpop.permute.xlu0 %207
    %211 = vset.pattern.permute.xlu0 0
    %212 = vperm.xlu0 %211, %v77
    %v213 = vpop.permute.xlu0 %212
    %216 = vset.pattern.permute.xlu0 0
    %217 = vperm.xlu0 %216, %v78
    %v218 = vpop.permute.xlu0 %217
    %221 = vset.pattern.permute.xlu0 0
    %222 = vperm.xlu0 %221, %v79
    %v223 = vpop.permute.xlu0 %222
    %226 = vset.pattern.permute.xlu0 0
    %227 = vperm.xlu0 %226, %v80
    %v228 = vpop.permute.xlu0 %227
    %231 = vset.pattern.permute.xlu0 0
    %232 = vperm.xlu0 %231, %v81
    %v233 = vpop.permute.xlu0 %232
    %236 = vset.pattern.permute.xlu0 0
    %237 = vperm.xlu0 %236, %v82
    %v238 = vpop.permute.xlu0 %237
    %v252 = vunpack.c.l.b16 %v59
    %v253 = vunpack.c.h.b16 %v59
    %v254 = vunpack.c.l.b16 %v60
    %v255 = vunpack.c.h.b16 %v60
    %v256 = vunpack.c.l.b16 %v61
    %v257 = vunpack.c.h.b16 %v61
    %v258 = vunpack.c.l.b16 %v62
    %v259 = vunpack.c.h.b16 %v62
    %v260 = vunpack.c.l.b16 %v63
    %v261 = vunpack.c.h.b16 %v63
    %v262 = vunpack.c.l.b16 %v64
    %v263 = vunpack.c.h.b16 %v64
    %v264 = vunpack.c.l.b16 %v65
    %v265 = vunpack.c.h.b16 %v65
    %v266 = vunpack.c.l.b16 %v66
    %v267 = vunpack.c.h.b16 %v66
    %v268 = vunpack.c.l.b16 %v67
    %v269 = vunpack.c.h.b16 %v67
    %v270 = vunpack.c.l.b16 %v68
    %v271 = vunpack.c.h.b16 %v68
    %v272 = vunpack.c.l.b16 %v69
    %v273 = vunpack.c.h.b16 %v69
    %v274 = vunpack.c.l.b16 %v70
    %v275 = vunpack.c.h.b16 %v70
    %v276 = vpack.c.b16 %v254, %v252
    %v277 = vpack.c.b16 %v255, %v253
    %v278 = vpack.c.b16 %v258, %v256
    %v279 = vpack.c.b16 %v259, %v257
    %v280 = vpack.c.b16 %v262, %v260
    %v281 = vpack.c.b16 %v263, %v261
    %v282 = vpack.c.b16 %v266, %v264
    %v283 = vpack.c.b16 %v267, %v265
    %v284 = vpack.c.b16 %v270, %v268
    %v285 = vpack.c.b16 %v271, %v269
    %v286 = vpack.c.b16 %v274, %v272
    %v287 = vpack.c.b16 %v275, %v273
    %v332 = vunpack.c.l.b16 %v148
    %v333 = vunpack.c.l.b16 %v149
    %v334 = vunpack.c.l.b16 %v150
    %v335 = vunpack.c.l.b16 %v151
    %v336 = vunpack.c.l.b16 %v152
    %v337 = vunpack.c.l.b16 %v153
    %v338 = vunpack.c.l.b16 %v154
    %v339 = vunpack.c.l.b16 %v155
    %v340 = vunpack.c.l.b16 %v156
    %v341 = vunpack.c.l.b16 %v157
    %v342 = vunpack.c.l.b16 %v158
    %v343 = vunpack.c.l.b16 %v159
    %v344 = vunpack.c.l.b16 %v160
    %v345 = vunpack.c.l.b16 %v161
    %v346 = vunpack.c.l.b16 %v162
    %v347 = vunpack.c.l.b16 %v163
    %v348 = vunpack.c.l.b16 %v164
    %v349 = vunpack.c.l.b16 %v165
    %v350 = vunpack.c.l.b16 %v166
    %v351 = vunpack.c.l.b16 %v167
    %v352 = vunpack.c.l.b16 %v168
    %v353 = vunpack.c.l.b16 %v169
    %v354 = vunpack.c.l.b16 %v170
    %v355 = vunpack.c.l.b16 %v171
    %v356 = vunpack.c.l.b16 %v172
    %v357 = vunpack.c.l.b16 %v173
    %v358 = vunpack.c.l.b16 %v174
    %v359 = vunpack.c.l.b16 %v175
    %v360 = vunpack.c.l.b16 %v176
    %v361 = vunpack.c.l.b16 %v177
    %v362 = vunpack.c.l.b16 %v178
    %v363 = vunpack.c.l.b16 %v179
    %v364 = vpack.c.b16 %v333, %v332
    %v365 = vpack.c.b16 %v335, %v334
    %v366 = vpack.c.b16 %v337, %v336
    %v367 = vpack.c.b16 %v339, %v338
    %v368 = vpack.c.b16 %v341, %v340
    %v369 = vpack.c.b16 %v343, %v342
    %v370 = vpack.c.b16 %v345, %v344
    %v371 = vpack.c.b16 %v347, %v346
    %v372 = vpack.c.b16 %v349, %v348
    %v373 = vpack.c.b16 %v351, %v350
    %v374 = vpack.c.b16 %v353, %v352
    %v375 = vpack.c.b16 %v355, %v354
    %v376 = vpack.c.b16 %v357, %v356
    %v377 = vpack.c.b16 %v359, %v358
    %v378 = vpack.c.b16 %v361, %v360
    %v379 = vpack.c.b16 %v363, %v362
    %396 = vmatprep.subr.bf16.mxu0 0
    %397 = vmatpush1.bf16.msra.mxu0 %v364
    %398 = vmatprep.subr.bf16.mxu0 0
    %399 = vmatpush1.bf16.msra.mxu0 %v365
    %400 = vmatprep.subr.bf16.mxu0 0
    %401 = vmatpush1.bf16.msra.mxu0 %v366
    %402 = vmatprep.subr.bf16.mxu0 0
    %403 = vmatpush1.bf16.msra.mxu0 %v367
    %404 = vmatprep.subr.bf16.mxu0 0
    %405 = vmatpush1.bf16.msra.mxu0 %v368
    %406 = vmatprep.subr.bf16.mxu0 0
    %407 = vmatpush1.bf16.msra.mxu0 %v369
    %408 = vmatprep.subr.bf16.mxu0 0
    %409 = vmatpush1.bf16.msra.mxu0 %v370
    %410 = vmatprep.subr.bf16.mxu0 0
    %411 = vmatpush1.bf16.msra.mxu0 %v371
    %412 = vmatprep.subr.bf16.mxu0 0
    %413 = vmatpush1.bf16.msra.mxu0 %v372
    %414 = vmatprep.subr.bf16.mxu0 0
    %415 = vmatpush1.bf16.msra.mxu0 %v373
    %416 = vmatprep.subr.bf16.mxu0 0
    %417 = vmatpush1.bf16.msra.mxu0 %v374
    %418 = vmatprep.subr.bf16.mxu0 0
    %419 = vmatpush1.bf16.msra.mxu0 %v375
    %420 = vmatprep.subr.bf16.mxu0 0
    %421 = vmatpush1.bf16.msra.mxu0 %v376
    %422 = vmatprep.subr.bf16.mxu0 0
    %423 = vmatpush1.bf16.msra.mxu0 %v377
    %424 = vmatprep.subr.bf16.mxu0 0
    %425 = vmatpush1.bf16.msra.mxu0 %v378
    %426 = vmatprep.subr.bf16.mxu0 0
    %427 = vmatpush1.bf16.msra.mxu0 %v379
    %428 = vmatprep.mubr.bf16.mxu0 %v277
    %429 = vmatmul.mubr.bf16.gmra.mrb[0].mxu0 %v276
    %v430 = vpop.f32.mrb[0].mxu0
    %v431 = vadd.f32 %v183, %v430
    %v432 = vpop.f32.mrb[0].mxu0
    %v433 = vpop.f32.mrb[0].mxu0
    %v434 = vadd.f32 %v188, %v433
    %v435 = vpop.f32.mrb[0].mxu0
    %436 = vmatprep.mubr.bf16.mxu0 %v279
    %437 = vmatmul.mubr.bf16.gmra.mrb[0].mxu0 %v278
    %v438 = vpop.f32.mrb[0].mxu0
    %v439 = vadd.f32 %v193, %v438
    %v440 = vpop.f32.mrb[0].mxu0
    %v441 = vpop.f32.mrb[0].mxu0
    %v442 = vadd.f32 %v198, %v441
    %v443 = vpop.f32.mrb[0].mxu0
    %444 = vmatprep.mubr.bf16.mxu0 %v281
    %445 = vmatmul.mubr.bf16.gmra.mrb[0].mxu0 %v280
    %v446 = vpop.f32.mrb[0].mxu0
    %v447 = vadd.f32 %v203, %v446
    %v448 = vpop.f32.mrb[0].mxu0
    %v449 = vpop.f32.mrb[0].mxu0
    %v450 = vadd.f32 %v208, %v449
    %v451 = vpop.f32.mrb[0].mxu0
    %452 = vmatprep.mubr.bf16.mxu0 %v283
    %453 = vmatmul.mubr.bf16.gmra.mrb[0].mxu0 %v282
    %v454 = vpop.f32.mrb[0].mxu0
    %v455 = vadd.f32 %v213, %v454
    %v456 = vpop.f32.mrb[0].mxu0
    %v457 = vpop.f32.mrb[0].mxu0
    %v458 = vadd.f32 %v218, %v457
    %v459 = vpop.f32.mrb[0].mxu0
    %460 = vmatprep.mubr.bf16.mxu0 %v285
    %461 = vmatmul.mubr.bf16.gmra.mrb[0].mxu0 %v284
    %v462 = vpop.f32.mrb[0].mxu0
    %v463 = vadd.f32 %v223, %v462
    %v464 = vpop.f32.mrb[0].mxu0
    %v465 = vpop.f32.mrb[0].mxu0
    %v466 = vadd.f32 %v228, %v465
    %v467 = vpop.f32.mrb[0].mxu0
    %468 = vmatprep.mubr.bf16.mxu0 %v287
    %469 = vmatmul.mubr.bf16.gmra.mrb[0].mxu0 %v286
    %v470 = vpop.f32.mrb[0].mxu0
    %v471 = vadd.f32 %v233, %v470
    %v472 = vpop.f32.mrb[0].mxu0
    %v473 = vpop.f32.mrb[0].mxu0
    %v474 = vadd.f32 %v238, %v473
    %v475 = vpop.f32.mrb[0].mxu0
    %476 = vdwg.mxu0
    %s477 = smul.u32 %s140, 96
    %s478 = scalar_lea.vmem [#allocation3], %s477
    %vm479 = vcmask 31744
    %480 = vst.msk [vmem:[%s478] sm:$0xff] %vm479, %v431
    %481 = vst.msk [vmem:[%s478 + $0x8] sm:$0xff] %vm479, %v434
    %482 = vst.msk [vmem:[%s478 + $0x10] sm:$0xff] %vm479, %v439
    %483 = vst.msk [vmem:[%s478 + $0x18] sm:$0xff] %vm479, %v442
    %484 = vst.msk [vmem:[%s478 + $0x20] sm:$0xff] %vm479, %v447
    %485 = vst.msk [vmem:[%s478 + $0x28] sm:$0xff] %vm479, %v450
    %486 = vst.msk [vmem:[%s478 + $0x30] sm:$0xff] %vm479, %v455
    %487 = vst.msk [vmem:[%s478 + $0x38] sm:$0xff] %vm479, %v458
    %488 = vst.msk [vmem:[%s478 + $0x40] sm:$0xff] %vm479, %v463
    %489 = vst.msk [vmem:[%s478 + $0x48] sm:$0xff] %vm479, %v466
    %490 = vst.msk [vmem:[%s478 + $0x50] sm:$0xff] %vm479, %v471
    %491 = vst.msk [vmem:[%s478 + $0x58] sm:$0xff] %vm479, %v474
  $region50: #{net_forward.3} parent=0 // loop_footer
    %s144 = sadd.s32 1, %s140
  $region51: #{net_forward.3} parent=0 // loop_footer_branch
    %139 = sbr.rel target = $region47
  $region52: #{net_forward.3} parent=0 // loop_exit
    _
  %v492 = vld [vmem:[#allocation2] sm:$0xff]
  %v493 = vld [vmem:[#allocation2 + $0x8] sm:$0xff]
  %v494 = vld [vmem:[#allocation2 + $0x10] sm:$0xff]
  %v495 = vld [vmem:[#allocation2 + $0x18] sm:$0xff]
  %s496 = scalar_lea.vmem [#allocation2], 32
  %v497 = vld [vmem:[%s496] sm:$0xff]
  %v498 = vld [vmem:[%s496 + $0x8] sm:$0xff]
  %v499 = vld [vmem:[%s496 + $0x10] sm:$0xff]
  %v500 = vld [vmem:[%s496 + $0x18] sm:$0xff]
  %v501 = vld [vmem:[#allocation3] sm:$0xff]
  %v502 = vld [vmem:[#allocation3 + $0x8] sm:$0xff]
  %v503 = vld [vmem:[#allocation3 + $0x10] sm:$0xff]
  %v504 = vld [vmem:[#allocation3 + $0x18] sm:$0xff]
  %v505 = vld [vmem:[#allocation3 + $0x20] sm:$0xff]
  %v506 = vld [vmem:[#allocation3 + $0x28] sm:$0xff]
  %v507 = vld [vmem:[#allocation3 + $0x30] sm:$0xff]
  %v508 = vld [vmem:[#allocation3 + $0x38] sm:$0xff]
  %v509 = vld [vmem:[#allocation3 + $0x40] sm:$0xff]
  %v510 = vld [vmem:[#allocation3 + $0x48] sm:$0xff]
  %v511 = vld [vmem:[#allocation3 + $0x50] sm:$0xff]
  %v512 = vld [vmem:[#allocation3 + $0x58] sm:$0xff]
  %v513 = vpack.c.bf16 %v493, %v492
  %v514 = vpack.c.bf16 %v495, %v494
  %516 = vset.pattern.permute.xlu0 0
  %517 = vperm.xlu0 %516, %v95
  %v518 = vpop.permute.xlu0 %517
  %521 = vset.pattern.permute.xlu0 0
  %522 = vperm.xlu0 %521, %v96
  %v523 = vpop.permute.xlu0 %522
  %526 = vset.pattern.permute.xlu0 0
  %527 = vperm.xlu0 %526, %v97
  %v528 = vpop.permute.xlu0 %527
  %531 = vset.pattern.permute.xlu0 0
  %532 = vperm.xlu0 %531, %v98
  %v533 = vpop.permute.xlu0 %532
  %536 = vset.pattern.permute.xlu0 0
  %537 = vperm.xlu0 %536, %v99
  %v538 = vpop.permute.xlu0 %537
  %541 = vset.pattern.permute.xlu0 0
  %542 = vperm.xlu0 %541, %v100
  %v543 = vpop.permute.xlu0 %542
  %546 = vset.pattern.permute.xlu0 0
  %547 = vperm.xlu0 %546, %v101
  %v548 = vpop.permute.xlu0 %547
  %551 = vset.pattern.permute.xlu0 0
  %552 = vperm.xlu0 %551, %v102
  %v553 = vpop.permute.xlu0 %552
  %556 = vset.pattern.permute.xlu0 0
  %557 = vperm.xlu0 %556, %v103
  %v558 = vpop.permute.xlu0 %557
  %561 = vset.pattern.permute.xlu0 0
  %562 = vperm.xlu0 %561, %v104
  %v563 = vpop.permute.xlu0 %562
  %566 = vset.pattern.permute.xlu0 0
  %567 = vperm.xlu0 %566, %v105
  %v568 = vpop.permute.xlu0 %567
  %571 = vset.pattern.permute.xlu0 0
  %572 = vperm.xlu0 %571, %v106
  %v573 = vpop.permute.xlu0 %572
  %v587 = vunpack.c.l.b16 %v83
  %v588 = vunpack.c.l.b16 %v84
  %v589 = vunpack.c.l.b16 %v85
  %v590 = vunpack.c.l.b16 %v86
  %v591 = vunpack.c.l.b16 %v87
  %v592 = vunpack.c.l.b16 %v88
  %v593 = vunpack.c.l.b16 %v89
  %v594 = vunpack.c.l.b16 %v90
  %v595 = vunpack.c.l.b16 %v91
  %v596 = vunpack.c.l.b16 %v92
  %v597 = vunpack.c.l.b16 %v93
  %v598 = vunpack.c.l.b16 %v94
  %v599 = vpack.c.b16 %v588, %v587
  %v600 = vpack.c.b16 %v590, %v589
  %v601 = vpack.c.b16 %v592, %v591
  %v602 = vpack.c.b16 %v594, %v593
  %v603 = vpack.c.b16 %v596, %v595
  %v604 = vpack.c.b16 %v598, %v597
  %vm605 = vcmask 261120
  %v607 = vsel %vm605, %v599, 0
  %v610 = vsel %vm605, %v600, 0
  %v613 = vsel %vm605, %v601, 0
  %v616 = vsel %vm605, %v602, 0
  %v619 = vsel %vm605, %v603, 0
  %v622 = vsel %vm605, %v604, 0
  %624 = vmatprep.subr.bf16.mxu0 0
  %625 = vmatpush1.bf16.msra.mxu0 %v513
  %626 = vmatprep.subr.bf16.mxu0 0
  %627 = vmatpush1.bf16.msra.mxu0 %v514
  %628 = vmatprep.subr.bf16.mxu0 0
  %629 = vmatpush1.bf16.msra.mxu0 0
  %630 = vmatprep.subr.bf16.mxu0 0
  %631 = vmatpush1.bf16.msra.mxu0 0
  %632 = vmatprep.subr.bf16.mxu0 0
  %633 = vmatpush1.bf16.msra.mxu0 0
  %634 = vmatprep.subr.bf16.mxu0 0
  %635 = vmatpush1.bf16.msra.mxu0 0
  %636 = vmatprep.subr.bf16.mxu0 0
  %637 = vmatpush1.bf16.msra.mxu0 0
  %638 = vmatprep.subr.bf16.mxu0 0
  %639 = vmatpush1.bf16.msra.mxu0 0
  %640 = vmatprep.subr.bf16.mxu0 0
  %641 = vmatpush1.bf16.msra.mxu0 0
  %642 = vmatprep.subr.bf16.mxu0 0
  %643 = vmatpush1.bf16.msra.mxu0 0
  %644 = vmatprep.subr.bf16.mxu0 0
  %645 = vmatpush1.bf16.msra.mxu0 0
  %646 = vmatprep.subr.bf16.mxu0 0
  %647 = vmatpush1.bf16.msra.mxu0 0
  %648 = vmatprep.subr.bf16.mxu0 0
  %649 = vmatpush1.bf16.msra.mxu0 0
  %650 = vmatprep.subr.bf16.mxu0 0
  %651 = vmatpush1.bf16.msra.mxu0 0
  %652 = vmatprep.subr.bf16.mxu0 0
  %653 = vmatpush1.bf16.msra.mxu0 0
  %654 = vmatprep.subr.bf16.mxu0 0
  %655 = vmatpush1.bf16.msra.mxu0 0
  %656 = vmatprep.mubr.bf16.mxu0 0
  %657 = vmatmul.mubr.bf16.gmra.mrb[0].mxu0 %v607
  %v658 = vpop.f32.mrb[0].mxu0
  %v659 = vadd.f32 %v518, %v658
  %v660 = vpop.f32.mrb[0].mxu0
  %v661 = vpop.f32.mrb[0].mxu0
  %v662 = vadd.f32 %v523, %v661
  %v663 = vpop.f32.mrb[0].mxu0
  %664 = vmatprep.mubr.bf16.mxu0 0
  %665 = vmatmul.mubr.bf16.gmra.mrb[0].mxu0 %v610
  %v666 = vpop.f32.mrb[0].mxu0
  %v667 = vadd.f32 %v528, %v666
  %v668 = vpop.f32.mrb[0].mxu0
  %v669 = vpop.f32.mrb[0].mxu0
  %v670 = vadd.f32 %v533, %v669
  %v671 = vpop.f32.mrb[0].mxu0
  %672 = vmatprep.mubr.bf16.mxu0 0
  %673 = vmatmul.mubr.bf16.gmra.mrb[0].mxu0 %v613
  %v674 = vpop.f32.mrb[0].mxu0
  %v675 = vadd.f32 %v538, %v674
  %v676 = vpop.f32.mrb[0].mxu0
  %v677 = vpop.f32.mrb[0].mxu0
  %v678 = vadd.f32 %v543, %v677
  %v679 = vpop.f32.mrb[0].mxu0
  %680 = vmatprep.mubr.bf16.mxu0 0
  %681 = vmatmul.mubr.bf16.gmra.mrb[0].mxu0 %v616
  %v682 = vpop.f32.mrb[0].mxu0
  %v683 = vadd.f32 %v548, %v682
  %v684 = vpop.f32.mrb[0].mxu0
  %v685 = vpop.f32.mrb[0].mxu0
  %v686 = vadd.f32 %v553, %v685
  %v687 = vpop.f32.mrb[0].mxu0
  %688 = vmatprep.mubr.bf16.mxu0 0
  %689 = vmatmul.mubr.bf16.gmra.mrb[0].mxu0 %v619
  %v690 = vpop.f32.mrb[0].mxu0
  %v691 = vadd.f32 %v558, %v690
  %v692 = vpop.f32.mrb[0].mxu0
  %v693 = vpop.f32.mrb[0].mxu0
  %v694 = vadd.f32 %v563, %v693
  %v695 = vpop.f32.mrb[0].mxu0
  %696 = vmatprep.mubr.bf16.mxu0 0
  %697 = vmatmul.mubr.bf16.gmra.mrb[0].mxu0 %v622
  %v698 = vpop.f32.mrb[0].mxu0
  %v699 = vadd.f32 %v568, %v698
  %v700 = vpop.f32.mrb[0].mxu0
  %v701 = vpop.f32.mrb[0].mxu0
  %v702 = vadd.f32 %v573, %v701
  %v703 = vpop.f32.mrb[0].mxu0
  %704 = vdwg.mxu0
  %v705 = vadd.f32 %v501, %v659
  %v706 = vadd.f32 %v502, %v662
  %v707 = vadd.f32 %v503, %v667
  %v708 = vadd.f32 %v504, %v670
  %v709 = vxor.u32 %v705, 2147483648
  %v710 = vxor.u32 %v706, 2147483648
  %v711 = vxor.u32 %v707, 2147483648
  %v712 = vxor.u32 %v708, 2147483648
  %v713 = vmul.f32 %v709, 1.442695
  %v714 = vpow.pop %v713
  %v715 = vmul.f32 %v710, 1.442695
  %v716 = vpow.pop %v715
  %v717 = vmul.f32 %v711, 1.442695
  %v718 = vpow.pop %v717
  %v719 = vmul.f32 %v712, 1.442695
  %v720 = vpow.pop %v719
  %v721 = vadd.f32 %v714, 1.0
  %v722 = vadd.f32 %v716, 1.0
  %v723 = vadd.f32 %v718, 1.0
  %v724 = vadd.f32 %v720, 1.0
  %v725 = vrcp.pop %v721
  %v726 = vmul.f32 1.0, %v725
  %v727 = vrcp.pop %v722
  %v728 = vmul.f32 1.0, %v727
  %v729 = vrcp.pop %v723
  %v730 = vmul.f32 1.0, %v729
  %v731 = vrcp.pop %v724
  %v732 = vmul.f32 1.0, %v731
  %v733 = vadd.f32 %v505, %v675
  %v734 = vadd.f32 %v506, %v678
  %v735 = vadd.f32 %v507, %v683
  %v736 = vadd.f32 %v508, %v686
  %v737 = vxor.u32 %v733, 2147483648
  %v738 = vxor.u32 %v734, 2147483648
  %v739 = vxor.u32 %v735, 2147483648
  %v740 = vxor.u32 %v736, 2147483648
  %v741 = vmul.f32 %v737, 1.442695
  %v742 = vpow.pop %v741
  %v743 = vmul.f32 %v738, 1.442695
  %v744 = vpow.pop %v743
  %v745 = vmul.f32 %v739, 1.442695
  %v746 = vpow.pop %v745
  %v747 = vmul.f32 %v740, 1.442695
  %v748 = vpow.pop %v747
  %v749 = vadd.f32 %v742, 1.0
  %v750 = vadd.f32 %v744, 1.0
  %v751 = vadd.f32 %v746, 1.0
  %v752 = vadd.f32 %v748, 1.0
  %v753 = vrcp.pop %v749
  %v754 = vmul.f32 1.0, %v753
  %v755 = vrcp.pop %v750
  %v756 = vmul.f32 1.0, %v755
  %v757 = vrcp.pop %v751
  %v758 = vmul.f32 1.0, %v757
  %v759 = vrcp.pop %v752
  %v760 = vmul.f32 1.0, %v759
  %v761 = vmul.f32 %v726, %v691
  %v762 = vmul.f32 %v728, %v694
  %v763 = vmul.f32 %v730, %v699
  %v764 = vmul.f32 %v732, %v702
  %v765 = vadd.f32 %v509, %v761
  %v766 = vadd.f32 %v510, %v762
  %v767 = vadd.f32 %v511, %v763
  %v768 = vadd.f32 %v512, %v764
  %v769 = vtanh.pop %v765
  %v770 = vtanh.pop %v766
  %v771 = vtanh.pop %v767
  %v772 = vtanh.pop %v768
  %v773 = vsub.f32 1.0, %v754
  %v774 = vsub.f32 1.0, %v756
  %v775 = vsub.f32 1.0, %v758
  %v776 = vsub.f32 1.0, %v760
  %v777 = vmul.f32 %v773, %v769
  %v778 = vmul.f32 %v774, %v770
  %v779 = vmul.f32 %v775, %v771
  %v780 = vmul.f32 %v776, %v772
  %v781 = vmul.f32 %v754, %v492
  %v782 = vmul.f32 %v756, %v493
  %v783 = vmul.f32 %v758, %v494
  %v784 = vmul.f32 %v760, %v495
  %v785 = vadd.f32 %v777, %v781
  %v786 = vadd.f32 %v778, %v782
  %v787 = vadd.f32 %v779, %v783
  %v788 = vadd.f32 %v780, %v784
  %v789 = vpack.c.bf16 %v786, %v785
  %v790 = vpack.c.bf16 %v788, %v787
  %v791 = vpack.c.bf16 %v498, %v497
  %v792 = vpack.c.bf16 %v500, %v499
  %v809 = vunpack.c.l.b16 %v107
  %v810 = vunpack.c.l.b16 %v108
  %v811 = vunpack.c.l.b16 %v109
  %v812 = vunpack.c.l.b16 %v110
  %v813 = vunpack.c.l.b16 %v111
  %v814 = vunpack.c.l.b16 %v112
  %v815 = vunpack.c.l.b16 %v113
  %v816 = vunpack.c.l.b16 %v114
  %v817 = vunpack.c.l.b16 %v115
  %v818 = vunpack.c.l.b16 %v116
  %v819 = vunpack.c.l.b16 %v117
  %v820 = vunpack.c.l.b16 %v118
  %v821 = vunpack.c.l.b16 %v119
  %v822 = vunpack.c.l.b16 %v120
  %v823 = vunpack.c.l.b16 %v121
  %v824 = vunpack.c.l.b16 %v122
  %v825 = vpack.c.b16 %v810, %v809
  %v826 = vpack.c.b16 %v812, %v811
  %v827 = vpack.c.b16 %v814, %v813
  %v828 = vpack.c.b16 %v816, %v815
  %v829 = vpack.c.b16 %v818, %v817
  %v830 = vpack.c.b16 %v820, %v819
  %v831 = vpack.c.b16 %v822, %v821
  %v832 = vpack.c.b16 %v824, %v823
  %vm833 = vcmask 523264
  %v835 = vsel %vm833, %v825, 0
  %v838 = vsel %vm833, %v826, 0
  %v841 = vsel %vm833, %v827, 0
  %v844 = vsel %vm833, %v828, 0
  %v847 = vsel %vm833, %v829, 0
  %v850 = vsel %vm833, %v830, 0
  %v853 = vsel %vm833, %v831, 0
  %v856 = vsel %vm833, %v832, 0
  %858 = vmatprep.subr.bf16.mxu0 0
  %859 = vmatpush1.bf16.msra.mxu0 %v789
  %860 = vmatprep.subr.bf16.mxu0 0
  %861 = vmatpush1.bf16.msra.mxu0 %v790
  %862 = vmatprep.subr.bf16.mxu0 0
  %863 = vmatpush1.bf16.msra.mxu0 %v791
  %864 = vmatprep.subr.bf16.mxu0 0
  %865 = vmatpush1.bf16.msra.mxu0 %v792
  %866 = vmatprep.subr.bf16.mxu0 0
  %867 = vmatpush1.bf16.msra.mxu0 0
  %868 = vmatprep.subr.bf16.mxu0 0
  %869 = vmatpush1.bf16.msra.mxu0 0
  %870 = vmatprep.subr.bf16.mxu0 0
  %871 = vmatpush1.bf16.msra.mxu0 0
  %872 = vmatprep.subr.bf16.mxu0 0
  %873 = vmatpush1.bf16.msra.mxu0 0
  %874 = vmatprep.subr.bf16.mxu0 0
  %875 = vmatpush1.bf16.msra.mxu0 0
  %876 = vmatprep.subr.bf16.mxu0 0
  %877 = vmatpush1.bf16.msra.mxu0 0
  %878 = vmatprep.subr.bf16.mxu0 0
  %879 = vmatpush1.bf16.msra.mxu0 0
  %880 = vmatprep.subr.bf16.mxu0 0
  %881 = vmatpush1.bf16.msra.mxu0 0
  %882 = vmatprep.subr.bf16.mxu0 0
  %883 = vmatpush1.bf16.msra.mxu0 0
  %884 = vmatprep.subr.bf16.mxu0 0
  %885 = vmatpush1.bf16.msra.mxu0 0
  %886 = vmatprep.subr.bf16.mxu0 0
  %887 = vmatpush1.bf16.msra.mxu0 0
  %888 = vmatprep.subr.bf16.mxu0 0
  %889 = vmatpush1.bf16.msra.mxu0 0
  %890 = vmatprep.mubr.bf16.mxu0 0
  %891 = vmatmul.mubr.bf16.gmra.mrb[0].mxu0 %v835
  %v892 = vpop.f32.mrb[0].mxu0
  %v893 = vadd.f32 0.0, %v892
  %v894 = vpop.f32.mrb[0].mxu0
  %v895 = vpop.f32.mrb[0].mxu0
  %v896 = vadd.f32 0.0, %v895
  %v897 = vpop.f32.mrb[0].mxu0
  %898 = vmatprep.mubr.bf16.mxu0 0
  %899 = vmatmul.mubr.bf16.gmra.mrb[0].mxu0 %v838
  %v900 = vpop.f32.mrb[0].mxu0
  %v901 = vadd.f32 0.0, %v900
  %v902 = vpop.f32.mrb[0].mxu0
  %v903 = vpop.f32.mrb[0].mxu0
  %v904 = vadd.f32 0.0, %v903
  %v905 = vpop.f32.mrb[0].mxu0
  %906 = vmatprep.mubr.bf16.mxu0 0
  %907 = vmatmul.mubr.bf16.gmra.mrb[0].mxu0 %v841
  %v908 = vpop.f32.mrb[0].mxu0
  %v909 = vadd.f32 0.0, %v908
  %v910 = vpop.f32.mrb[0].mxu0
  %v911 = vpop.f32.mrb[0].mxu0
  %v912 = vadd.f32 0.0, %v911
  %v913 = vpop.f32.mrb[0].mxu0
  %914 = vmatprep.mubr.bf16.mxu0 0
  %915 = vmatmul.mubr.bf16.gmra.mrb[0].mxu0 %v844
  %v916 = vpop.f32.mrb[0].mxu0
  %v917 = vadd.f32 0.0, %v916
  %v918 = vpop.f32.mrb[0].mxu0
  %v919 = vpop.f32.mrb[0].mxu0
  %v920 = vadd.f32 0.0, %v919
  %v921 = vpop.f32.mrb[0].mxu0
  %922 = vmatprep.mubr.bf16.mxu0 0
  %923 = vmatmul.mubr.bf16.gmra.mrb[0].mxu0 %v847
  %v924 = vpop.f32.mrb[0].mxu0
  %v925 = vadd.f32 0.0, %v924
  %v926 = vpop.f32.mrb[0].mxu0
  %v927 = vpop.f32.mrb[0].mxu0
  %v928 = vadd.f32 0.0, %v927
  %v929 = vpop.f32.mrb[0].mxu0
  %930 = vmatprep.mubr.bf16.mxu0 0
  %931 = vmatmul.mubr.bf16.gmra.mrb[0].mxu0 %v850
  %v932 = vpop.f32.mrb[0].mxu0
  %v933 = vadd.f32 0.0, %v932
  %v934 = vpop.f32.mrb[0].mxu0
  %v935 = vpop.f32.mrb[0].mxu0
  %v936 = vadd.f32 0.0, %v935
  %v937 = vpop.f32.mrb[0].mxu0
  %938 = vmatprep.mubr.bf16.mxu0 0
  %939 = vmatmul.mubr.bf16.gmra.mrb[0].mxu0 %v853
  %v940 = vpop.f32.mrb[0].mxu0
  %v941 = vadd.f32 0.0, %v940
  %v942 = vpop.f32.mrb[0].mxu0
  %v943 = vpop.f32.mrb[0].mxu0
  %v944 = vadd.f32 0.0, %v943
  %v945 = vpop.f32.mrb[0].mxu0
  %946 = vmatprep.mubr.bf16.mxu0 0
  %947 = vmatmul.mubr.bf16.gmra.mrb[0].mxu0 %v856
  %v948 = vpop.f32.mrb[0].mxu0
  %v949 = vadd.f32 0.0, %v948
  %v950 = vpop.f32.mrb[0].mxu0
  %v951 = vpop.f32.mrb[0].mxu0
  %v952 = vadd.f32 0.0, %v951
  %v953 = vpop.f32.mrb[0].mxu0
  %954 = vdwg.mxu0
  %956 = vset.pattern.permute.xlu0 0
  %957 = vperm.xlu0 %956, %v123
  %v958 = vpop.permute.xlu0 %957
  %961 = vset.pattern.permute.xlu0 0
  %962 = vperm.xlu0 %961, %v124
  %v963 = vpop.permute.xlu0 %962
  %966 = vset.pattern.permute.xlu0 0
  %967 = vperm.xlu0 %966, %v125
  %v968 = vpop.permute.xlu0 %967
  %971 = vset.pattern.permute.xlu0 0
  %972 = vperm.xlu0 %971, %v126
  %v973 = vpop.permute.xlu0 %972
  %976 = vset.pattern.permute.xlu0 0
  %977 = vperm.xlu0 %976, %v127
  %v978 = vpop.permute.xlu0 %977
  %981 = vset.pattern.permute.xlu0 0
  %982 = vperm.xlu0 %981, %v128
  %v983 = vpop.permute.xlu0 %982
  %986 = vset.pattern.permute.xlu0 0
  %987 = vperm.xlu0 %986, %v129
  %v988 = vpop.permute.xlu0 %987
  %991 = vset.pattern.permute.xlu0 0
  %992 = vperm.xlu0 %991, %v130
  %v993 = vpop.permute.xlu0 %992
  %v995 = vadd.f32 %v893, %v958
  %v996 = vadd.f32 %v896, %v963
  %v997 = vadd.f32 %v901, %v968
  %v998 = vadd.f32 %v904, %v973
  %v999 = vadd.f32 %v909, %v978
  %v1000 = vadd.f32 %v912, %v983
  %v1001 = vadd.f32 %v917, %v988
  %v1002 = vadd.f32 %v920, %v993
  %v1003 = vxor.u32 %v995, 2147483648
  %v1004 = vxor.u32 %v996, 2147483648
  %v1005 = vxor.u32 %v997, 2147483648
  %v1006 = vxor.u32 %v998, 2147483648
  %v1007 = vxor.u32 %v999, 2147483648
  %v1008 = vxor.u32 %v1000, 2147483648
  %v1009 = vxor.u32 %v1001, 2147483648
  %v1010 = vxor.u32 %v1002, 2147483648
  %v1011 = vmul.f32 %v1003, 1.442695
  %v1012 = vpow.pop %v1011
  %v1013 = vmul.f32 %v1004, 1.442695
  %v1014 = vpow.pop %v1013
  %v1015 = vmul.f32 %v1005, 1.442695
  %v1016 = vpow.pop %v1015
  %v1017 = vmul.f32 %v1006, 1.442695
  %v1018 = vpow.pop %v1017
  %v1019 = vmul.f32 %v1007, 1.442695
  %v1020 = vpow.pop %v1019
  %v1021 = vmul.f32 %v1008, 1.442695
  %v1022 = vpow.pop %v1021
  %v1023 = vmul.f32 %v1009, 1.442695
  %v1024 = vpow.pop %v1023
  %v1025 = vmul.f32 %v1010, 1.442695
  %v1026 = vpow.pop %v1025
  %v1027 = vadd.f32 %v1012, 1.0
  %v1028 = vadd.f32 %v1014, 1.0
  %v1029 = vadd.f32 %v1016, 1.0
  %v1030 = vadd.f32 %v1018, 1.0
  %v1031 = vadd.f32 %v1020, 1.0
  %v1032 = vadd.f32 %v1022, 1.0
  %v1033 = vadd.f32 %v1024, 1.0
  %v1034 = vadd.f32 %v1026, 1.0
  %v1035 = vrcp.pop %v1027
  %v1036 = vmul.f32 1.0, %v1035
  %v1037 = vrcp.pop %v1028
  %v1038 = vmul.f32 1.0, %v1037
  %v1039 = vrcp.pop %v1029
  %v1040 = vmul.f32 1.0, %v1039
  %v1041 = vrcp.pop %v1030
  %v1042 = vmul.f32 1.0, %v1041
  %v1043 = vrcp.pop %v1031
  %v1044 = vmul.f32 1.0, %v1043
  %v1045 = vrcp.pop %v1032
  %v1046 = vmul.f32 1.0, %v1045
  %v1047 = vrcp.pop %v1033
  %v1048 = vmul.f32 1.0, %v1047
  %v1049 = vrcp.pop %v1034
  %v1050 = vmul.f32 1.0, %v1049
  %1052 = vset.pattern.permute.xlu0 0
  %1053 = vperm.xlu0 %1052, %v131
  %v1054 = vpop.permute.xlu0 %1053
  %1057 = vset.pattern.permute.xlu0 0
  %1058 = vperm.xlu0 %1057, %v132
  %v1059 = vpop.permute.xlu0 %1058
  %1062 = vset.pattern.permute.xlu0 0
  %1063 = vperm.xlu0 %1062, %v133
  %v1064 = vpop.permute.xlu0 %1063
  %1067 = vset.pattern.permute.xlu0 0
  %1068 = vperm.xlu0 %1067, %v134
  %v1069 = vpop.permute.xlu0 %1068
  %v1071 = vadd.f32 %v925, %v1054
  %v1072 = vadd.f32 %v928, %v1059
  %v1073 = vadd.f32 %v933, %v1064
  %v1074 = vadd.f32 %v936, %v1069
  %1076 = vset.pattern.permute.xlu0 0
  %1077 = vperm.xlu0 %1076, %v135
  %v1078 = vpop.permute.xlu0 %1077
  %1081 = vset.pattern.permute.xlu0 0
  %1082 = vperm.xlu0 %1081, %v136
  %v1083 = vpop.permute.xlu0 %1082
  %1086 = vset.pattern.permute.xlu0 0
  %1087 = vperm.xlu0 %1086, %v137
  %v1088 = vpop.permute.xlu0 %1087
  %1091 = vset.pattern.permute.xlu0 0
  %1092 = vperm.xlu0 %1091, %v138
  %v1093 = vpop.permute.xlu0 %1092
  %v1095 = vadd.f32 %v941, %v1078
  %v1096 = vadd.f32 %v944, %v1083
  %v1097 = vadd.f32 %v949, %v1088
  %v1098 = vadd.f32 %v952, %v1093
  %v1099 = vmul.f32 %v1036, %v1095
  %v1100 = vmul.f32 %v1038, %v1096
  %v1101 = vmul.f32 %v1040, %v1097
  %v1102 = vmul.f32 %v1042, %v1098
  %v1103 = vadd.f32 %v1071, %v1099
  %v1104 = vadd.f32 %v1072, %v1100
  %v1105 = vadd.f32 %v1073, %v1101
  %v1106 = vadd.f32 %v1074, %v1102
  %v1107 = vtanh.pop %v1103
  %v1108 = vtanh.pop %v1104
  %v1109 = vtanh.pop %v1105
  %v1110 = vtanh.pop %v1106
  %v1111 = vsub.f32 1.0, %v1044
  %v1112 = vsub.f32 1.0, %v1046
  %v1113 = vsub.f32 1.0, %v1048
  %v1114 = vsub.f32 1.0, %v1050
  %v1115 = vmul.f32 %v1111, %v1107
  %v1116 = vmul.f32 %v1112, %v1108
  %v1117 = vmul.f32 %v1113, %v1109
  %v1118 = vmul.f32 %v1114, %v1110
  %v1119 = vmul.f32 %v1044, %v497
  %v1120 = vmul.f32 %v1046, %v498
  %v1121 = vmul.f32 %v1048, %v499
  %v1122 = vmul.f32 %v1050, %v500
  %v1123 = vadd.f32 %v1115, %v1119
  %v1124 = vadd.f32 %v1116, %v1120
  %v1125 = vadd.f32 %v1117, %v1121
  %v1126 = vadd.f32 %v1118, %v1122
  %vm1127 = vcmask 31744
  %1128 = vst.msk [vmem:[%s10] sm:$0xff] %vm1127, %v1123
  %1129 = vst.msk [vmem:[%s10 + $0x8] sm:$0xff] %vm1127, %v1124
  %1130 = vst.msk [vmem:[%s10 + $0x10] sm:$0xff] %vm1127, %v1125
  %1131 = vst.msk [vmem:[%s10 + $0x18] sm:$0xff] %vm1127, %v1126
  %s1132 = scalar_lea.vmem [#allocation3], 96
  %v1133 = vld [vmem:[%s1132] sm:$0xff]
  %v1134 = vld [vmem:[%s1132 + $0x8] sm:$0xff]
  %v1135 = vld [vmem:[%s1132 + $0x10] sm:$0xff]
  %v1136 = vld [vmem:[%s1132 + $0x18] sm:$0xff]
  %v1137 = vld [vmem:[%s1132 + $0x20] sm:$0xff]
  %v1138 = vld [vmem:[%s1132 + $0x28] sm:$0xff]
  %v1139 = vld [vmem:[%s1132 + $0x30] sm:$0xff]
  %v1140 = vld [vmem:[%s1132 + $0x38] sm:$0xff]
  %v1141 = vld [vmem:[%s1132 + $0x40] sm:$0xff]
  %v1142 = vld [vmem:[%s1132 + $0x48] sm:$0xff]
  %v1143 = vld [vmem:[%s1132 + $0x50] sm:$0xff]
  %v1144 = vld [vmem:[%s1132 + $0x58] sm:$0xff]
  %1145 = vmatprep.subr.bf16.mxu0 0
  %1146 = vmatpush1.bf16.msra.mxu0 %v789
  %1147 = vmatprep.subr.bf16.mxu0 0
  %1148 = vmatpush1.bf16.msra.mxu0 %v790
  %1149 = vmatprep.subr.bf16.mxu0 0
  %1150 = vmatpush1.bf16.msra.mxu0 0
  %1151 = vmatprep.subr.bf16.mxu0 0
  %1152 = vmatpush1.bf16.msra.mxu0 0
  %1153 = vmatprep.subr.bf16.mxu0 0
  %1154 = vmatpush1.bf16.msra.mxu0 0
  %1155 = vmatprep.subr.bf16.mxu0 0
  %1156 = vmatpush1.bf16.msra.mxu0 0
  %1157 = vmatprep.subr.bf16.mxu0 0
  %1158 = vmatpush1.bf16.msra.mxu0 0
  %1159 = vmatprep.subr.bf16.mxu0 0
  %1160 = vmatpush1.bf16.msra.mxu0 0
  %1161 = vmatprep.subr.bf16.mxu0 0
  %1162 = vmatpush1.bf16.msra.mxu0 0
  %1163 = vmatprep.subr.bf16.mxu0 0
  %1164 = vmatpush1.bf16.msra.mxu0 0
  %1165 = vmatprep.subr.bf16.mxu0 0
  %1166 = vmatpush1.bf16.msra.mxu0 0
  %1167 = vmatprep.subr.bf16.mxu0 0
  %1168 = vmatpush1.bf16.msra.mxu0 0
  %1169 = vmatprep.subr.bf16.mxu0 0
  %1170 = vmatpush1.bf16.msra.mxu0 0
  %1171 = vmatprep.subr.bf16.mxu0 0
  %1172 = vmatpush1.bf16.msra.mxu0 0
  %1173 = vmatprep.subr.bf16.mxu0 0
  %1174 = vmatpush1.bf16.msra.mxu0 0
  %1175 = vmatprep.subr.bf16.mxu0 0
  %1176 = vmatpush1.bf16.msra.mxu0 0
  %1177 = vmatprep.mubr.bf16.mxu0 0
  %1178 = vmatmul.mubr.bf16.gmra.mrb[0].mxu0 %v607
  %v1179 = vpop.f32.mrb[0].mxu0
  %v1180 = vadd.f32 %v518, %v1179
  %v1181 = vpop.f32.mrb[0].mxu0
  %v1182 = vpop.f32.mrb[0].mxu0
  %v1183 = vadd.f32 %v523, %v1182
  %v1184 = vpop.f32.mrb[0].mxu0
  %1185 = vmatprep.mubr.bf16.mxu0 0
  %1186 = vmatmul.mubr.bf16.gmra.mrb[0].mxu0 %v610
  %v1187 = vpop.f32.mrb[0].mxu0
  %v1188 = vadd.f32 %v528, %v1187
  %v1189 = vpop.f32.mrb[0].mxu0
  %v1190 = vpop.f32.mrb[0].mxu0
  %v1191 = vadd.f32 %v533, %v1190
  %v1192 = vpop.f32.mrb[0].mxu0
  %1193 = vmatprep.mubr.bf16.mxu0 0
  %1194 = vmatmul.mubr.bf16.gmra.mrb[0].mxu0 %v613
  %v1195 = vpop.f32.mrb[0].mxu0
  %v1196 = vadd.f32 %v538, %v1195
  %v1197 = vpop.f32.mrb[0].mxu0
  %v1198 = vpop.f32.mrb[0].mxu0
  %v1199 = vadd.f32 %v543, %v1198
  %v1200 = vpop.f32.mrb[0].mxu0
  %1201 = vmatprep.mubr.bf16.mxu0 0
  %1202 = vmatmul.mubr.bf16.gmra.mrb[0].mxu0 %v616
  %v1203 = vpop.f32.mrb[0].mxu0
  %v1204 = vadd.f32 %v548, %v1203
  %v1205 = vpop.f32.mrb[0].mxu0
  %v1206 = vpop.f32.mrb[0].mxu0
  %v1207 = vadd.f32 %v553, %v1206
  %v1208 = vpop.f32.mrb[0].mxu0
  %1209 = vmatprep.mubr.bf16.mxu0 0
  %1210 = vmatmul.mubr.bf16.gmra.mrb[0].mxu0 %v619
  %v1211 = vpop.f32.mrb[0].mxu0
  %v1212 = vadd.f32 %v558, %v1211
  %v1213 = vpop.f32.mrb[0].mxu0
  %v1214 = vpop.f32.mrb[0].mxu0
  %v1215 = vadd.f32 %v563, %v1214
  %v1216 = vpop.f32.mrb[0].mxu0
  %1217 = vmatprep.mubr.bf16.mxu0 0
  %1218 = vmatmul.mubr.bf16.gmra.mrb[0].mxu0 %v622
  %v1219 = vpop.f32.mrb[0].mxu0
  %v1220 = vadd.f32 %v568, %v1219
  %v1221 = vpop.f32.mrb[0].mxu0
  %v1222 = vpop.f32.mrb[0].mxu0
  %v1223 = vadd.f32 %v573, %v1222
  %v1224 = vpop.f32.mrb[0].mxu0
  %1225 = vdwg.mxu0
  %v1226 = vadd.f32 %v1133, %v1180
  %v1227 = vadd.f32 %v1134, %v1183
  %v1228 = vadd.f32 %v1135, %v1188
  %v1229 = vadd.f32 %v1136, %v1191
  %v1230 = vxor.u32 %v1226, 2147483648
  %v1231 = vxor.u32 %v1227, 2147483648
  %v1232 = vxor.u32 %v1228, 2147483648
  %v1233 = vxor.u32 %v1229, 2147483648
  %v1234 = vmul.f32 %v1230, 1.442695
  %v1235 = vpow.pop %v1234
  %v1236 = vmul.f32 %v1231, 1.442695
  %v1237 = vpow.pop %v1236
  %v1238 = vmul.f32 %v1232, 1.442695
  %v1239 = vpow.pop %v1238
  %v1240 = vmul.f32 %v1233, 1.442695
  %v1241 = vpow.pop %v1240
  %v1242 = vadd.f32 %v1235, 1.0
  %v1243 = vadd.f32 %v1237, 1.0
  %v1244 = vadd.f32 %v1239, 1.0
  %v1245 = vadd.f32 %v1241, 1.0
  %v1246 = vrcp.pop %v1242
  %v1247 = vmul.f32 1.0, %v1246
  %v1248 = vrcp.pop %v1243
  %v1249 = vmul.f32 1.0, %v1248
  %v1250 = vrcp.pop %v1244
  %v1251 = vmul.f32 1.0, %v1250
  %v1252 = vrcp.pop %v1245
  %v1253 = vmul.f32 1.0, %v1252
  %v1254 = vadd.f32 %v1137, %v1196
  %v1255 = vadd.f32 %v1138, %v1199
  %v1256 = vadd.f32 %v1139, %v1204
  %v1257 = vadd.f32 %v1140, %v1207
  %v1258 = vxor.u32 %v1254, 2147483648
  %v1259 = vxor.u32 %v1255, 2147483648
  %v1260 = vxor.u32 %v1256, 2147483648
  %v1261 = vxor.u32 %v1257, 2147483648
  %v1262 = vmul.f32 %v1258, 1.442695
  %v1263 = vpow.pop %v1262
  %v1264 = vmul.f32 %v1259, 1.442695
  %v1265 = vpow.pop %v1264
  %v1266 = vmul.f32 %v1260, 1.442695
  %v1267 = vpow.pop %v1266
  %v1268 = vmul.f32 %v1261, 1.442695
  %v1269 = vpow.pop %v1268
  %v1270 = vadd.f32 %v1263, 1.0
  %v1271 = vadd.f32 %v1265, 1.0
  %v1272 = vadd.f32 %v1267, 1.0
  %v1273 = vadd.f32 %v1269, 1.0
  %v1274 = vrcp.pop %v1270
  %v1275 = vmul.f32 1.0, %v1274
  %v1276 = vrcp.pop %v1271
  %v1277 = vmul.f32 1.0, %v1276
  %v1278 = vrcp.pop %v1272
  %v1279 = vmul.f32 1.0, %v1278
  %v1280 = vrcp.pop %v1273
  %v1281 = vmul.f32 1.0, %v1280
  %v1282 = vmul.f32 %v1247, %v1212
  %v1283 = vmul.f32 %v1249, %v1215
  %v1284 = vmul.f32 %v1251, %v1220
  %v1285 = vmul.f32 %v1253, %v1223
  %v1286 = vadd.f32 %v1141, %v1282
  %v1287 = vadd.f32 %v1142, %v1283
  %v1288 = vadd.f32 %v1143, %v1284
  %v1289 = vadd.f32 %v1144, %v1285
  %v1290 = vtanh.pop %v1286
  %v1291 = vtanh.pop %v1287
  %v1292 = vtanh.pop %v1288
  %v1293 = vtanh.pop %v1289
  %v1294 = vsub.f32 1.0, %v1275
  %v1295 = vsub.f32 1.0, %v1277
  %v1296 = vsub.f32 1.0, %v1279
  %v1297 = vsub.f32 1.0, %v1281
  %v1298 = vmul.f32 %v1294, %v1290
  %v1299 = vmul.f32 %v1295, %v1291
  %v1300 = vmul.f32 %v1296, %v1292
  %v1301 = vmul.f32 %v1297, %v1293
  %v1302 = vmul.f32 %v1275, %v785
  %v1303 = vmul.f32 %v1277, %v786
  %v1304 = vmul.f32 %v1279, %v787
  %v1305 = vmul.f32 %v1281, %v788
  %v1306 = vadd.f32 %v1298, %v1302
  %v1307 = vadd.f32 %v1299, %v1303
  %v1308 = vadd.f32 %v1300, %v1304
  %v1309 = vadd.f32 %v1301, %v1305
  %v1310 = vpack.c.bf16 %v1307, %v1306
  %v1311 = vpack.c.bf16 %v1309, %v1308
  %v1312 = vpack.c.bf16 %v1124, %v1123
  %v1313 = vpack.c.bf16 %v1126, %v1125
  %1314 = vmatprep.subr.bf16.mxu0 0
  %1315 = vmatpush1.bf16.msra.mxu0 %v1310
  %1316 = vmatprep.subr.bf16.mxu0 0
  %1317 = vmatpush1.bf16.msra.mxu0 %v1311
  %1318 = vmatprep.subr.bf16.mxu0 0
  %1319 = vmatpush1.bf16.msra.mxu0 %v1312
  %1320 = vmatprep.subr.bf16.mxu0 0
  %1321 = vmatpush1.bf16.msra.mxu0 %v1313
  %1322 = vmatprep.subr.bf16.mxu0 0
  %1323 = vmatpush1.bf16.msra.mxu0 0
  %1324 = vmatprep.subr.bf16.mxu0 0
  %1325 = vmatpush1.bf16.msra.mxu0 0
  %1326 = vmatprep.subr.bf16.mxu0 0
  %1327 = vmatpush1.bf16.msra.mxu0 0
  %1328 = vmatprep.subr.bf16.mxu0 0
  %1329 = vmatpush1.bf16.msra.mxu0 0
  %1330 = vmatprep.subr.bf16.mxu0 0
  %1331 = vmatpush1.bf16.msra.mxu0 0
  %1332 = vmatprep.subr.bf16.mxu0 0
  %1333 = vmatpush1.bf16.msra.mxu0 0
  %1334 = vmatprep.subr.bf16.mxu0 0
  %1335 = vmatpush1.bf16.msra.mxu0 0
  %1336 = vmatprep.subr.bf16.mxu0 0
  %1337 = vmatpush1.bf16.msra.mxu0 0
  %1338 = vmatprep.subr.bf16.mxu0 0
  %1339 = vmatpush1.bf16.msra.mxu0 0
  %1340 = vmatprep.subr.bf16.mxu0 0
  %1341 = vmatpush1.bf16.msra.mxu0 0
  %1342 = vmatprep.subr.bf16.mxu0 0
  %1343 = vmatpush1.bf16.msra.mxu0 0
  %1344 = vmatprep.subr.bf16.mxu0 0
  %1345 = vmatpush1.bf16.msra.mxu0 0
  %1346 = vmatprep.mubr.bf16.mxu0 0
  %1347 = vmatmul.mubr.bf16.gmra.mrb[0].mxu0 %v835
  %v1348 = vpop.f32.mrb[0].mxu0
  %v1349 = vadd.f32 0.0, %v1348
  %v1350 = vpop.f32.mrb[0].mxu0
  %v1351 = vpop.f32.mrb[0].mxu0
  %v1352 = vadd.f32 0.0, %v1351
  %v1353 = vpop.f32.mrb[0].mxu0
  %1354 = vmatprep.mubr.bf16.mxu0 0
  %1355 = vmatmul.mubr.bf16.gmra.mrb[0].mxu0 %v838
  %v1356 = vpop.f32.mrb[0].mxu0
  %v1357 = vadd.f32 0.0, %v1356
  %v1358 = vpop.f32.mrb[0].mxu0
  %v1359 = vpop.f32.mrb[0].mxu0
  %v1360 = vadd.f32 0.0, %v1359
  %v1361 = vpop.f32.mrb[0].mxu0
  %1362 = vmatprep.mubr.bf16.mxu0 0
  %1363 = vmatmul.mubr.bf16.gmra.mrb[0].mxu0 %v841
  %v1364 = vpop.f32.mrb[0].mxu0
  %v1365 = vadd.f32 0.0, %v1364
  %v1366 = vpop.f32.mrb[0].mxu0
  %v1367 = vpop.f32.mrb[0].mxu0
  %v1368 = vadd.f32 0.0, %v1367
  %v1369 = vpop.f32.mrb[0].mxu0
  %1370 = vmatprep.mubr.bf16.mxu0 0
  %1371 = vmatmul.mubr.bf16.gmra.mrb[0].mxu0 %v844
  %v1372 = vpop.f32.mrb[0].mxu0
  %v1373 = vadd.f32 0.0, %v1372
  %v1374 = vpop.f32.mrb[0].mxu0
  %v1375 = vpop.f32.mrb[0].mxu0
  %v1376 = vadd.f32 0.0, %v1375
  %v1377 = vpop.f32.mrb[0].mxu0
  %1378 = vmatprep.mubr.bf16.mxu0 0
  %1379 = vmatmul.mubr.bf16.gmra.mrb[0].mxu0 %v847
  %v1380 = vpop.f32.mrb[0].mxu0
  %v1381 = vadd.f32 0.0, %v1380
  %v1382 = vpop.f32.mrb[0].mxu0
  %v1383 = vpop.f32.mrb[0].mxu0
  %v1384 = vadd.f32 0.0, %v1383
  %v1385 = vpop.f32.mrb[0].mxu0
  %1386 = vmatprep.mubr.bf16.mxu0 0
  %1387 = vmatmul.mubr.bf16.gmra.mrb[0].mxu0 %v850
  %v1388 = vpop.f32.mrb[0].mxu0
  %v1389 = vadd.f32 0.0, %v1388
  %v1390 = vpop.f32.mrb[0].mxu0
  %v1391 = vpop.f32.mrb[0].mxu0
  %v1392 = vadd.f32 0.0, %v1391
  %v1393 = vpop.f32.mrb[0].mxu0
  %1394 = vmatprep.mubr.bf16.mxu0 0
  %1395 = vmatmul.mubr.bf16.gmra.mrb[0].mxu0 %v853
  %v1396 = vpop.f32.mrb[0].mxu0
  %v1397 = vadd.f32 0.0, %v1396
  %v1398 = vpop.f32.mrb[0].mxu0
  %v1399 = vpop.f32.mrb[0].mxu0
  %v1400 = vadd.f32 0.0, %v1399
  %v1401 = vpop.f32.mrb[0].mxu0
  %1402 = vmatprep.mubr.bf16.mxu0 0
  %1403 = vmatmul.mubr.bf16.gmra.mrb[0].mxu0 %v856
  %v1404 = vpop.f32.mrb[0].mxu0
  %v1405 = vadd.f32 0.0, %v1404
  %v1406 = vpop.f32.mrb[0].mxu0
  %v1407 = vpop.f32.mrb[0].mxu0
  %v1408 = vadd.f32 0.0, %v1407
  %v1409 = vpop.f32.mrb[0].mxu0
  %1410 = vdwg.mxu0
  %v1411 = vadd.f32 %v1349, %v958
  %v1412 = vadd.f32 %v1352, %v963
  %v1413 = vadd.f32 %v1357, %v968
  %v1414 = vadd.f32 %v1360, %v973
  %v1415 = vadd.f32 %v1365, %v978
  %v1416 = vadd.f32 %v1368, %v983
  %v1417 = vadd.f32 %v1373, %v988
  %v1418 = vadd.f32 %v1376, %v993
  %v1419 = vxor.u32 %v1411, 2147483648
  %v1420 = vxor.u32 %v1412, 2147483648
  %v1421 = vxor.u32 %v1413, 2147483648
  %v1422 = vxor.u32 %v1414, 2147483648
  %v1423 = vxor.u32 %v1415, 2147483648
  %v1424 = vxor.u32 %v1416, 2147483648
  %v1425 = vxor.u32 %v1417, 2147483648
  %v1426 = vxor.u32 %v1418, 2147483648
  %v1427 = vmul.f32 %v1419, 1.442695
  %v1428 = vpow.pop %v1427
  %v1429 = vmul.f32 %v1420, 1.442695
  %v1430 = vpow.pop %v1429
  %v1431 = vmul.f32 %v1421, 1.442695
  %v1432 = vpow.pop %v1431
  %v1433 = vmul.f32 %v1422, 1.442695
  %v1434 = vpow.pop %v1433
  %v1435 = vmul.f32 %v1423, 1.442695
  %v1436 = vpow.pop %v1435
  %v1437 = vmul.f32 %v1424, 1.442695
  %v1438 = vpow.pop %v1437
  %v1439 = vmul.f32 %v1425, 1.442695
  %v1440 = vpow.pop %v1439
  %v1441 = vmul.f32 %v1426, 1.442695
  %v1442 = vpow.pop %v1441
  %v1443 = vadd.f32 %v1428, 1.0
  %v1444 = vadd.f32 %v1430, 1.0
  %v1445 = vadd.f32 %v1432, 1.0
  %v1446 = vadd.f32 %v1434, 1.0
  %v1447 = vadd.f32 %v1436, 1.0
  %v1448 = vadd.f32 %v1438, 1.0
  %v1449 = vadd.f32 %v1440, 1.0
  %v1450 = vadd.f32 %v1442, 1.0
  %v1451 = vrcp.pop %v1443
  %v1452 = vmul.f32 1.0, %v1451
  %v1453 = vrcp.pop %v1444
  %v1454 = vmul.f32 1.0, %v1453
  %v1455 = vrcp.pop %v1445
  %v1456 = vmul.f32 1.0, %v1455
  %v1457 = vrcp.pop %v1446
  %v1458 = vmul.f32 1.0, %v1457
  %v1459 = vrcp.pop %v1447
  %v1460 = vmul.f32 1.0, %v1459
  %v1461 = vrcp.pop %v1448
  %v1462 = vmul.f32 1.0, %v1461
  %v1463 = vrcp.pop %v1449
  %v1464 = vmul.f32 1.0, %v1463
  %v1465 = vrcp.pop %v1450
  %v1466 = vmul.f32 1.0, %v1465
  %v1467 = vadd.f32 %v1381, %v1054
  %v1468 = vadd.f32 %v1384, %v1059
  %v1469 = vadd.f32 %v1389, %v1064
  %v1470 = vadd.f32 %v1392, %v1069
  %v1471 = vadd.f32 %v1397, %v1078
  %v1472 = vadd.f32 %v1400, %v1083
  %v1473 = vadd.f32 %v1405, %v1088
  %v1474 = vadd.f32 %v1408, %v1093
  %v1475 = vmul.f32 %v1452, %v1471
  %v1476 = vmul.f32 %v1454, %v1472
  %v1477 = vmul.f32 %v1456, %v1473
  %v1478 = vmul.f32 %v1458, %v1474
  %v1479 = vadd.f32 %v1467, %v1475
  %v1480 = vadd.f32 %v1468, %v1476
  %v1481 = vadd.f32 %v1469, %v1477
  %v1482 = vadd.f32 %v1470, %v1478
  %v1483 = vtanh.pop %v1479
  %v1484 = vtanh.pop %v1480
  %v1485 = vtanh.pop %v1481
  %v1486 = vtanh.pop %v1482
  %v1487 = vsub.f32 1.0, %v1460
  %v1488 = vsub.f32 1.0, %v1462
  %v1489 = vsub.f32 1.0, %v1464
  %v1490 = vsub.f32 1.0, %v1466
  %v1491 = vmul.f32 %v1487, %v1483
  %v1492 = vmul.f32 %v1488, %v1484
  %v1493 = vmul.f32 %v1489, %v1485
  %v1494 = vmul.f32 %v1490, %v1486
  %v1495 = vmul.f32 %v1460, %v1123
  %v1496 = vmul.f32 %v1462, %v1124
  %v1497 = vmul.f32 %v1464, %v1125
  %v1498 = vmul.f32 %v1466, %v1126
  %v1499 = vadd.f32 %v1491, %v1495
  %v1500 = vadd.f32 %v1492, %v1496
  %v1501 = vadd.f32 %v1493, %v1497
  %v1502 = vadd.f32 %v1494, %v1498
  %s1503 = scalar_lea.vmem %s10, 32
  %1504 = vst.msk [vmem:[%s1503] sm:$0xff] %vm1127, %v1499
  %1505 = vst.msk [vmem:[%s1503 + $0x8] sm:$0xff] %vm1127, %v1500
  %1506 = vst.msk [vmem:[%s1503 + $0x10] sm:$0xff] %vm1127, %v1501
  %1507 = vst.msk [vmem:[%s1503 + $0x18] sm:$0xff] %vm1127, %v1502
  %1508 = vst.msk [vmem:[#allocation2] sm:$0xff] %vm1127, %v1306
  %1509 = vst.msk [vmem:[#allocation2 + $0x8] sm:$0xff] %vm1127, %v1307
  %1510 = vst.msk [vmem:[#allocation2 + $0x10] sm:$0xff] %vm1127, %v1308
  %1511 = vst.msk [vmem:[#allocation2 + $0x18] sm:$0xff] %vm1127, %v1309
  %1512 = vst.msk [vmem:[%s496] sm:$0xff] %vm1127, %v1499
  %1513 = vst.msk [vmem:[%s496 + $0x8] sm:$0xff] %vm1127, %v1500
  %1514 = vst.msk [vmem:[%s496 + $0x10] sm:$0xff] %vm1127, %v1501
  %1515 = vst.msk [vmem:[%s496 + $0x18] sm:$0xff] %vm1127, %v1502
  // Predicated region
  $region53: #{net_forward.3} parent=0 // pred_check
    %p1516 = pneg %p38
  $region54: #{net_forward.3} parent=0 // pred_check_branch
    %1518 = sbr.rel (%p1516) target = $region56
  $region55: #{net_forward.3} parent=0 // pred_region
    %v1519 = vld [vmem:[#allocation2] sm:$0xff]
    %v1520 = vld [vmem:[#allocation2 + $0x8] sm:$0xff]
    %v1521 = vld [vmem:[#allocation2 + $0x10] sm:$0xff]
    %v1522 = vld [vmem:[#allocation2 + $0x18] sm:$0xff]
    %v1523 = vld [vmem:[#allocation2 + $0x20] sm:$0xff]
    %v1524 = vld [vmem:[#allocation2 + $0x28] sm:$0xff]
    %v1525 = vld [vmem:[#allocation2 + $0x30] sm:$0xff]
    %v1526 = vld [vmem:[#allocation2 + $0x38] sm:$0xff]
    %1527 = vst.msk [vmem:[%s11] sm:$0xff] %vm1127, %v1519
    %1528 = vst.msk [vmem:[%s11 + $0x8] sm:$0xff] %vm1127, %v1520
    %1529 = vst.msk [vmem:[%s11 + $0x10] sm:$0xff] %vm1127, %v1521
    %1530 = vst.msk [vmem:[%s11 + $0x18] sm:$0xff] %vm1127, %v1522
    %1531 = vst.msk [vmem:[%s11 + $0x20] sm:$0xff] %vm1127, %v1523
    %1532 = vst.msk [vmem:[%s11 + $0x28] sm:$0xff] %vm1127, %v1524
    %1533 = vst.msk [vmem:[%s11 + $0x30] sm:$0xff] %vm1127, %v1525
    %1534 = vst.msk [vmem:[%s11 + $0x38] sm:$0xff] %vm1127, %v1526
  $region56: #{net_forward.3} parent=0 // pred_fallthru
    _
  // Predicated region
  $region57: #{net_forward.3} parent=0 // pred_check
    _
  $region58: #{net_forward.3} parent=0 // pred_check_branch
    %1536 = sbr.rel (0) target = $region60
  $region59: #{net_forward.3} parent=0 // pred_region
    _
  $region60: #{net_forward.3} parent=0 // pred_fallthru
    _
  // Predicated region
  $region61: #{net_forward.3} parent=0 // pred_check
    _
  $region62: #{net_forward.3} parent=0 // pred_check_branch
    %1538 = sbr.rel (0) target = $region64
  $region63: #{net_forward.3} parent=0 // pred_region
    _
  $region64: #{net_forward.3} parent=0 // pred_fallthru
    _
  // Predicated region
  $region65: #{net_forward.3} parent=0 // pred_check
    _
  $region66: #{net_forward.3} parent=0 // pred_check_branch
    %1540 = sbr.rel (0) target = $region68
  $region67: #{net_forward.3} parent=0 // pred_region
    _
  $region68: #{net_forward.3} parent=0 // pred_fallthru
    _
  // Predicated region
  $region69: #{net_forward.3} parent=0 // pred_check
    _
  $region70: #{net_forward.3} parent=0 // pred_check_branch
    %1542 = sbr.rel (0) target = $region72
  $region71: #{net_forward.3} parent=0 // pred_region
    _
  $region72: #{net_forward.3} parent=0 // pred_fallthru
    _

// kernel: net_forward.2
$region0: #{net_forward.2}
  #allocation0 [shape = 'u32[]', space=smem, size = 0x4, offset = 0x4, fixed_abs, tag = 'smem constant byte address 0x4 - core index']
  #allocation1 [shape = 'u32[144,128]{1,0:T(1,128)}', space=vmem, size = 0x12000, scoped, tag = 'internal scratch']
  %s0 = inlined_call_operand.vmem [shape: bf16[8,32,10], index: 0, kind: input, shape index: {}]
  %s1 = inlined_call_operand.vmem [shape: bf16[10,64], index: 1, kind: input, shape index: {}]
  %s2 = inlined_call_operand.vmem [shape: f32[1,64], index: 2, kind: input, shape index: {}]
  %s3 = inlined_call_operand.vmem [shape: bf16[64,128], index: 3, kind: input, shape index: {}]
  %s4 = inlined_call_operand.vmem [shape: f32[1,128], index: 4, kind: input, shape index: {}]
  %s5 = inlined_call_operand.vmem [shape: bf16[128,128], index: 5, kind: input, shape index: {}]
  %s6 = inlined_call_operand.vmem [shape: bf16[128,128], index: 6, kind: input, shape index: {}]
  %s7 = inlined_call_operand.vmem [shape: f32[1,128], index: 7, kind: input, shape index: {}]
  %s8 = inlined_call_operand.vmem [shape: bf16[128,64], index: 8, kind: input, shape index: {}]
  %s9 = inlined_call_operand.vmem [shape: f32[1,64], index: 9, kind: input, shape index: {}]
  %s10 = inlined_call_operand.vmem [shape: f32[8,256], index: 10, kind: output, shape index: {}]
  %s11 = sld [smem:[#allocation0]]
  $region50: #{net_forward.2} parent=0
    _
  %s13 = ssub.s32 1, %s11
  %s14 = scalar_select 0, %s13, %s11
  // Predicated region
  $region2: #{net_forward.2} parent=0 // pred_check
    _
  $region3: #{net_forward.2} parent=0 // pred_check_branch
    %16 = sbr.rel (0) target = $region5
  $region4: #{net_forward.2} parent=0 // pred_region
    _
  $region5: #{net_forward.2} parent=0 // pred_fallthru
    _
  // Predicated region
  $region6: #{net_forward.2} parent=0 // pred_check
    _
  $region7: #{net_forward.2} parent=0 // pred_check_branch
    %18 = sbr.rel (0) target = $region9
  $region8: #{net_forward.2} parent=0 // pred_region
    _
  $region9: #{net_forward.2} parent=0 // pred_fallthru
    _
  // Predicated region
  $region10: #{net_forward.2} parent=0 // pred_check
    _
  $region11: #{net_forward.2} parent=0 // pred_check_branch
    %20 = sbr.rel (0) target = $region13
  $region12: #{net_forward.2} parent=0 // pred_region
    _
  $region13: #{net_forward.2} parent=0 // pred_fallthru
    _
  // Predicated region
  $region14: #{net_forward.2} parent=0 // pred_check
    _
  $region15: #{net_forward.2} parent=0 // pred_check_branch
    %22 = sbr.rel (0) target = $region17
  $region16: #{net_forward.2} parent=0 // pred_region
    _
  $region17: #{net_forward.2} parent=0 // pred_fallthru
    _
  // Predicated region
  $region18: #{net_forward.2} parent=0 // pred_check
    _
  $region19: #{net_forward.2} parent=0 // pred_check_branch
    %24 = sbr.rel (0) target = $region21
  $region20: #{net_forward.2} parent=0 // pred_region
    _
  $region21: #{net_forward.2} parent=0 // pred_fallthru
    _
  // Predicated region
  $region22: #{net_forward.2} parent=0 // pred_check
    _
  $region23: #{net_forward.2} parent=0 // pred_check_branch
    %26 = sbr.rel (0) target = $region25
  $region24: #{net_forward.2} parent=0 // pred_region
    _
  $region25: #{net_forward.2} parent=0 // pred_fallthru
    _
  // Predicated region
  $region26: #{net_forward.2} parent=0 // pred_check
    _
  $region27: #{net_forward.2} parent=0 // pred_check_branch
    %28 = sbr.rel (0) target = $region29
  $region28: #{net_forward.2} parent=0 // pred_region
    _
  $region29: #{net_forward.2} parent=0 // pred_fallthru
    _
  // Predicated region
  $region30: #{net_forward.2} parent=0 // pred_check
    _
  $region31: #{net_forward.2} parent=0 // pred_check_branch
    %30 = sbr.rel (0) target = $region33
  $region32: #{net_forward.2} parent=0 // pred_region
    _
  $region33: #{net_forward.2} parent=0 // pred_fallthru
    _
  // Predicated region
  $region34: #{net_forward.2} parent=0 // pred_check
    _
  $region35: #{net_forward.2} parent=0 // pred_check_branch
    %32 = sbr.rel (0) target = $region37
  $region36: #{net_forward.2} parent=0 // pred_region
    _
  $region37: #{net_forward.2} parent=0 // pred_fallthru
    _
  // Predicated region
  $region38: #{net_forward.2} parent=0 // pred_check
    _
  $region39: #{net_forward.2} parent=0 // pred_check_branch
    %34 = sbr.rel (0) target = $region41
  $region40: #{net_forward.2} parent=0 // pred_region
    _
  $region41: #{net_forward.2} parent=0 // pred_fallthru
    _
  %v36 = vld [vmem:[%s0] sm:$0xf]
  %v37 = vld [vmem:[%s0 + $0x4] sm:$0xf]
  %v38 = vld [vmem:[%s0 + $0x8] sm:$0xf]
  %v39 = vld [vmem:[%s0 + $0xc] sm:$0xf]
  %v40 = vld [vmem:[%s0 + $0x10] sm:$0xf]
  %v41 = vld [vmem:[%s0 + $0x14] sm:$0xf]
  %v42 = vld [vmem:[%s0 + $0x18] sm:$0xf]
  %v43 = vld [vmem:[%s0 + $0x1c] sm:$0xf]
  %v44 = vld [vmem:[%s0 + $0x20] sm:$0xf]
  %v45 = vld [vmem:[%s0 + $0x24] sm:$0xf]
  %v46 = vld [vmem:[%s0 + $0x28] sm:$0xf]
  %v47 = vld [vmem:[%s0 + $0x2c] sm:$0xf]
  %v48 = vld [vmem:[%s0 + $0x30] sm:$0xf]
  %v49 = vld [vmem:[%s0 + $0x34] sm:$0xf]
  %v50 = vld [vmem:[%s0 + $0x38] sm:$0xf]
  %v51 = vld [vmem:[%s0 + $0x3c] sm:$0xf]
  %v52 = vld [vmem:[%s0 + $0x40] sm:$0xf]
  %v53 = vld [vmem:[%s0 + $0x44] sm:$0xf]
  %v54 = vld [vmem:[%s0 + $0x48] sm:$0xf]
  %v55 = vld [vmem:[%s0 + $0x4c] sm:$0xf]
  %v56 = vld [vmem:[%s0 + $0x50] sm:$0xf]
  %v57 = vld [vmem:[%s0 + $0x54] sm:$0xf]
  %v58 = vld [vmem:[%s0 + $0x58] sm:$0xf]
  %v59 = vld [vmem:[%s0 + $0x5c] sm:$0xf]
  %v60 = vld [vmem:[%s0 + $0x60] sm:$0xf]
  %v61 = vld [vmem:[%s0 + $0x64] sm:$0xf]
  %v62 = vld [vmem:[%s0 + $0x68] sm:$0xf]
  %v63 = vld [vmem:[%s0 + $0x6c] sm:$0xf]
  %v64 = vld [vmem:[%s0 + $0x70] sm:$0xf]
  %v65 = vld [vmem:[%s0 + $0x74] sm:$0xf]
  %v66 = vld [vmem:[%s0 + $0x78] sm:$0xf]
  %v67 = vld [vmem:[%s0 + $0x7c] sm:$0xf]
  %v68 = vld [vmem:[%s1] sm:$0xf]
  %v69 = vld [vmem:[%s1 + $0x4] sm:$0x1]
  %v70 = vld [vmem:[%s2] sm:$0x1]
  %v72 = vlaneseq
  %v73 = vshrl.u32 %v72, 7
  %v74 = vsub.s32 0, %v73
  %v75 = vrot.slane %v70, %v74
  %v109 = vunpack.c.l.b16 %v36
  %v110 = vunpack.c.l.b16 %v37
  %v111 = vunpack.c.l.b16 %v38
  %v112 = vunpack.c.l.b16 %v39
  %v113 = vunpack.c.l.b16 %v40
  %v114 = vunpack.c.l.b16 %v41
  %v115 = vunpack.c.l.b16 %v42
  %v116 = vunpack.c.l.b16 %v43
  %v117 = vunpack.c.l.b16 %v44
  %v118 = vunpack.c.l.b16 %v45
  %v119 = vunpack.c.l.b16 %v46
  %v120 = vunpack.c.l.b16 %v47
  %v121 = vunpack.c.l.b16 %v48
  %v122 = vunpack.c.l.b16 %v49
  %v123 = vunpack.c.l.b16 %v50
  %v124 = vunpack.c.l.b16 %v51
  %v125 = vunpack.c.l.b16 %v52
  %v126 = vunpack.c.l.b16 %v53
  %v127 = vunpack.c.l.b16 %v54
  %v128 = vunpack.c.l.b16 %v55
  %v129 = vunpack.c.l.b16 %v56
  %v130 = vunpack.c.l.b16 %v57
  %v131 = vunpack.c.l.b16 %v58
  %v132 = vunpack.c.l.b16 %v59
  %v133 = vunpack.c.l.b16 %v60
  %v134 = vunpack.c.l.b16 %v61
  %v135 = vunpack.c.l.b16 %v62
  %v136 = vunpack.c.l.b16 %v63
  %v137 = vunpack.c.l.b16 %v64
  %v138 = vunpack.c.l.b16 %v65
  %v139 = vunpack.c.l.b16 %v66
  %v140 = vunpack.c.l.b16 %v67
  %v141 = vpack.c.b16 %v110, %v109
  %v142 = vpack.c.b16 %v112, %v111
  %v143 = vpack.c.b16 %v114, %v113
  %v144 = vpack.c.b16 %v116, %v115
  %v145 = vpack.c.b16 %v118, %v117
  %v146 = vpack.c.b16 %v120, %v119
  %v147 = vpack.c.b16 %v122, %v121
  %v148 = vpack.c.b16 %v124, %v123
  %v149 = vpack.c.b16 %v126, %v125
  %v150 = vpack.c.b16 %v128, %v127
  %v151 = vpack.c.b16 %v130, %v129
  %v152 = vpack.c.b16 %v132, %v131
  %v153 = vpack.c.b16 %v134, %v133
  %v154 = vpack.c.b16 %v136, %v135
  %v155 = vpack.c.b16 %v138, %v137
  %v156 = vpack.c.b16 %v140, %v139
  %v159 = vunpack.c.l.b16 %v68
  %v160 = vunpack.c.l.b16 %v69
  %v161 = vpack.c.b16 %v160, %v159
  %vm162 = vcmask 80896
  %v164 = vsel %vm162, %v141, 0
  %v167 = vsel %vm162, %v142, 0
  %v170 = vsel %vm162, %v143, 0
  %v173 = vsel %vm162, %v144, 0
  %v176 = vsel %vm162, %v145, 0
  %v179 = vsel %vm162, %v146, 0
  %v182 = vsel %vm162, %v147, 0
  %v185 = vsel %vm162, %v148, 0
  %v188 = vsel %vm162, %v149, 0
  %v191 = vsel %vm162, %v150, 0
  %v194 = vsel %vm162, %v151, 0
  %v197 = vsel %vm162, %v152, 0
  %v200 = vsel %vm162, %v153, 0
  %v203 = vsel %vm162, %v154, 0
  %v206 = vsel %vm162, %v155, 0
  %v209 = vsel %vm162, %v156, 0
  %vm211 = vcmask 1044480
  %v213 = vsel %vm211, %v161, 0
  %215 = vmatprep.subr.bf16.mxu0 0
  %216 = vmatpush1.bf16.msra.mxu0 %v213
  %217 = vmatprep.subr.bf16.mxu0 0
  %218 = vmatpush1.bf16.msra.mxu0 0
  %219 = vmatprep.subr.bf16.mxu0 0
  %220 = vmatpush1.bf16.msra.mxu0 0
  %221 = vmatprep.subr.bf16.mxu0 0
  %222 = vmatpush1.bf16.msra.mxu0 0
  %223 = vmatprep.subr.bf16.mxu0 0
  %224 = vmatpush1.bf16.msra.mxu0 0
  %225 = vmatprep.subr.bf16.mxu0 0
  %226 = vmatpush1.bf16.msra.mxu0 0
  %227 = vmatprep.subr.bf16.mxu0 0
  %228 = vmatpush1.bf16.msra.mxu0 0
  %229 = vmatprep.subr.bf16.mxu0 0
  %230 = vmatpush1.bf16.msra.mxu0 0
  %231 = vmatprep.subr.bf16.mxu0 0
  %232 = vmatpush1.bf16.msra.mxu0 0
  %233 = vmatprep.subr.bf16.mxu0 0
  %234 = vmatpush1.bf16.msra.mxu0 0
  %235 = vmatprep.subr.bf16.mxu0 0
  %236 = vmatpush1.bf16.msra.mxu0 0
  %237 = vmatprep.subr.bf16.mxu0 0
  %238 = vmatpush1.bf16.msra.mxu0 0
  %239 = vmatprep.subr.bf16.mxu0 0
  %240 = vmatpush1.bf16.msra.mxu0 0
  %241 = vmatprep.subr.bf16.mxu0 0
  %242 = vmatpush1.bf16.msra.mxu0 0
  %243 = vmatprep.subr.bf16.mxu0 0
  %244 = vmatpush1.bf16.msra.mxu0 0
  %245 = vmatprep.subr.bf16.mxu0 0
  %246 = vmatpush1.bf16.msra.mxu0 0
  %247 = vmatprep.mubr.bf16.mxu0 0
  %248 = vmatmul.mubr.bf16.gmra.mrb[0].mxu0 %v164
  %v249 = vpop.f32.mrb[0].mxu0
  %v250 = vadd.f32 %v75, %v249
  %v251 = vpop.f32.mrb[0].mxu0
  %v252 = vpop.f32.mrb[0].mxu0
  %v253 = vadd.f32 %v75, %v252
  %v254 = vpop.f32.mrb[0].mxu0
  %255 = vmatprep.mubr.bf16.mxu0 0
  %256 = vmatmul.mubr.bf16.gmra.mrb[0].mxu0 %v167
  %v257 = vpop.f32.mrb[0].mxu0
  %v258 = vadd.f32 %v75, %v257
  %v259 = vpop.f32.mrb[0].mxu0
  %v260 = vpop.f32.mrb[0].mxu0
  %v261 = vadd.f32 %v75, %v260
  %v262 = vpop.f32.mrb[0].mxu0
  %263 = vmatprep.mubr.bf16.mxu0 0
  %264 = vmatmul.mubr.bf16.gmra.mrb[0].mxu0 %v170
  %v265 = vpop.f32.mrb[0].mxu0
  %v266 = vadd.f32 %v75, %v265
  %v267 = vpop.f32.mrb[0].mxu0
  %v268 = vpop.f32.mrb[0].mxu0
  %v269 = vadd.f32 %v75, %v268
  %v270 = vpop.f32.mrb[0].mxu0
  %271 = vmatprep.mubr.bf16.mxu0 0
  %272 = vmatmul.mubr.bf16.gmra.mrb[0].mxu0 %v173
  %v273 = vpop.f32.mrb[0].mxu0
  %v274 = vadd.f32 %v75, %v273
  %v275 = vpop.f32.mrb[0].mxu0
  %v276 = vpop.f32.mrb[0].mxu0
  %v277 = vadd.f32 %v75, %v276
  %v278 = vpop.f32.mrb[0].mxu0
  %279 = vmatprep.mubr.bf16.mxu0 0
  %280 = vmatmul.mubr.bf16.gmra.mrb[0].mxu0 %v176
  %v281 = vpop.f32.mrb[0].mxu0
  %v282 = vadd.f32 %v75, %v281
  %v283 = vpop.f32.mrb[0].mxu0
  %v284 = vpop.f32.mrb[0].mxu0
  %v285 = vadd.f32 %v75, %v284
  %v286 = vpop.f32.mrb[0].mxu0
  %287 = vmatprep.mubr.bf16.mxu0 0
  %288 = vmatmul.mubr.bf16.gmra.mrb[0].mxu0 %v179
  %v289 = vpop.f32.mrb[0].mxu0
  %v290 = vadd.f32 %v75, %v289
  %v291 = vpop.f32.mrb[0].mxu0
  %v292 = vpop.f32.mrb[0].mxu0
  %v293 = vadd.f32 %v75, %v292
  %v294 = vpop.f32.mrb[0].mxu0
  %295 = vmatprep.mubr.bf16.mxu0 0
  %296 = vmatmul.mubr.bf16.gmra.mrb[0].mxu0 %v182
  %v297 = vpop.f32.mrb[0].mxu0
  %v298 = vadd.f32 %v75, %v297
  %v299 = vpop.f32.mrb[0].mxu0
  %v300 = vpop.f32.mrb[0].mxu0
  %v301 = vadd.f32 %v75, %v300
  %v302 = vpop.f32.mrb[0].mxu0
  %303 = vmatprep.mubr.bf16.mxu0 0
  %304 = vmatmul.mubr.bf16.gmra.mrb[0].mxu0 %v185
  %v305 = vpop.f32.mrb[0].mxu0
  %v306 = vadd.f32 %v75, %v305
  %v307 = vpop.f32.mrb[0].mxu0
  %v308 = vpop.f32.mrb[0].mxu0
  %v309 = vadd.f32 %v75, %v308
  %v310 = vpop.f32.mrb[0].mxu0
  %311 = vmatprep.mubr.bf16.mxu0 0
  %312 = vmatmul.mubr.bf16.gmra.mrb[0].mxu0 %v188
  %v313 = vpop.f32.mrb[0].mxu0
  %v314 = vadd.f32 %v75, %v313
  %v315 = vpop.f32.mrb[0].mxu0
  %v316 = vpop.f32.mrb[0].mxu0
  %v317 = vadd.f32 %v75, %v316
  %v318 = vpop.f32.mrb[0].mxu0
  %319 = vmatprep.mubr.bf16.mxu0 0
  %320 = vmatmul.mubr.bf16.gmra.mrb[0].mxu0 %v191
  %v321 = vpop.f32.mrb[0].mxu0
  %v322 = vadd.f32 %v75, %v321
  %v323 = vpop.f32.mrb[0].mxu0
  %v324 = vpop.f32.mrb[0].mxu0
  %v325 = vadd.f32 %v75, %v324
  %v326 = vpop.f32.mrb[0].mxu0
  %327 = vmatprep.mubr.bf16.mxu0 0
  %328 = vmatmul.mubr.bf16.gmra.mrb[0].mxu0 %v194
  %v329 = vpop.f32.mrb[0].mxu0
  %v330 = vadd.f32 %v75, %v329
  %v331 = vpop.f32.mrb[0].mxu0
  %v332 = vpop.f32.mrb[0].mxu0
  %v333 = vadd.f32 %v75, %v332
  %v334 = vpop.f32.mrb[0].mxu0
  %335 = vmatprep.mubr.bf16.mxu0 0
  %336 = vmatmul.mubr.bf16.gmra.mrb[0].mxu0 %v197
  %v337 = vpop.f32.mrb[0].mxu0
  %v338 = vadd.f32 %v75, %v337
  %v339 = vpop.f32.mrb[0].mxu0
  %v340 = vpop.f32.mrb[0].mxu0
  %v341 = vadd.f32 %v75, %v340
  %v342 = vpop.f32.mrb[0].mxu0
  %343 = vmatprep.mubr.bf16.mxu0 0
  %344 = vmatmul.mubr.bf16.gmra.mrb[0].mxu0 %v200
  %v345 = vpop.f32.mrb[0].mxu0
  %v346 = vadd.f32 %v75, %v345
  %v347 = vpop.f32.mrb[0].mxu0
  %v348 = vpop.f32.mrb[0].mxu0
  %v349 = vadd.f32 %v75, %v348
  %v350 = vpop.f32.mrb[0].mxu0
  %351 = vmatprep.mubr.bf16.mxu0 0
  %352 = vmatmul.mubr.bf16.gmra.mrb[0].mxu0 %v203
  %v353 = vpop.f32.mrb[0].mxu0
  %v354 = vadd.f32 %v75, %v353
  %v355 = vpop.f32.mrb[0].mxu0
  %v356 = vpop.f32.mrb[0].mxu0
  %v357 = vadd.f32 %v75, %v356
  %v358 = vpop.f32.mrb[0].mxu0
  %359 = vmatprep.mubr.bf16.mxu0 0
  %360 = vmatmul.mubr.bf16.gmra.mrb[0].mxu0 %v206
  %v361 = vpop.f32.mrb[0].mxu0
  %v362 = vadd.f32 %v75, %v361
  %v363 = vpop.f32.mrb[0].mxu0
  %v364 = vpop.f32.mrb[0].mxu0
  %v365 = vadd.f32 %v75, %v364
  %v366 = vpop.f32.mrb[0].mxu0
  %367 = vmatprep.mubr.bf16.mxu0 0
  %368 = vmatmul.mubr.bf16.gmra.mrb[0].mxu0 %v209
  %v369 = vpop.f32.mrb[0].mxu0
  %v370 = vadd.f32 %v75, %v369
  %v371 = vpop.f32.mrb[0].mxu0
  %v372 = vpop.f32.mrb[0].mxu0
  %v373 = vadd.f32 %v75, %v372
  %v374 = vpop.f32.mrb[0].mxu0
  %375 = vdwg.mxu0
  %v376 = vmax.f32 %v250, 0.0
  %v377 = vmax.f32 %v253, 0.0
  %v378 = vmax.f32 %v258, 0.0
  %v379 = vmax.f32 %v261, 0.0
  %v380 = vmax.f32 %v266, 0.0
  %v381 = vmax.f32 %v269, 0.0
  %v382 = vmax.f32 %v274, 0.0
  %v383 = vmax.f32 %v277, 0.0
  %v384 = vmax.f32 %v282, 0.0
  %v385 = vmax.f32 %v285, 0.0
  %v386 = vmax.f32 %v290, 0.0
  %v387 = vmax.f32 %v293, 0.0
  %v388 = vmax.f32 %v298, 0.0
  %v389 = vmax.f32 %v301, 0.0
  %v390 = vmax.f32 %v306, 0.0
  %v391 = vmax.f32 %v309, 0.0
  %v392 = vmax.f32 %v314, 0.0
  %v393 = vmax.f32 %v317, 0.0
  %v394 = vmax.f32 %v322, 0.0
  %v395 = vmax.f32 %v325, 0.0
  %v396 = vmax.f32 %v330, 0.0
  %v397 = vmax.f32 %v333, 0.0
  %v398 = vmax.f32 %v338, 0.0
  %v399 = vmax.f32 %v341, 0.0
  %v400 = vmax.f32 %v346, 0.0
  %v401 = vmax.f32 %v349, 0.0
  %v402 = vmax.f32 %v354, 0.0
  %v403 = vmax.f32 %v357, 0.0
  %v404 = vmax.f32 %v362, 0.0
  %v405 = vmax.f32 %v365, 0.0
  %v406 = vmax.f32 %v370, 0.0
  %v407 = vmax.f32 %v373, 0.0
  %v408 = vpack.c.bf16 %v377, %v376
  %v409 = vpack.c.bf16 %v379, %v378
  %v410 = vpack.c.bf16 %v381, %v380
  %v411 = vpack.c.bf16 %v383, %v382
  %v412 = vpack.c.bf16 %v385, %v384
  %v413 = vpack.c.bf16 %v387, %v386
  %v414 = vpack.c.bf16 %v389, %v388
  %v415 = vpack.c.bf16 %v391, %v390
  %v416 = vpack.c.bf16 %v393, %v392
  %v417 = vpack.c.bf16 %v395, %v394
  %v418 = vpack.c.bf16 %v397, %v396
  %v419 = vpack.c.bf16 %v399, %v398
  %v420 = vpack.c.bf16 %v401, %v400
  %v421 = vpack.c.bf16 %v403, %v402
  %v422 = vpack.c.bf16 %v405, %v404
  %v423 = vpack.c.bf16 %v407, %v406
  %v424 = vld [vmem:[%s3] sm:$0xf]
  %v425 = vld [vmem:[%s3 + $0x4] sm:$0xf]
  %v426 = vld [vmem:[%s3 + $0x8] sm:$0xf]
  %v427 = vld [vmem:[%s3 + $0xc] sm:$0xf]
  %v428 = vld [vmem:[%s3 + $0x10] sm:$0xf]
  %v429 = vld [vmem:[%s3 + $0x14] sm:$0xf]
  %v430 = vld [vmem:[%s3 + $0x18] sm:$0xf]
  %v431 = vld [vmem:[%s3 + $0x1c] sm:$0xf]
  %v432 = vld [vmem:[%s4] sm:$0x1]
  %v434 = vlaneseq
  %v435 = vshrl.u32 %v434, 7
  %v436 = vsub.s32 0, %v435
  %v437 = vrot.slane %v432, %v436
  %v447 = vunpack.c.l.b16 %v424
  %v448 = vunpack.c.l.b16 %v425
  %v449 = vunpack.c.l.b16 %v426
  %v450 = vunpack.c.l.b16 %v427
  %v451 = vunpack.c.l.b16 %v428
  %v452 = vunpack.c.l.b16 %v429
  %v453 = vunpack.c.l.b16 %v430
  %v454 = vunpack.c.l.b16 %v431
  %v455 = vpack.c.b16 %v448, %v447
  %v456 = vpack.c.b16 %v450, %v449
  %v457 = vpack.c.b16 %v452, %v451
  %v458 = vpack.c.b16 %v454, %v453
  %vm463 = vcmask 523264
  %v465 = vsel %vm463, %v408, 0
  %v468 = vsel %vm463, %v409, 0
  %v471 = vsel %vm463, %v410, 0
  %v474 = vsel %vm463, %v411, 0
  %v477 = vsel %vm463, %v412, 0
  %v480 = vsel %vm463, %v413, 0
  %v483 = vsel %vm463, %v414, 0
  %v486 = vsel %vm463, %v415, 0
  %v489 = vsel %vm463, %v416, 0
  %v492 = vsel %vm463, %v417, 0
  %v495 = vsel %vm463, %v418, 0
  %v498 = vsel %vm463, %v419, 0
  %v501 = vsel %vm463, %v420, 0
  %v504 = vsel %vm463, %v421, 0
  %v507 = vsel %vm463, %v422, 0
  %v510 = vsel %vm463, %v423, 0
  %512 = vmatprep.subr.bf16.mxu0 0
  %513 = vmatpush1.bf16.msra.mxu0 %v455
  %514 = vmatprep.subr.bf16.mxu0 0
  %515 = vmatpush1.bf16.msra.mxu0 %v456
  %516 = vmatprep.subr.bf16.mxu0 0
  %517 = vmatpush1.bf16.msra.mxu0 %v457
  %518 = vmatprep.subr.bf16.mxu0 0
  %519 = vmatpush1.bf16.msra.mxu0 %v458
  %520 = vmatprep.subr.bf16.mxu0 0
  %521 = vmatpush1.bf16.msra.mxu0 0
  %522 = vmatprep.subr.bf16.mxu0 0
  %523 = vmatpush1.bf16.msra.mxu0 0
  %524 = vmatprep.subr.bf16.mxu0 0
  %525 = vmatpush1.bf16.msra.mxu0 0
  %526 = vmatprep.subr.bf16.mxu0 0
  %527 = vmatpush1.bf16.msra.mxu0 0
  %528 = vmatprep.subr.bf16.mxu0 0
  %529 = vmatpush1.bf16.msra.mxu0 0
  %530 = vmatprep.subr.bf16.mxu0 0
  %531 = vmatpush1.bf16.msra.mxu0 0
  %532 = vmatprep.subr.bf16.mxu0 0
  %533 = vmatpush1.bf16.msra.mxu0 0
  %534 = vmatprep.subr.bf16.mxu0 0
  %535 = vmatpush1.bf16.msra.mxu0 0
  %536 = vmatprep.subr.bf16.mxu0 0
  %537 = vmatpush1.bf16.msra.mxu0 0
  %538 = vmatprep.subr.bf16.mxu0 0
  %539 = vmatpush1.bf16.msra.mxu0 0
  %540 = vmatprep.subr.bf16.mxu0 0
  %541 = vmatpush1.bf16.msra.mxu0 0
  %542 = vmatprep.subr.bf16.mxu0 0
  %543 = vmatpush1.bf16.msra.mxu0 0
  %544 = vmatprep.mubr.bf16.mxu0 0
  %545 = vmatmul.mubr.bf16.gmra.mrb[0].mxu0 %v465
  %v546 = vpop.f32.mrb[0].mxu0
  %v547 = vadd.f32 %v437, %v546
  %v548 = vpop.f32.mrb[0].mxu0
  %v549 = vpop.f32.mrb[0].mxu0
  %v550 = vadd.f32 %v437, %v549
  %v551 = vpop.f32.mrb[0].mxu0
  %552 = vmatprep.mubr.bf16.mxu0 0
  %553 = vmatmul.mubr.bf16.gmra.mrb[0].mxu0 %v468
  %v554 = vpop.f32.mrb[0].mxu0
  %v555 = vadd.f32 %v437, %v554
  %v556 = vpop.f32.mrb[0].mxu0
  %v557 = vpop.f32.mrb[0].mxu0
  %v558 = vadd.f32 %v437, %v557
  %v559 = vpop.f32.mrb[0].mxu0
  %560 = vmatprep.mubr.bf16.mxu0 0
  %561 = vmatmul.mubr.bf16.gmra.mrb[0].mxu0 %v471
  %v562 = vpop.f32.mrb[0].mxu0
  %v563 = vadd.f32 %v437, %v562
  %v564 = vpop.f32.mrb[0].mxu0
  %v565 = vpop.f32.mrb[0].mxu0
  %v566 = vadd.f32 %v437, %v565
  %v567 = vpop.f32.mrb[0].mxu0
  %568 = vmatprep.mubr.bf16.mxu0 0
  %569 = vmatmul.mubr.bf16.gmra.mrb[0].mxu0 %v474
  %v570 = vpop.f32.mrb[0].mxu0
  %v571 = vadd.f32 %v437, %v570
  %v572 = vpop.f32.mrb[0].mxu0
  %v573 = vpop.f32.mrb[0].mxu0
  %v574 = vadd.f32 %v437, %v573
  %v575 = vpop.f32.mrb[0].mxu0
  %576 = vmatprep.mubr.bf16.mxu0 0
  %577 = vmatmul.mubr.bf16.gmra.mrb[0].mxu0 %v477
  %v578 = vpop.f32.mrb[0].mxu0
  %v579 = vadd.f32 %v437, %v578
  %v580 = vpop.f32.mrb[0].mxu0
  %v581 = vpop.f32.mrb[0].mxu0
  %v582 = vadd.f32 %v437, %v581
  %v583 = vpop.f32.mrb[0].mxu0
  %584 = vmatprep.mubr.bf16.mxu0 0
  %585 = vmatmul.mubr.bf16.gmra.mrb[0].mxu0 %v480
  %v586 = vpop.f32.mrb[0].mxu0
  %v587 = vadd.f32 %v437, %v586
  %v588 = vpop.f32.mrb[0].mxu0
  %v589 = vpop.f32.mrb[0].mxu0
  %v590 = vadd.f32 %v437, %v589
  %v591 = vpop.f32.mrb[0].mxu0
  %592 = vmatprep.mubr.bf16.mxu0 0
  %593 = vmatmul.mubr.bf16.gmra.mrb[0].mxu0 %v483
  %v594 = vpop.f32.mrb[0].mxu0
  %v595 = vadd.f32 %v437, %v594
  %v596 = vpop.f32.mrb[0].mxu0
  %v597 = vpop.f32.mrb[0].mxu0
  %v598 = vadd.f32 %v437, %v597
  %v599 = vpop.f32.mrb[0].mxu0
  %600 = vmatprep.mubr.bf16.mxu0 0
  %601 = vmatmul.mubr.bf16.gmra.mrb[0].mxu0 %v486
  %v602 = vpop.f32.mrb[0].mxu0
  %v603 = vadd.f32 %v437, %v602
  %v604 = vpop.f32.mrb[0].mxu0
  %v605 = vpop.f32.mrb[0].mxu0
  %v606 = vadd.f32 %v437, %v605
  %v607 = vpop.f32.mrb[0].mxu0
  %608 = vmatprep.mubr.bf16.mxu0 0
  %609 = vmatmul.mubr.bf16.gmra.mrb[0].mxu0 %v489
  %v610 = vpop.f32.mrb[0].mxu0
  %v611 = vadd.f32 %v437, %v610
  %v612 = vpop.f32.mrb[0].mxu0
  %v613 = vpop.f32.mrb[0].mxu0
  %v614 = vadd.f32 %v437, %v613
  %v615 = vpop.f32.mrb[0].mxu0
  %616 = vmatprep.mubr.bf16.mxu0 0
  %617 = vmatmul.mubr.bf16.gmra.mrb[0].mxu0 %v492
  %v618 = vpop.f32.mrb[0].mxu0
  %v619 = vadd.f32 %v437, %v618
  %v620 = vpop.f32.mrb[0].mxu0
  %v621 = vpop.f32.mrb[0].mxu0
  %v622 = vadd.f32 %v437, %v621
  %v623 = vpop.f32.mrb[0].mxu0
  %624 = vmatprep.mubr.bf16.mxu0 0
  %625 = vmatmul.mubr.bf16.gmra.mrb[0].mxu0 %v495
  %v626 = vpop.f32.mrb[0].mxu0
  %v627 = vadd.f32 %v437, %v626
  %v628 = vpop.f32.mrb[0].mxu0
  %v629 = vpop.f32.mrb[0].mxu0
  %v630 = vadd.f32 %v437, %v629
  %v631 = vpop.f32.mrb[0].mxu0
  %632 = vmatprep.mubr.bf16.mxu0 0
  %633 = vmatmul.mubr.bf16.gmra.mrb[0].mxu0 %v498
  %v634 = vpop.f32.mrb[0].mxu0
  %v635 = vadd.f32 %v437, %v634
  %v636 = vpop.f32.mrb[0].mxu0
  %v637 = vpop.f32.mrb[0].mxu0
  %v638 = vadd.f32 %v437, %v637
  %v639 = vpop.f32.mrb[0].mxu0
  %640 = vmatprep.mubr.bf16.mxu0 0
  %641 = vmatmul.mubr.bf16.gmra.mrb[0].mxu0 %v501
  %v642 = vpop.f32.mrb[0].mxu0
  %v643 = vadd.f32 %v437, %v642
  %v644 = vpop.f32.mrb[0].mxu0
  %v645 = vpop.f32.mrb[0].mxu0
  %v646 = vadd.f32 %v437, %v645
  %v647 = vpop.f32.mrb[0].mxu0
  %648 = vmatprep.mubr.bf16.mxu0 0
  %649 = vmatmul.mubr.bf16.gmra.mrb[0].mxu0 %v504
  %v650 = vpop.f32.mrb[0].mxu0
  %v651 = vadd.f32 %v437, %v650
  %v652 = vpop.f32.mrb[0].mxu0
  %v653 = vpop.f32.mrb[0].mxu0
  %v654 = vadd.f32 %v437, %v653
  %v655 = vpop.f32.mrb[0].mxu0
  %656 = vmatprep.mubr.bf16.mxu0 0
  %657 = vmatmul.mubr.bf16.gmra.mrb[0].mxu0 %v507
  %v658 = vpop.f32.mrb[0].mxu0
  %v659 = vadd.f32 %v437, %v658
  %v660 = vpop.f32.mrb[0].mxu0
  %v661 = vpop.f32.mrb[0].mxu0
  %v662 = vadd.f32 %v437, %v661
  %v663 = vpop.f32.mrb[0].mxu0
  %664 = vmatprep.mubr.bf16.mxu0 0
  %665 = vmatmul.mubr.bf16.gmra.mrb[0].mxu0 %v510
  %v666 = vpop.f32.mrb[0].mxu0
  %v667 = vadd.f32 %v437, %v666
  %v668 = vpop.f32.mrb[0].mxu0
  %v669 = vpop.f32.mrb[0].mxu0
  %v670 = vadd.f32 %v437, %v669
  %v671 = vpop.f32.mrb[0].mxu0
  %672 = vdwg.mxu0
  %v673 = vmax.f32 %v547, 0.0
  %v674 = vmax.f32 %v550, 0.0
  %v675 = vmax.f32 %v555, 0.0
  %v676 = vmax.f32 %v558, 0.0
  %v677 = vmax.f32 %v563, 0.0
  %v678 = vmax.f32 %v566, 0.0
  %v679 = vmax.f32 %v571, 0.0
  %v680 = vmax.f32 %v574, 0.0
  %v681 = vmax.f32 %v579, 0.0
  %v682 = vmax.f32 %v582, 0.0
  %v683 = vmax.f32 %v587, 0.0
  %v684 = vmax.f32 %v590, 0.0
  %v685 = vmax.f32 %v595, 0.0
  %v686 = vmax.f32 %v598, 0.0
  %v687 = vmax.f32 %v603, 0.0
  %v688 = vmax.f32 %v606, 0.0
  %v689 = vmax.f32 %v611, 0.0
  %v690 = vmax.f32 %v614, 0.0
  %v691 = vmax.f32 %v619, 0.0
  %v692 = vmax.f32 %v622, 0.0
  %v693 = vmax.f32 %v627, 0.0
  %v694 = vmax.f32 %v630, 0.0
  %v695 = vmax.f32 %v635, 0.0
  %v696 = vmax.f32 %v638, 0.0
  %v697 = vmax.f32 %v643, 0.0
  %v698 = vmax.f32 %v646, 0.0
  %v699 = vmax.f32 %v651, 0.0
  %v700 = vmax.f32 %v654, 0.0
  %v701 = vmax.f32 %v659, 0.0
  %v702 = vmax.f32 %v662, 0.0
  %v703 = vmax.f32 %v667, 0.0
  %v704 = vmax.f32 %v670, 0.0
  %v737 = vcombine.high %v673, %v673
  %v738 = vcombine.high %v674, %v674
  %v739 = vcombine.high %v675, %v675
  %v740 = vcombine.high %v676, %v676
  %v741 = vcombine.high %v677, %v677
  %v742 = vcombine.high %v678, %v678
  %v743 = vcombine.high %v679, %v679
  %v744 = vcombine.high %v680, %v680
  %v745 = vcombine.high %v681, %v681
  %v746 = vcombine.high %v682, %v682
  %v747 = vcombine.high %v683, %v683
  %v748 = vcombine.high %v684, %v684
  %v749 = vcombine.high %v685, %v685
  %v750 = vcombine.high %v686, %v686
  %v751 = vcombine.high %v687, %v687
  %v752 = vcombine.high %v688, %v688
  %v753 = vcombine.high %v689, %v689
  %v754 = vcombine.high %v690, %v690
  %v755 = vcombine.high %v691, %v691
  %v756 = vcombine.high %v692, %v692
  %v757 = vcombine.high %v693, %v693
  %v758 = vcombine.high %v694, %v694
  %v759 = vcombine.high %v695, %v695
  %v760 = vcombine.high %v696, %v696
  %v761 = vcombine.high %v697, %v697
  %v762 = vcombine.high %v698, %v698
  %v763 = vcombine.high %v699, %v699
  %v764 = vcombine.high %v700, %v700
  %v765 = vcombine.high %v701, %v701
  %v766 = vcombine.high %v702, %v702
  %v767 = vcombine.high %v703, %v703
  %v768 = vcombine.high %v704, %v704
  %vm801 = vcmask 1043456
  %v802 = vsel %vm801, %v673, -inf
  %v803 = vrot.slane %v802, 4
  %v804 = vmax.f32 %v802, %v803
  %v805 = vrot.slane %v804, 2
  %v806 = vmax.f32 %v804, %v805
  %v807 = vrot.slane %v806, 1
  %v808 = vmax.f32 %v806, %v807
  %v809 = vsel %vm801, %v737, -inf
  %v810 = vrot.slane %v809, 4
  %v811 = vmax.f32 %v809, %v810
  %v812 = vrot.slane %v811, 2
  %v813 = vmax.f32 %v811, %v812
  %v814 = vrot.slane %v813, 1
  %v815 = vmax.f32 %v813, %v814
  %v816 = vsel %vm801, %v674, -inf
  %v817 = vrot.slane %v816, 4
  %v818 = vmax.f32 %v816, %v817
  %v819 = vrot.slane %v818, 2
  %v820 = vmax.f32 %v818, %v819
  %v821 = vrot.slane %v820, 1
  %v822 = vmax.f32 %v820, %v821
  %v823 = vsel %vm801, %v738, -inf
  %v824 = vrot.slane %v823, 4
  %v825 = vmax.f32 %v823, %v824
  %v826 = vrot.slane %v825, 2
  %v827 = vmax.f32 %v825, %v826
  %v828 = vrot.slane %v827, 1
  %v829 = vmax.f32 %v827, %v828
  %v830 = vsel %vm801, %v675, -inf
  %v831 = vrot.slane %v830, 4
  %v832 = vmax.f32 %v830, %v831
  %v833 = vrot.slane %v832, 2
  %v834 = vmax.f32 %v832, %v833
  %v835 = vrot.slane %v834, 1
  %v836 = vmax.f32 %v834, %v835
  %v837 = vsel %vm801, %v739, -inf
  %v838 = vrot.slane %v837, 4
  %v839 = vmax.f32 %v837, %v838
  %v840 = vrot.slane %v839, 2
  %v841 = vmax.f32 %v839, %v840
  %v842 = vrot.slane %v841, 1
  %v843 = vmax.f32 %v841, %v842
  %v844 = vsel %vm801, %v676, -inf
  %v845 = vrot.slane %v844, 4
  %v846 = vmax.f32 %v844, %v845
  %v847 = vrot.slane %v846, 2
  %v848 = vmax.f32 %v846, %v847
  %v849 = vrot.slane %v848, 1
  %v850 = vmax.f32 %v848, %v849
  %v851 = vsel %vm801, %v740, -inf
  %v852 = vrot.slane %v851, 4
  %v853 = vmax.f32 %v851, %v852
  %v854 = vrot.slane %v853, 2
  %v855 = vmax.f32 %v853, %v854
  %v856 = vrot.slane %v855, 1
  %v857 = vmax.f32 %v855, %v856
  %v858 = vsel %vm801, %v677, -inf
  %v859 = vrot.slane %v858, 4
  %v860 = vmax.f32 %v858, %v859
  %v861 = vrot.slane %v860, 2
  %v862 = vmax.f32 %v860, %v861
  %v863 = vrot.slane %v862, 1
  %v864 = vmax.f32 %v862, %v863
  %v865 = vsel %vm801, %v741, -inf
  %v866 = vrot.slane %v865, 4
  %v867 = vmax.f32 %v865, %v866
  %v868 = vrot.slane %v867, 2
  %v869 = vmax.f32 %v867, %v868
  %v870 = vrot.slane %v869, 1
  %v871 = vmax.f32 %v869, %v870
  %v872 = vsel %vm801, %v678, -inf
  %v873 = vrot.slane %v872, 4
  %v874 = vmax.f32 %v872, %v873
  %v875 = vrot.slane %v874, 2
  %v876 = vmax.f32 %v874, %v875
  %v877 = vrot.slane %v876, 1
  %v878 = vmax.f32 %v876, %v877
  %v879 = vsel %vm801, %v742, -inf
  %v880 = vrot.slane %v879, 4
  %v881 = vmax.f32 %v879, %v880
  %v882 = vrot.slane %v881, 2
  %v883 = vmax.f32 %v881, %v882
  %v884 = vrot.slane %v883, 1
  %v885 = vmax.f32 %v883, %v884
  %v886 = vsel %vm801, %v679, -inf
  %v887 = vrot.slane %v886, 4
  %v888 = vmax.f32 %v886, %v887
  %v889 = vrot.slane %v888, 2
  %v890 = vmax.f32 %v888, %v889
  %v891 = vrot.slane %v890, 1
  %v892 = vmax.f32 %v890, %v891
  %v893 = vsel %vm801, %v743, -inf
  %v894 = vrot.slane %v893, 4
  %v895 = vmax.f32 %v893, %v894
  %v896 = vrot.slane %v895, 2
  %v897 = vmax.f32 %v895, %v896
  %v898 = vrot.slane %v897, 1
  %v899 = vmax.f32 %v897, %v898
  %v900 = vsel %vm801, %v680, -inf
  %v901 = vrot.slane %v900, 4
  %v902 = vmax.f32 %v900, %v901
  %v903 = vrot.slane %v902, 2
  %v904 = vmax.f32 %v902, %v903
  %v905 = vrot.slane %v904, 1
  %v906 = vmax.f32 %v904, %v905
  %v907 = vsel %vm801, %v744, -inf
  %v908 = vrot.slane %v907, 4
  %v909 = vmax.f32 %v907, %v908
  %v910 = vrot.slane %v909, 2
  %v911 = vmax.f32 %v909, %v910
  %v912 = vrot.slane %v911, 1
  %v913 = vmax.f32 %v911, %v912
  %v914 = vsel %vm801, %v681, -inf
  %v915 = vrot.slane %v914, 4
  %v916 = vmax.f32 %v914, %v915
  %v917 = vrot.slane %v916, 2
  %v918 = vmax.f32 %v916, %v917
  %v919 = vrot.slane %v918, 1
  %v920 = vmax.f32 %v918, %v919
  %v921 = vsel %vm801, %v745, -inf
  %v922 = vrot.slane %v921, 4
  %v923 = vmax.f32 %v921, %v922
  %v924 = vrot.slane %v923, 2
  %v925 = vmax.f32 %v923, %v924
  %v926 = vrot.slane %v925, 1
  %v927 = vmax.f32 %v925, %v926
  %v928 = vsel %vm801, %v682, -inf
  %v929 = vrot.slane %v928, 4
  %v930 = vmax.f32 %v928, %v929
  %v931 = vrot.slane %v930, 2
  %v932 = vmax.f32 %v930, %v931
  %v933 = vrot.slane %v932, 1
  %v934 = vmax.f32 %v932, %v933
  %v935 = vsel %vm801, %v746, -inf
  %v936 = vrot.slane %v935, 4
  %v937 = vmax.f32 %v935, %v936
  %v938 = vrot.slane %v937, 2
  %v939 = vmax.f32 %v937, %v938
  %v940 = vrot.slane %v939, 1
  %v941 = vmax.f32 %v939, %v940
  %v942 = vsel %vm801, %v683, -inf
  %v943 = vrot.slane %v942, 4
  %v944 = vmax.f32 %v942, %v943
  %v945 = vrot.slane %v944, 2
  %v946 = vmax.f32 %v944, %v945
  %v947 = vrot.slane %v946, 1
  %v948 = vmax.f32 %v946, %v947
  %v949 = vsel %vm801, %v747, -inf
  %v950 = vrot.slane %v949, 4
  %v951 = vmax.f32 %v949, %v950
  %v952 = vrot.slane %v951, 2
  %v953 = vmax.f32 %v951, %v952
  %v954 = vrot.slane %v953, 1
  %v955 = vmax.f32 %v953, %v954
  %v956 = vsel %vm801, %v684, -inf
  %v957 = vrot.slane %v956, 4
  %v958 = vmax.f32 %v956, %v957
  %v959 = vrot.slane %v958, 2
  %v960 = vmax.f32 %v958, %v959
  %v961 = vrot.slane %v960, 1
  %v962 = vmax.f32 %v960, %v961
  %v963 = vsel %vm801, %v748, -inf
  %v964 = vrot.slane %v963, 4
  %v965 = vmax.f32 %v963, %v964
  %v966 = vrot.slane %v965, 2
  %v967 = vmax.f32 %v965, %v966
  %v968 = vrot.slane %v967, 1
  %v969 = vmax.f32 %v967, %v968
  %v970 = vsel %vm801, %v685, -inf
  %v971 = vrot.slane %v970, 4
  %v972 = vmax.f32 %v970, %v971
  %v973 = vrot.slane %v972, 2
  %v974 = vmax.f32 %v972, %v973
  %v975 = vrot.slane %v974, 1
  %v976 = vmax.f32 %v974, %v975
  %v977 = vsel %vm801, %v749, -inf
  %v978 = vrot.slane %v977, 4
  %v979 = vmax.f32 %v977, %v978
  %v980 = vrot.slane %v979, 2
  %v981 = vmax.f32 %v979, %v980
  %v982 = vrot.slane %v981, 1
  %v983 = vmax.f32 %v981, %v982
  %v984 = vsel %vm801, %v686, -inf
  %v985 = vrot.slane %v984, 4
  %v986 = vmax.f32 %v984, %v985
  %v987 = vrot.slane %v986, 2
  %v988 = vmax.f32 %v986, %v987
  %v989 = vrot.slane %v988, 1
  %v990 = vmax.f32 %v988, %v989
  %v991 = vsel %vm801, %v750, -inf
  %v992 = vrot.slane %v991, 4
  %v993 = vmax.f32 %v991, %v992
  %v994 = vrot.slane %v993, 2
  %v995 = vmax.f32 %v993, %v994
  %v996 = vrot.slane %v995, 1
  %v997 = vmax.f32 %v995, %v996
  %v998 = vsel %vm801, %v687, -inf
  %v999 = vrot.slane %v998, 4
  %v1000 = vmax.f32 %v998, %v999
  %v1001 = vrot.slane %v1000, 2
  %v1002 = vmax.f32 %v1000, %v1001
  %v1003 = vrot.slane %v1002, 1
  %v1004 = vmax.f32 %v1002, %v1003
  %v1005 = vsel %vm801, %v751, -inf
  %v1006 = vrot.slane %v1005, 4
  %v1007 = vmax.f32 %v1005, %v1006
  %v1008 = vrot.slane %v1007, 2
  %v1009 = vmax.f32 %v1007, %v1008
  %v1010 = vrot.slane %v1009, 1
  %v1011 = vmax.f32 %v1009, %v1010
  %v1012 = vsel %vm801, %v688, -inf
  %v1013 = vrot.slane %v1012, 4
  %v1014 = vmax.f32 %v1012, %v1013
  %v1015 = vrot.slane %v1014, 2
  %v1016 = vmax.f32 %v1014, %v1015
  %v1017 = vrot.slane %v1016, 1
  %v1018 = vmax.f32 %v1016, %v1017
  %v1019 = vsel %vm801, %v752, -inf
  %v1020 = vrot.slane %v1019, 4
  %v1021 = vmax.f32 %v1019, %v1020
  %v1022 = vrot.slane %v1021, 2
  %v1023 = vmax.f32 %v1021, %v1022
  %v1024 = vrot.slane %v1023, 1
  %v1025 = vmax.f32 %v1023, %v1024
  %v1026 = vsel %vm801, %v689, -inf
  %v1027 = vrot.slane %v1026, 4
  %v1028 = vmax.f32 %v1026, %v1027
  %v1029 = vrot.slane %v1028, 2
  %v1030 = vmax.f32 %v1028, %v1029
  %v1031 = vrot.slane %v1030, 1
  %v1032 = vmax.f32 %v1030, %v1031
  %v1033 = vsel %vm801, %v753, -inf
  %v1034 = vrot.slane %v1033, 4
  %v1035 = vmax.f32 %v1033, %v1034
  %v1036 = vrot.slane %v1035, 2
  %v1037 = vmax.f32 %v1035, %v1036
  %v1038 = vrot.slane %v1037, 1
  %v1039 = vmax.f32 %v1037, %v1038
  %v1040 = vsel %vm801, %v690, -inf
  %v1041 = vrot.slane %v1040, 4
  %v1042 = vmax.f32 %v1040, %v1041
  %v1043 = vrot.slane %v1042, 2
  %v1044 = vmax.f32 %v1042, %v1043
  %v1045 = vrot.slane %v1044, 1
  %v1046 = vmax.f32 %v1044, %v1045
  %v1047 = vsel %vm801, %v754, -inf
  %v1048 = vrot.slane %v1047, 4
  %v1049 = vmax.f32 %v1047, %v1048
  %v1050 = vrot.slane %v1049, 2
  %v1051 = vmax.f32 %v1049, %v1050
  %v1052 = vrot.slane %v1051, 1
  %v1053 = vmax.f32 %v1051, %v1052
  %v1054 = vsel %vm801, %v691, -inf
  %v1055 = vrot.slane %v1054, 4
  %v1056 = vmax.f32 %v1054, %v1055
  %v1057 = vrot.slane %v1056, 2
  %v1058 = vmax.f32 %v1056, %v1057
  %v1059 = vrot.slane %v1058, 1
  %v1060 = vmax.f32 %v1058, %v1059
  %v1061 = vsel %vm801, %v755, -inf
  %v1062 = vrot.slane %v1061, 4
  %v1063 = vmax.f32 %v1061, %v1062
  %v1064 = vrot.slane %v1063, 2
  %v1065 = vmax.f32 %v1063, %v1064
  %v1066 = vrot.slane %v1065, 1
  %v1067 = vmax.f32 %v1065, %v1066
  %v1068 = vsel %vm801, %v692, -inf
  %v1069 = vrot.slane %v1068, 4
  %v1070 = vmax.f32 %v1068, %v1069
  %v1071 = vrot.slane %v1070, 2
  %v1072 = vmax.f32 %v1070, %v1071
  %v1073 = vrot.slane %v1072, 1
  %v1074 = vmax.f32 %v1072, %v1073
  %v1075 = vsel %vm801, %v756, -inf
  %v1076 = vrot.slane %v1075, 4
  %v1077 = vmax.f32 %v1075, %v1076
  %v1078 = vrot.slane %v1077, 2
  %v1079 = vmax.f32 %v1077, %v1078
  %v1080 = vrot.slane %v1079, 1
  %v1081 = vmax.f32 %v1079, %v1080
  %v1082 = vsel %vm801, %v693, -inf
  %v1083 = vrot.slane %v1082, 4
  %v1084 = vmax.f32 %v1082, %v1083
  %v1085 = vrot.slane %v1084, 2
  %v1086 = vmax.f32 %v1084, %v1085
  %v1087 = vrot.slane %v1086, 1
  %v1088 = vmax.f32 %v1086, %v1087
  %v1089 = vsel %vm801, %v757, -inf
  %v1090 = vrot.slane %v1089, 4
  %v1091 = vmax.f32 %v1089, %v1090
  %v1092 = vrot.slane %v1091, 2
  %v1093 = vmax.f32 %v1091, %v1092
  %v1094 = vrot.slane %v1093, 1
  %v1095 = vmax.f32 %v1093, %v1094
  %v1096 = vsel %vm801, %v694, -inf
  %v1097 = vrot.slane %v1096, 4
  %v1098 = vmax.f32 %v1096, %v1097
  %v1099 = vrot.slane %v1098, 2
  %v1100 = vmax.f32 %v1098, %v1099
  %v1101 = vrot.slane %v1100, 1
  %v1102 = vmax.f32 %v1100, %v1101
  %v1103 = vsel %vm801, %v758, -inf
  %v1104 = vrot.slane %v1103, 4
  %v1105 = vmax.f32 %v1103, %v1104
  %v1106 = vrot.slane %v1105, 2
  %v1107 = vmax.f32 %v1105, %v1106
  %v1108 = vrot.slane %v1107, 1
  %v1109 = vmax.f32 %v1107, %v1108
  %v1110 = vsel %vm801, %v695, -inf
  %v1111 = vrot.slane %v1110, 4
  %v1112 = vmax.f32 %v1110, %v1111
  %v1113 = vrot.slane %v1112, 2
  %v1114 = vmax.f32 %v1112, %v1113
  %v1115 = vrot.slane %v1114, 1
  %v1116 = vmax.f32 %v1114, %v1115
  %v1117 = vsel %vm801, %v759, -inf
  %v1118 = vrot.slane %v1117, 4
  %v1119 = vmax.f32 %v1117, %v1118
  %v1120 = vrot.slane %v1119, 2
  %v1121 = vmax.f32 %v1119, %v1120
  %v1122 = vrot.slane %v1121, 1
  %v1123 = vmax.f32 %v1121, %v1122
  %v1124 = vsel %vm801, %v696, -inf
  %v1125 = vrot.slane %v1124, 4
  %v1126 = vmax.f32 %v1124, %v1125
  %v1127 = vrot.slane %v1126, 2
  %v1128 = vmax.f32 %v1126, %v1127
  %v1129 = vrot.slane %v1128, 1
  %v1130 = vmax.f32 %v1128, %v1129
  %v1131 = vsel %vm801, %v760, -inf
  %v1132 = vrot.slane %v1131, 4
  %v1133 = vmax.f32 %v1131, %v1132
  %v1134 = vrot.slane %v1133, 2
  %v1135 = vmax.f32 %v1133, %v1134
  %v1136 = vrot.slane %v1135, 1
  %v1137 = vmax.f32 %v1135, %v1136
  %v1138 = vsel %vm801, %v697, -inf
  %v1139 = vrot.slane %v1138, 4
  %v1140 = vmax.f32 %v1138, %v1139
  %v1141 = vrot.slane %v1140, 2
  %v1142 = vmax.f32 %v1140, %v1141
  %v1143 = vrot.slane %v1142, 1
  %v1144 = vmax.f32 %v1142, %v1143
  %v1145 = vsel %vm801, %v761, -inf
  %v1146 = vrot.slane %v1145, 4
  %v1147 = vmax.f32 %v1145, %v1146
  %v1148 = vrot.slane %v1147, 2
  %v1149 = vmax.f32 %v1147, %v1148
  %v1150 = vrot.slane %v1149, 1
  %v1151 = vmax.f32 %v1149, %v1150
  %v1152 = vsel %vm801, %v698, -inf
  %v1153 = vrot.slane %v1152, 4
  %v1154 = vmax.f32 %v1152, %v1153
  %v1155 = vrot.slane %v1154, 2
  %v1156 = vmax.f32 %v1154, %v1155
  %v1157 = vrot.slane %v1156, 1
  %v1158 = vmax.f32 %v1156, %v1157
  %v1159 = vsel %vm801, %v762, -inf
  %v1160 = vrot.slane %v1159, 4
  %v1161 = vmax.f32 %v1159, %v1160
  %v1162 = vrot.slane %v1161, 2
  %v1163 = vmax.f32 %v1161, %v1162
  %v1164 = vrot.slane %v1163, 1
  %v1165 = vmax.f32 %v1163, %v1164
  %v1166 = vsel %vm801, %v699, -inf
  %v1167 = vrot.slane %v1166, 4
  %v1168 = vmax.f32 %v1166, %v1167
  %v1169 = vrot.slane %v1168, 2
  %v1170 = vmax.f32 %v1168, %v1169
  %v1171 = vrot.slane %v1170, 1
  %v1172 = vmax.f32 %v1170, %v1171
  %v1173 = vsel %vm801, %v763, -inf
  %v1174 = vrot.slane %v1173, 4
  %v1175 = vmax.f32 %v1173, %v1174
  %v1176 = vrot.slane %v1175, 2
  %v1177 = vmax.f32 %v1175, %v1176
  %v1178 = vrot.slane %v1177, 1
  %v1179 = vmax.f32 %v1177, %v1178
  %v1180 = vsel %vm801, %v700, -inf
  %v1181 = vrot.slane %v1180, 4
  %v1182 = vmax.f32 %v1180, %v1181
  %v1183 = vrot.slane %v1182, 2
  %v1184 = vmax.f32 %v1182, %v1183
  %v1185 = vrot.slane %v1184, 1
  %v1186 = vmax.f32 %v1184, %v1185
  %v1187 = vsel %vm801, %v764, -inf
  %v1188 = vrot.slane %v1187, 4
  %v1189 = vmax.f32 %v1187, %v1188
  %v1190 = vrot.slane %v1189, 2
  %v1191 = vmax.f32 %v1189, %v1190
  %v1192 = vrot.slane %v1191, 1
  %v1193 = vmax.f32 %v1191, %v1192
  %v1194 = vsel %vm801, %v701, -inf
  %v1195 = vrot.slane %v1194, 4
  %v1196 = vmax.f32 %v1194, %v1195
  %v1197 = vrot.slane %v1196, 2
  %v1198 = vmax.f32 %v1196, %v1197
  %v1199 = vrot.slane %v1198, 1
  %v1200 = vmax.f32 %v1198, %v1199
  %v1201 = vsel %vm801, %v765, -inf
  %v1202 = vrot.slane %v1201, 4
  %v1203 = vmax.f32 %v1201, %v1202
  %v1204 = vrot.slane %v1203, 2
  %v1205 = vmax.f32 %v1203, %v1204
  %v1206 = vrot.slane %v1205, 1
  %v1207 = vmax.f32 %v1205, %v1206
  %v1208 = vsel %vm801, %v702, -inf
  %v1209 = vrot.slane %v1208, 4
  %v1210 = vmax.f32 %v1208, %v1209
  %v1211 = vrot.slane %v1210, 2
  %v1212 = vmax.f32 %v1210, %v1211
  %v1213 = vrot.slane %v1212, 1
  %v1214 = vmax.f32 %v1212, %v1213
  %v1215 = vsel %vm801, %v766, -inf
  %v1216 = vrot.slane %v1215, 4
  %v1217 = vmax.f32 %v1215, %v1216
  %v1218 = vrot.slane %v1217, 2
  %v1219 = vmax.f32 %v1217, %v1218
  %v1220 = vrot.slane %v1219, 1
  %v1221 = vmax.f32 %v1219, %v1220
  %v1222 = vsel %vm801, %v703, -inf
  %v1223 = vrot.slane %v1222, 4
  %v1224 = vmax.f32 %v1222, %v1223
  %v1225 = vrot.slane %v1224, 2
  %v1226 = vmax.f32 %v1224, %v1225
  %v1227 = vrot.slane %v1226, 1
  %v1228 = vmax.f32 %v1226, %v1227
  %v1229 = vsel %vm801, %v767, -inf
  %v1230 = vrot.slane %v1229, 4
  %v1231 = vmax.f32 %v1229, %v1230
  %v1232 = vrot.slane %v1231, 2
  %v1233 = vmax.f32 %v1231, %v1232
  %v1234 = vrot.slane %v1233, 1
  %v1235 = vmax.f32 %v1233, %v1234
  %v1236 = vsel %vm801, %v704, -inf
  %v1237 = vrot.slane %v1236, 4
  %v1238 = vmax.f32 %v1236, %v1237
  %v1239 = vrot.slane %v1238, 2
  %v1240 = vmax.f32 %v1238, %v1239
  %v1241 = vrot.slane %v1240, 1
  %v1242 = vmax.f32 %v1240, %v1241
  %v1243 = vsel %vm801, %v768, -inf
  %v1244 = vrot.slane %v1243, 4
  %v1245 = vmax.f32 %v1243, %v1244
  %v1246 = vrot.slane %v1245, 2
  %v1247 = vmax.f32 %v1245, %v1246
  %v1248 = vrot.slane %v1247, 1
  %v1249 = vmax.f32 %v1247, %v1248
  %v1250 = vsel %vm801, %v673, 0.0
  %v1251 = vrot.slane %v1250, 4
  %v1252 = vadd.f32 %v1250, %v1251
  %v1253 = vrot.slane %v1252, 2
  %v1254 = vadd.f32 %v1252, %v1253
  %v1255 = vrot.slane %v1254, 1
  %v1256 = vadd.f32 %v1254, %v1255
  %v1257 = vsel %vm801, %v737, 0.0
  %v1258 = vrot.slane %v1257, 4
  %v1259 = vadd.f32 %v1257, %v1258
  %v1260 = vrot.slane %v1259, 2
  %v1261 = vadd.f32 %v1259, %v1260
  %v1262 = vrot.slane %v1261, 1
  %v1263 = vadd.f32 %v1261, %v1262
  %v1264 = vsel %vm801, %v674, 0.0
  %v1265 = vrot.slane %v1264, 4
  %v1266 = vadd.f32 %v1264, %v1265
  %v1267 = vrot.slane %v1266, 2
  %v1268 = vadd.f32 %v1266, %v1267
  %v1269 = vrot.slane %v1268, 1
  %v1270 = vadd.f32 %v1268, %v1269
  %v1271 = vsel %vm801, %v738, 0.0
  %v1272 = vrot.slane %v1271, 4
  %v1273 = vadd.f32 %v1271, %v1272
  %v1274 = vrot.slane %v1273, 2
  %v1275 = vadd.f32 %v1273, %v1274
  %v1276 = vrot.slane %v1275, 1
  %v1277 = vadd.f32 %v1275, %v1276
  %v1278 = vsel %vm801, %v675, 0.0
  %v1279 = vrot.slane %v1278, 4
  %v1280 = vadd.f32 %v1278, %v1279
  %v1281 = vrot.slane %v1280, 2
  %v1282 = vadd.f32 %v1280, %v1281
  %v1283 = vrot.slane %v1282, 1
  %v1284 = vadd.f32 %v1282, %v1283
  %v1285 = vsel %vm801, %v739, 0.0
  %v1286 = vrot.slane %v1285, 4
  %v1287 = vadd.f32 %v1285, %v1286
  %v1288 = vrot.slane %v1287, 2
  %v1289 = vadd.f32 %v1287, %v1288
  %v1290 = vrot.slane %v1289, 1
  %v1291 = vadd.f32 %v1289, %v1290
  %v1292 = vsel %vm801, %v676, 0.0
  %v1293 = vrot.slane %v1292, 4
  %v1294 = vadd.f32 %v1292, %v1293
  %v1295 = vrot.slane %v1294, 2
  %v1296 = vadd.f32 %v1294, %v1295
  %v1297 = vrot.slane %v1296, 1
  %v1298 = vadd.f32 %v1296, %v1297
  %v1299 = vsel %vm801, %v740, 0.0
  %v1300 = vrot.slane %v1299, 4
  %v1301 = vadd.f32 %v1299, %v1300
  %v1302 = vrot.slane %v1301, 2
  %v1303 = vadd.f32 %v1301, %v1302
  %v1304 = vrot.slane %v1303, 1
  %v1305 = vadd.f32 %v1303, %v1304
  %v1306 = vsel %vm801, %v677, 0.0
  %v1307 = vrot.slane %v1306, 4
  %v1308 = vadd.f32 %v1306, %v1307
  %v1309 = vrot.slane %v1308, 2
  %v1310 = vadd.f32 %v1308, %v1309
  %v1311 = vrot.slane %v1310, 1
  %v1312 = vadd.f32 %v1310, %v1311
  %v1313 = vsel %vm801, %v741, 0.0
  %v1314 = vrot.slane %v1313, 4
  %v1315 = vadd.f32 %v1313, %v1314
  %v1316 = vrot.slane %v1315, 2
  %v1317 = vadd.f32 %v1315, %v1316
  %v1318 = vrot.slane %v1317, 1
  %v1319 = vadd.f32 %v1317, %v1318
  %v1320 = vsel %vm801, %v678, 0.0
  %v1321 = vrot.slane %v1320, 4
  %v1322 = vadd.f32 %v1320, %v1321
  %v1323 = vrot.slane %v1322, 2
  %v1324 = vadd.f32 %v1322, %v1323
  %v1325 = vrot.slane %v1324, 1
  %v1326 = vadd.f32 %v1324, %v1325
  %v1327 = vsel %vm801, %v742, 0.0
  %v1328 = vrot.slane %v1327, 4
  %v1329 = vadd.f32 %v1327, %v1328
  %v1330 = vrot.slane %v1329, 2
  %v1331 = vadd.f32 %v1329, %v1330
  %v1332 = vrot.slane %v1331, 1
  %v1333 = vadd.f32 %v1331, %v1332
  %v1334 = vsel %vm801, %v679, 0.0
  %v1335 = vrot.slane %v1334, 4
  %v1336 = vadd.f32 %v1334, %v1335
  %v1337 = vrot.slane %v1336, 2
  %v1338 = vadd.f32 %v1336, %v1337
  %v1339 = vrot.slane %v1338, 1
  %v1340 = vadd.f32 %v1338, %v1339
  %v1341 = vsel %vm801, %v743, 0.0
  %v1342 = vrot.slane %v1341, 4
  %v1343 = vadd.f32 %v1341, %v1342
  %v1344 = vrot.slane %v1343, 2
  %v1345 = vadd.f32 %v1343, %v1344
  %v1346 = vrot.slane %v1345, 1
  %v1347 = vadd.f32 %v1345, %v1346
  %v1348 = vsel %vm801, %v680, 0.0
  %v1349 = vrot.slane %v1348, 4
  %v1350 = vadd.f32 %v1348, %v1349
  %v1351 = vrot.slane %v1350, 2
  %v1352 = vadd.f32 %v1350, %v1351
  %v1353 = vrot.slane %v1352, 1
  %v1354 = vadd.f32 %v1352, %v1353
  %v1355 = vsel %vm801, %v744, 0.0
  %v1356 = vrot.slane %v1355, 4
  %v1357 = vadd.f32 %v1355, %v1356
  %v1358 = vrot.slane %v1357, 2
  %v1359 = vadd.f32 %v1357, %v1358
  %v1360 = vrot.slane %v1359, 1
  %v1361 = vadd.f32 %v1359, %v1360
  %v1362 = vsel %vm801, %v681, 0.0
  %v1363 = vrot.slane %v1362, 4
  %v1364 = vadd.f32 %v1362, %v1363
  %v1365 = vrot.slane %v1364, 2
  %v1366 = vadd.f32 %v1364, %v1365
  %v1367 = vrot.slane %v1366, 1
  %v1368 = vadd.f32 %v1366, %v1367
  %v1369 = vsel %vm801, %v745, 0.0
  %v1370 = vrot.slane %v1369, 4
  %v1371 = vadd.f32 %v1369, %v1370
  %v1372 = vrot.slane %v1371, 2
  %v1373 = vadd.f32 %v1371, %v1372
  %v1374 = vrot.slane %v1373, 1
  %v1375 = vadd.f32 %v1373, %v1374
  %v1376 = vsel %vm801, %v682, 0.0
  %v1377 = vrot.slane %v1376, 4
  %v1378 = vadd.f32 %v1376, %v1377
  %v1379 = vrot.slane %v1378, 2
  %v1380 = vadd.f32 %v1378, %v1379
  %v1381 = vrot.slane %v1380, 1
  %v1382 = vadd.f32 %v1380, %v1381
  %v1383 = vsel %vm801, %v746, 0.0
  %v1384 = vrot.slane %v1383, 4
  %v1385 = vadd.f32 %v1383, %v1384
  %v1386 = vrot.slane %v1385, 2
  %v1387 = vadd.f32 %v1385, %v1386
  %v1388 = vrot.slane %v1387, 1
  %v1389 = vadd.f32 %v1387, %v1388
  %v1390 = vsel %vm801, %v683, 0.0
  %v1391 = vrot.slane %v1390, 4
  %v1392 = vadd.f32 %v1390, %v1391
  %v1393 = vrot.slane %v1392, 2
  %v1394 = vadd.f32 %v1392, %v1393
  %v1395 = vrot.slane %v1394, 1
  %v1396 = vadd.f32 %v1394, %v1395
  %v1397 = vsel %vm801, %v747, 0.0
  %v1398 = vrot.slane %v1397, 4
  %v1399 = vadd.f32 %v1397, %v1398
  %v1400 = vrot.slane %v1399, 2
  %v1401 = vadd.f32 %v1399, %v1400
  %v1402 = vrot.slane %v1401, 1
  %v1403 = vadd.f32 %v1401, %v1402
  %v1404 = vsel %vm801, %v684, 0.0
  %v1405 = vrot.slane %v1404, 4
  %v1406 = vadd.f32 %v1404, %v1405
  %v1407 = vrot.slane %v1406, 2
  %v1408 = vadd.f32 %v1406, %v1407
  %v1409 = vrot.slane %v1408, 1
  %v1410 = vadd.f32 %v1408, %v1409
  %v1411 = vsel %vm801, %v748, 0.0
  %v1412 = vrot.slane %v1411, 4
  %v1413 = vadd.f32 %v1411, %v1412
  %v1414 = vrot.slane %v1413, 2
  %v1415 = vadd.f32 %v1413, %v1414
  %v1416 = vrot.slane %v1415, 1
  %v1417 = vadd.f32 %v1415, %v1416
  %v1418 = vsel %vm801, %v685, 0.0
  %v1419 = vrot.slane %v1418, 4
  %v1420 = vadd.f32 %v1418, %v1419
  %v1421 = vrot.slane %v1420, 2
  %v1422 = vadd.f32 %v1420, %v1421
  %v1423 = vrot.slane %v1422, 1
  %v1424 = vadd.f32 %v1422, %v1423
  %v1425 = vsel %vm801, %v749, 0.0
  %v1426 = vrot.slane %v1425, 4
  %v1427 = vadd.f32 %v1425, %v1426
  %v1428 = vrot.slane %v1427, 2
  %v1429 = vadd.f32 %v1427, %v1428
  %v1430 = vrot.slane %v1429, 1
  %v1431 = vadd.f32 %v1429, %v1430
  %v1432 = vsel %vm801, %v686, 0.0
  %v1433 = vrot.slane %v1432, 4
  %v1434 = vadd.f32 %v1432, %v1433
  %v1435 = vrot.slane %v1434, 2
  %v1436 = vadd.f32 %v1434, %v1435
  %v1437 = vrot.slane %v1436, 1
  %v1438 = vadd.f32 %v1436, %v1437
  %v1439 = vsel %vm801, %v750, 0.0
  %v1440 = vrot.slane %v1439, 4
  %v1441 = vadd.f32 %v1439, %v1440
  %v1442 = vrot.slane %v1441, 2
  %v1443 = vadd.f32 %v1441, %v1442
  %v1444 = vrot.slane %v1443, 1
  %v1445 = vadd.f32 %v1443, %v1444
  %v1446 = vsel %vm801, %v687, 0.0
  %v1447 = vrot.slane %v1446, 4
  %v1448 = vadd.f32 %v1446, %v1447
  %v1449 = vrot.slane %v1448, 2
  %v1450 = vadd.f32 %v1448, %v1449
  %v1451 = vrot.slane %v1450, 1
  %v1452 = vadd.f32 %v1450, %v1451
  %v1453 = vsel %vm801, %v751, 0.0
  %v1454 = vrot.slane %v1453, 4
  %v1455 = vadd.f32 %v1453, %v1454
  %v1456 = vrot.slane %v1455, 2
  %v1457 = vadd.f32 %v1455, %v1456
  %v1458 = vrot.slane %v1457, 1
  %v1459 = vadd.f32 %v1457, %v1458
  %v1460 = vsel %vm801, %v688, 0.0
  %v1461 = vrot.slane %v1460, 4
  %v1462 = vadd.f32 %v1460, %v1461
  %v1463 = vrot.slane %v1462, 2
  %v1464 = vadd.f32 %v1462, %v1463
  %v1465 = vrot.slane %v1464, 1
  %v1466 = vadd.f32 %v1464, %v1465
  %v1467 = vsel %vm801, %v752, 0.0
  %v1468 = vrot.slane %v1467, 4
  %v1469 = vadd.f32 %v1467, %v1468
  %v1470 = vrot.slane %v1469, 2
  %v1471 = vadd.f32 %v1469, %v1470
  %v1472 = vrot.slane %v1471, 1
  %v1473 = vadd.f32 %v1471, %v1472
  %v1474 = vsel %vm801, %v689, 0.0
  %v1475 = vrot.slane %v1474, 4
  %v1476 = vadd.f32 %v1474, %v1475
  %v1477 = vrot.slane %v1476, 2
  %v1478 = vadd.f32 %v1476, %v1477
  %v1479 = vrot.slane %v1478, 1
  %v1480 = vadd.f32 %v1478, %v1479
  %v1481 = vsel %vm801, %v753, 0.0
  %v1482 = vrot.slane %v1481, 4
  %v1483 = vadd.f32 %v1481, %v1482
  %v1484 = vrot.slane %v1483, 2
  %v1485 = vadd.f32 %v1483, %v1484
  %v1486 = vrot.slane %v1485, 1
  %v1487 = vadd.f32 %v1485, %v1486
  %v1488 = vsel %vm801, %v690, 0.0
  %v1489 = vrot.slane %v1488, 4
  %v1490 = vadd.f32 %v1488, %v1489
  %v1491 = vrot.slane %v1490, 2
  %v1492 = vadd.f32 %v1490, %v1491
  %v1493 = vrot.slane %v1492, 1
  %v1494 = vadd.f32 %v1492, %v1493
  %v1495 = vsel %vm801, %v754, 0.0
  %v1496 = vrot.slane %v1495, 4
  %v1497 = vadd.f32 %v1495, %v1496
  %v1498 = vrot.slane %v1497, 2
  %v1499 = vadd.f32 %v1497, %v1498
  %v1500 = vrot.slane %v1499, 1
  %v1501 = vadd.f32 %v1499, %v1500
  %v1502 = vsel %vm801, %v691, 0.0
  %v1503 = vrot.slane %v1502, 4
  %v1504 = vadd.f32 %v1502, %v1503
  %v1505 = vrot.slane %v1504, 2
  %v1506 = vadd.f32 %v1504, %v1505
  %v1507 = vrot.slane %v1506, 1
  %v1508 = vadd.f32 %v1506, %v1507
  %v1509 = vsel %vm801, %v755, 0.0
  %v1510 = vrot.slane %v1509, 4
  %v1511 = vadd.f32 %v1509, %v1510
  %v1512 = vrot.slane %v1511, 2
  %v1513 = vadd.f32 %v1511, %v1512
  %v1514 = vrot.slane %v1513, 1
  %v1515 = vadd.f32 %v1513, %v1514
  %v1516 = vsel %vm801, %v692, 0.0
  %v1517 = vrot.slane %v1516, 4
  %v1518 = vadd.f32 %v1516, %v1517
  %v1519 = vrot.slane %v1518, 2
  %v1520 = vadd.f32 %v1518, %v1519
  %v1521 = vrot.slane %v1520, 1
  %v1522 = vadd.f32 %v1520, %v1521
  %v1523 = vsel %vm801, %v756, 0.0
  %v1524 = vrot.slane %v1523, 4
  %v1525 = vadd.f32 %v1523, %v1524
  %v1526 = vrot.slane %v1525, 2
  %v1527 = vadd.f32 %v1525, %v1526
  %v1528 = vrot.slane %v1527, 1
  %v1529 = vadd.f32 %v1527, %v1528
  %v1530 = vsel %vm801, %v693, 0.0
  %v1531 = vrot.slane %v1530, 4
  %v1532 = vadd.f32 %v1530, %v1531
  %v1533 = vrot.slane %v1532, 2
  %v1534 = vadd.f32 %v1532, %v1533
  %v1535 = vrot.slane %v1534, 1
  %v1536 = vadd.f32 %v1534, %v1535
  %v1537 = vsel %vm801, %v757, 0.0
  %v1538 = vrot.slane %v1537, 4
  %v1539 = vadd.f32 %v1537, %v1538
  %v1540 = vrot.slane %v1539, 2
  %v1541 = vadd.f32 %v1539, %v1540
  %v1542 = vrot.slane %v1541, 1
  %v1543 = vadd.f32 %v1541, %v1542
  %v1544 = vsel %vm801, %v694, 0.0
  %v1545 = vrot.slane %v1544, 4
  %v1546 = vadd.f32 %v1544, %v1545
  %v1547 = vrot.slane %v1546, 2
  %v1548 = vadd.f32 %v1546, %v1547
  %v1549 = vrot.slane %v1548, 1
  %v1550 = vadd.f32 %v1548, %v1549
  %v1551 = vsel %vm801, %v758, 0.0
  %v1552 = vrot.slane %v1551, 4
  %v1553 = vadd.f32 %v1551, %v1552
  %v1554 = vrot.slane %v1553, 2
  %v1555 = vadd.f32 %v1553, %v1554
  %v1556 = vrot.slane %v1555, 1
  %v1557 = vadd.f32 %v1555, %v1556
  %v1558 = vsel %vm801, %v695, 0.0
  %v1559 = vrot.slane %v1558, 4
  %v1560 = vadd.f32 %v1558, %v1559
  %v1561 = vrot.slane %v1560, 2
  %v1562 = vadd.f32 %v1560, %v1561
  %v1563 = vrot.slane %v1562, 1
  %v1564 = vadd.f32 %v1562, %v1563
  %v1565 = vsel %vm801, %v759, 0.0
  %v1566 = vrot.slane %v1565, 4
  %v1567 = vadd.f32 %v1565, %v1566
  %v1568 = vrot.slane %v1567, 2
  %v1569 = vadd.f32 %v1567, %v1568
  %v1570 = vrot.slane %v1569, 1
  %v1571 = vadd.f32 %v1569, %v1570
  %v1572 = vsel %vm801, %v696, 0.0
  %v1573 = vrot.slane %v1572, 4
  %v1574 = vadd.f32 %v1572, %v1573
  %v1575 = vrot.slane %v1574, 2
  %v1576 = vadd.f32 %v1574, %v1575
  %v1577 = vrot.slane %v1576, 1
  %v1578 = vadd.f32 %v1576, %v1577
  %v1579 = vsel %vm801, %v760, 0.0
  %v1580 = vrot.slane %v1579, 4
  %v1581 = vadd.f32 %v1579, %v1580
  %v1582 = vrot.slane %v1581, 2
  %v1583 = vadd.f32 %v1581, %v1582
  %v1584 = vrot.slane %v1583, 1
  %v1585 = vadd.f32 %v1583, %v1584
  %v1586 = vsel %vm801, %v697, 0.0
  %v1587 = vrot.slane %v1586, 4
  %v1588 = vadd.f32 %v1586, %v1587
  %v1589 = vrot.slane %v1588, 2
  %v1590 = vadd.f32 %v1588, %v1589
  %v1591 = vrot.slane %v1590, 1
  %v1592 = vadd.f32 %v1590, %v1591
  %v1593 = vsel %vm801, %v761, 0.0
  %v1594 = vrot.slane %v1593, 4
  %v1595 = vadd.f32 %v1593, %v1594
  %v1596 = vrot.slane %v1595, 2
  %v1597 = vadd.f32 %v1595, %v1596
  %v1598 = vrot.slane %v1597, 1
  %v1599 = vadd.f32 %v1597, %v1598
  %v1600 = vsel %vm801, %v698, 0.0
  %v1601 = vrot.slane %v1600, 4
  %v1602 = vadd.f32 %v1600, %v1601
  %v1603 = vrot.slane %v1602, 2
  %v1604 = vadd.f32 %v1602, %v1603
  %v1605 = vrot.slane %v1604, 1
  %v1606 = vadd.f32 %v1604, %v1605
  %v1607 = vsel %vm801, %v762, 0.0
  %v1608 = vrot.slane %v1607, 4
  %v1609 = vadd.f32 %v1607, %v1608
  %v1610 = vrot.slane %v1609, 2
  %v1611 = vadd.f32 %v1609, %v1610
  %v1612 = vrot.slane %v1611, 1
  %v1613 = vadd.f32 %v1611, %v1612
  %v1614 = vsel %vm801, %v699, 0.0
  %v1615 = vrot.slane %v1614, 4
  %v1616 = vadd.f32 %v1614, %v1615
  %v1617 = vrot.slane %v1616, 2
  %v1618 = vadd.f32 %v1616, %v1617
  %v1619 = vrot.slane %v1618, 1
  %v1620 = vadd.f32 %v1618, %v1619
  %v1621 = vsel %vm801, %v763, 0.0
  %v1622 = vrot.slane %v1621, 4
  %v1623 = vadd.f32 %v1621, %v1622
  %v1624 = vrot.slane %v1623, 2
  %v1625 = vadd.f32 %v1623, %v1624
  %v1626 = vrot.slane %v1625, 1
  %v1627 = vadd.f32 %v1625, %v1626
  %v1628 = vsel %vm801, %v700, 0.0
  %v1629 = vrot.slane %v1628, 4
  %v1630 = vadd.f32 %v1628, %v1629
  %v1631 = vrot.slane %v1630, 2
  %v1632 = vadd.f32 %v1630, %v1631
  %v1633 = vrot.slane %v1632, 1
  %v1634 = vadd.f32 %v1632, %v1633
  %v1635 = vsel %vm801, %v764, 0.0
  %v1636 = vrot.slane %v1635, 4
  %v1637 = vadd.f32 %v1635, %v1636
  %v1638 = vrot.slane %v1637, 2
  %v1639 = vadd.f32 %v1637, %v1638
  %v1640 = vrot.slane %v1639, 1
  %v1641 = vadd.f32 %v1639, %v1640
  %v1642 = vsel %vm801, %v701, 0.0
  %v1643 = vrot.slane %v1642, 4
  %v1644 = vadd.f32 %v1642, %v1643
  %v1645 = vrot.slane %v1644, 2
  %v1646 = vadd.f32 %v1644, %v1645
  %v1647 = vrot.slane %v1646, 1
  %v1648 = vadd.f32 %v1646, %v1647
  %v1649 = vsel %vm801, %v765, 0.0
  %v1650 = vrot.slane %v1649, 4
  %v1651 = vadd.f32 %v1649, %v1650
  %v1652 = vrot.slane %v1651, 2
  %v1653 = vadd.f32 %v1651, %v1652
  %v1654 = vrot.slane %v1653, 1
  %v1655 = vadd.f32 %v1653, %v1654
  %v1656 = vsel %vm801, %v702, 0.0
  %v1657 = vrot.slane %v1656, 4
  %v1658 = vadd.f32 %v1656, %v1657
  %v1659 = vrot.slane %v1658, 2
  %v1660 = vadd.f32 %v1658, %v1659
  %v1661 = vrot.slane %v1660, 1
  %v1662 = vadd.f32 %v1660, %v1661
  %v1663 = vsel %vm801, %v766, 0.0
  %v1664 = vrot.slane %v1663, 4
  %v1665 = vadd.f32 %v1663, %v1664
  %v1666 = vrot.slane %v1665, 2
  %v1667 = vadd.f32 %v1665, %v1666
  %v1668 = vrot.slane %v1667, 1
  %v1669 = vadd.f32 %v1667, %v1668
  %v1670 = vsel %vm801, %v703, 0.0
  %v1671 = vrot.slane %v1670, 4
  %v1672 = vadd.f32 %v1670, %v1671
  %v1673 = vrot.slane %v1672, 2
  %v1674 = vadd.f32 %v1672, %v1673
  %v1675 = vrot.slane %v1674, 1
  %v1676 = vadd.f32 %v1674, %v1675
  %v1677 = vsel %vm801, %v767, 0.0
  %v1678 = vrot.slane %v1677, 4
  %v1679 = vadd.f32 %v1677, %v1678
  %v1680 = vrot.slane %v1679, 2
  %v1681 = vadd.f32 %v1679, %v1680
  %v1682 = vrot.slane %v1681, 1
  %v1683 = vadd.f32 %v1681, %v1682
  %v1684 = vsel %vm801, %v704, 0.0
  %v1685 = vrot.slane %v1684, 4
  %v1686 = vadd.f32 %v1684, %v1685
  %v1687 = vrot.slane %v1686, 2
  %v1688 = vadd.f32 %v1686, %v1687
  %v1689 = vrot.slane %v1688, 1
  %v1690 = vadd.f32 %v1688, %v1689
  %v1691 = vsel %vm801, %v768, 0.0
  %v1692 = vrot.slane %v1691, 4
  %v1693 = vadd.f32 %v1691, %v1692
  %v1694 = vrot.slane %v1693, 2
  %v1695 = vadd.f32 %v1693, %v1694
  %v1696 = vrot.slane %v1695, 1
  %v1697 = vadd.f32 %v1695, %v1696
  %v1698 = vpack.c.bf16 %v808, %v808
  %v1699 = vpack.c.bf16 %v815, %v815
  %v1700 = vpack.c.bf16 %v822, %v822
  %v1701 = vpack.c.bf16 %v829, %v829
  %v1702 = vpack.c.bf16 %v836, %v836
  %v1703 = vpack.c.bf16 %v843, %v843
  %v1704 = vpack.c.bf16 %v850, %v850
  %v1705 = vpack.c.bf16 %v857, %v857
  %v1706 = vpack.c.bf16 %v864, %v864
  %v1707 = vpack.c.bf16 %v871, %v871
  %v1708 = vpack.c.bf16 %v878, %v878
  %v1709 = vpack.c.bf16 %v885, %v885
  %v1710 = vpack.c.bf16 %v892, %v892
  %v1711 = vpack.c.bf16 %v899, %v899
  %v1712 = vpack.c.bf16 %v906, %v906
  %v1713 = vpack.c.bf16 %v913, %v913
  %v1714 = vpack.c.bf16 %v920, %v920
  %v1715 = vpack.c.bf16 %v927, %v927
  %v1716 = vpack.c.bf16 %v934, %v934
  %v1717 = vpack.c.bf16 %v941, %v941
  %v1718 = vpack.c.bf16 %v948, %v948
  %v1719 = vpack.c.bf16 %v955, %v955
  %v1720 = vpack.c.bf16 %v962, %v962
  %v1721 = vpack.c.bf16 %v969, %v969
  %v1722 = vpack.c.bf16 %v976, %v976
  %v1723 = vpack.c.bf16 %v983, %v983
  %v1724 = vpack.c.bf16 %v990, %v990
  %v1725 = vpack.c.bf16 %v997, %v997
  %v1726 = vpack.c.bf16 %v1004, %v1004
  %v1727 = vpack.c.bf16 %v1011, %v1011
  %v1728 = vpack.c.bf16 %v1018, %v1018
  %v1729 = vpack.c.bf16 %v1025, %v1025
  %v1730 = vpack.c.bf16 %v1032, %v1032
  %v1731 = vpack.c.bf16 %v1039, %v1039
  %v1732 = vpack.c.bf16 %v1046, %v1046
  %v1733 = vpack.c.bf16 %v1053, %v1053
  %v1734 = vpack.c.bf16 %v1060, %v1060
  %v1735 = vpack.c.bf16 %v1067, %v1067
  %v1736 = vpack.c.bf16 %v1074, %v1074
  %v1737 = vpack.c.bf16 %v1081, %v1081
  %v1738 = vpack.c.bf16 %v1088, %v1088
  %v1739 = vpack.c.bf16 %v1095, %v1095
  %v1740 = vpack.c.bf16 %v1102, %v1102
  %v1741 = vpack.c.bf16 %v1109, %v1109
  %v1742 = vpack.c.bf16 %v1116, %v1116
  %v1743 = vpack.c.bf16 %v1123, %v1123
  %v1744 = vpack.c.bf16 %v1130, %v1130
  %v1745 = vpack.c.bf16 %v1137, %v1137
  %v1746 = vpack.c.bf16 %v1144, %v1144
  %v1747 = vpack.c.bf16 %v1151, %v1151
  %v1748 = vpack.c.bf16 %v1158, %v1158
  %v1749 = vpack.c.bf16 %v1165, %v1165
  %v1750 = vpack.c.bf16 %v1172, %v1172
  %v1751 = vpack.c.bf16 %v1179, %v1179
  %v1752 = vpack.c.bf16 %v1186, %v1186
  %v1753 = vpack.c.bf16 %v1193, %v1193
  %v1754 = vpack.c.bf16 %v1200, %v1200
  %v1755 = vpack.c.bf16 %v1207, %v1207
  %v1756 = vpack.c.bf16 %v1214, %v1214
  %v1757 = vpack.c.bf16 %v1221, %v1221
  %v1758 = vpack.c.bf16 %v1228, %v1228
  %v1759 = vpack.c.bf16 %v1235, %v1235
  %v1760 = vpack.c.bf16 %v1242, %v1242
  %v1761 = vpack.c.bf16 %v1249, %v1249
  %v1762 = vld [vmem:[%s5] sm:$0xf]
  %v1763 = vld [vmem:[%s5 + $0x4] sm:$0xf]
  %v1764 = vld [vmem:[%s5 + $0x8] sm:$0xf]
  %v1765 = vld [vmem:[%s5 + $0xc] sm:$0xf]
  %v1766 = vld [vmem:[%s5 + $0x10] sm:$0xf]
  %v1767 = vld [vmem:[%s5 + $0x14] sm:$0xf]
  %v1768 = vld [vmem:[%s5 + $0x18] sm:$0xf]
  %v1769 = vld [vmem:[%s5 + $0x1c] sm:$0xf]
  %v1770 = vld [vmem:[%s5 + $0x20] sm:$0xf]
  %v1771 = vld [vmem:[%s5 + $0x24] sm:$0xf]
  %v1772 = vld [vmem:[%s5 + $0x28] sm:$0xf]
  %v1773 = vld [vmem:[%s5 + $0x2c] sm:$0xf]
  %v1774 = vld [vmem:[%s5 + $0x30] sm:$0xf]
  %v1775 = vld [vmem:[%s5 + $0x34] sm:$0xf]
  %v1776 = vld [vmem:[%s5 + $0x38] sm:$0xf]
  %v1777 = vld [vmem:[%s5 + $0x3c] sm:$0xf]
  %v1778 = vpack.c.bf16 %v1256, %v1256
  %v1779 = vpack.c.bf16 %v1263, %v1263
  %v1780 = vpack.c.bf16 %v1270, %v1270
  %v1781 = vpack.c.bf16 %v1277, %v1277
  %v1782 = vpack.c.bf16 %v1284, %v1284
  %v1783 = vpack.c.bf16 %v1291, %v1291
  %v1784 = vpack.c.bf16 %v1298, %v1298
  %v1785 = vpack.c.bf16 %v1305, %v1305
  %v1786 = vpack.c.bf16 %v1312, %v1312
  %v1787 = vpack.c.bf16 %v1319, %v1319
  %v1788 = vpack.c.bf16 %v1326, %v1326
  %v1789 = vpack.c.bf16 %v1333, %v1333
  %v1790 = vpack.c.bf16 %v1340, %v1340
  %v1791 = vpack.c.bf16 %v1347, %v1347
  %v1792 = vpack.c.bf16 %v1354, %v1354
  %v1793 = vpack.c.bf16 %v1361, %v1361
  %v1794 = vpack.c.bf16 %v1368, %v1368
  %v1795 = vpack.c.bf16 %v1375, %v1375
  %v1796 = vpack.c.bf16 %v1382, %v1382
  %v1797 = vpack.c.bf16 %v1389, %v1389
  %v1798 = vpack.c.bf16 %v1396, %v1396
  %v1799 = vpack.c.bf16 %v1403, %v1403
  %v1800 = vpack.c.bf16 %v1410, %v1410
  %v1801 = vpack.c.bf16 %v1417, %v1417
  %v1802 = vpack.c.bf16 %v1424, %v1424
  %v1803 = vpack.c.bf16 %v1431, %v1431
  %v1804 = vpack.c.bf16 %v1438, %v1438
  %v1805 = vpack.c.bf16 %v1445, %v1445
  %v1806 = vpack.c.bf16 %v1452, %v1452
  %v1807 = vpack.c.bf16 %v1459, %v1459
  %v1808 = vpack.c.bf16 %v1466, %v1466
  %v1809 = vpack.c.bf16 %v1473, %v1473
  %v1810 = vpack.c.bf16 %v1480, %v1480
  %v1811 = vpack.c.bf16 %v1487, %v1487
  %v1812 = vpack.c.bf16 %v1494, %v1494
  %v1813 = vpack.c.bf16 %v1501, %v1501
  %v1814 = vpack.c.bf16 %v1508, %v1508
  %v1815 = vpack.c.bf16 %v1515, %v1515
  %v1816 = vpack.c.bf16 %v1522, %v1522
  %v1817 = vpack.c.bf16 %v1529, %v1529
  %v1818 = vpack.c.bf16 %v1536, %v1536
  %v1819 = vpack.c.bf16 %v1543, %v1543
  %v1820 = vpack.c.bf16 %v1550, %v1550
  %v1821 = vpack.c.bf16 %v1557, %v1557
  %v1822 = vpack.c.bf16 %v1564, %v1564
  %v1823 = vpack.c.bf16 %v1571, %v1571
  %v1824 = vpack.c.bf16 %v1578, %v1578
  %v1825 = vpack.c.bf16 %v1585, %v1585
  %v1826 = vpack.c.bf16 %v1592, %v1592
  %v1827 = vpack.c.bf16 %v1599, %v1599
  %v1828 = vpack.c.bf16 %v1606, %v1606
  %v1829 = vpack.c.bf16 %v1613, %v1613
  %v1830 = vpack.c.bf16 %v1620, %v1620
  %v1831 = vpack.c.bf16 %v1627, %v1627
  %v1832 = vpack.c.bf16 %v1634, %v1634
  %v1833 = vpack.c.bf16 %v1641, %v1641
  %v1834 = vpack.c.bf16 %v1648, %v1648
  %v1835 = vpack.c.bf16 %v1655, %v1655
  %v1836 = vpack.c.bf16 %v1662, %v1662
  %v1837 = vpack.c.bf16 %v1669, %v1669
  %v1838 = vpack.c.bf16 %v1676, %v1676
  %v1839 = vpack.c.bf16 %v1683, %v1683
  %v1840 = vpack.c.bf16 %v1690, %v1690
  %v1841 = vpack.c.bf16 %v1697, %v1697
  %v1842 = vld [vmem:[%s6] sm:$0xf]
  %v1843 = vld [vmem:[%s6 + $0x4] sm:$0xf]
  %v1844 = vld [vmem:[%s6 + $0x8] sm:$0xf]
  %v1845 = vld [vmem:[%s6 + $0xc] sm:$0xf]
  %v1846 = vld [vmem:[%s6 + $0x10] sm:$0xf]
  %v1847 = vld [vmem:[%s6 + $0x14] sm:$0xf]
  %v1848 = vld [vmem:[%s6 + $0x18] sm:$0xf]
  %v1849 = vld [vmem:[%s6 + $0x1c] sm:$0xf]
  %v1850 = vld [vmem:[%s6 + $0x20] sm:$0xf]
  %v1851 = vld [vmem:[%s6 + $0x24] sm:$0xf]
  %v1852 = vld [vmem:[%s6 + $0x28] sm:$0xf]
  %v1853 = vld [vmem:[%s6 + $0x2c] sm:$0xf]
  %v1854 = vld [vmem:[%s6 + $0x30] sm:$0xf]
  %v1855 = vld [vmem:[%s6 + $0x34] sm:$0xf]
  %v1856 = vld [vmem:[%s6 + $0x38] sm:$0xf]
  %v1857 = vld [vmem:[%s6 + $0x3c] sm:$0xf]
  %v1922 = vunpack.c.l.b16 %v1778
  %v1923 = vunpack.c.l.b16 %v1779
  %v1924 = vunpack.c.l.b16 %v1780
  %v1925 = vunpack.c.l.b16 %v1781
  %v1926 = vunpack.c.l.b16 %v1782
  %v1927 = vunpack.c.l.b16 %v1783
  %v1928 = vunpack.c.l.b16 %v1784
  %v1929 = vunpack.c.l.b16 %v1785
  %v1930 = vunpack.c.l.b16 %v1786
  %v1931 = vunpack.c.l.b16 %v1787
  %v1932 = vunpack.c.l.b16 %v1788
  %v1933 = vunpack.c.l.b16 %v1789
  %v1934 = vunpack.c.l.b16 %v1790
  %v1935 = vunpack.c.l.b16 %v1791
  %v1936 = vunpack.c.l.b16 %v1792
  %v1937 = vunpack.c.l.b16 %v1793
  %v1938 = vunpack.c.l.b16 %v1794
  %v1939 = vunpack.c.l.b16 %v1795
  %v1940 = vunpack.c.l.b16 %v1796
  %v1941 = vunpack.c.l.b16 %v1797
  %v1942 = vunpack.c.l.b16 %v1798
  %v1943 = vunpack.c.l.b16 %v1799
  %v1944 = vunpack.c.l.b16 %v1800
  %v1945 = vunpack.c.l.b16 %v1801
  %v1946 = vunpack.c.l.b16 %v1802
  %v1947 = vunpack.c.l.b16 %v1803
  %v1948 = vunpack.c.l.b16 %v1804
  %v1949 = vunpack.c.l.b16 %v1805
  %v1950 = vunpack.c.l.b16 %v1806
  %v1951 = vunpack.c.l.b16 %v1807
  %v1952 = vunpack.c.l.b16 %v1808
  %v1953 = vunpack.c.l.b16 %v1809
  %v1954 = vunpack.c.l.b16 %v1810
  %v1955 = vunpack.c.l.b16 %v1811
  %v1956 = vunpack.c.l.b16 %v1812
  %v1957 = vunpack.c.l.b16 %v1813
  %v1958 = vunpack.c.l.b16 %v1814
  %v1959 = vunpack.c.l.b16 %v1815
  %v1960 = vunpack.c.l.b16 %v1816
  %v1961 = vunpack.c.l.b16 %v1817
  %v1962 = vunpack.c.l.b16 %v1818
  %v1963 = vunpack.c.l.b16 %v1819
  %v1964 = vunpack.c.l.b16 %v1820
  %v1965 = vunpack.c.l.b16 %v1821
  %v1966 = vunpack.c.l.b16 %v1822
  %v1967 = vunpack.c.l.b16 %v1823
  %v1968 = vunpack.c.l.b16 %v1824
  %v1969 = vunpack.c.l.b16 %v1825
  %v1970 = vunpack.c.l.b16 %v1826
  %v1971 = vunpack.c.l.b16 %v1827
  %v1972 = vunpack.c.l.b16 %v1828
  %v1973 = vunpack.c.l.b16 %v1829
  %v1974 = vunpack.c.l.b16 %v1830
  %v1975 = vunpack.c.l.b16 %v1831
  %v1976 = vunpack.c.l.b16 %v1832
  %v1977 = vunpack.c.l.b16 %v1833
  %v1978 = vunpack.c.l.b16 %v1834
  %v1979 = vunpack.c.l.b16 %v1835
  %v1980 = vunpack.c.l.b16 %v1836
  %v1981 = vunpack.c.l.b16 %v1837
  %v1982 = vunpack.c.l.b16 %v1838
  %v1983 = vunpack.c.l.b16 %v1839
  %v1984 = vunpack.c.l.b16 %v1840
  %v1985 = vunpack.c.l.b16 %v1841
  %vm1986 = vcmask 1041409
  %v1987 = vsel %vm1986, %v1923, %v1922
  %vm1988 = vcmask 1042434
  %v1989 = vsel %vm1988, %v1924, %v1987
  %vm1990 = vcmask 1043459
  %v1991 = vsel %vm1990, %v1925, %v1989
  %vm1992 = vcmask 1044484
  %v1993 = vsel %vm1992, %v1926, %v1991
  %vm1994 = vcmask 1045509
  %v1995 = vsel %vm1994, %v1927, %v1993
  %vm1996 = vcmask 1046534
  %v1997 = vsel %vm1996, %v1928, %v1995
  %vm1998 = vcmask 1047559
  %v1999 = vsel %vm1998, %v1929, %v1997
  %v2000 = vsel %vm1986, %v1931, %v1930
  %v2001 = vsel %vm1988, %v1932, %v2000
  %v2002 = vsel %vm1990, %v1933, %v2001
  %v2003 = vsel %vm1992, %v1934, %v2002
  %v2004 = vsel %vm1994, %v1935, %v2003
  %v2005 = vsel %vm1996, %v1936, %v2004
  %v2006 = vsel %vm1998, %v1937, %v2005
  %v2007 = vsel %vm1986, %v1939, %v1938
  %v2008 = vsel %vm1988, %v1940, %v2007
  %v2009 = vsel %vm1990, %v1941, %v2008
  %v2010 = vsel %vm1992, %v1942, %v2009
  %v2011 = vsel %vm1994, %v1943, %v2010
  %v2012 = vsel %vm1996, %v1944, %v2011
  %v2013 = vsel %vm1998, %v1945, %v2012
  %v2014 = vsel %vm1986, %v1947, %v1946
  %v2015 = vsel %vm1988, %v1948, %v2014
  %v2016 = vsel %vm1990, %v1949, %v2015
  %v2017 = vsel %vm1992, %v1950, %v2016
  %v2018 = vsel %vm1994, %v1951, %v2017
  %v2019 = vsel %vm1996, %v1952, %v2018
  %v2020 = vsel %vm1998, %v1953, %v2019
  %v2021 = vsel %vm1986, %v1955, %v1954
  %v2022 = vsel %vm1988, %v1956, %v2021
  %v2023 = vsel %vm1990, %v1957, %v2022
  %v2024 = vsel %vm1992, %v1958, %v2023
  %v2025 = vsel %vm1994, %v1959, %v2024
  %v2026 = vsel %vm1996, %v1960, %v2025
  %v2027 = vsel %vm1998, %v1961, %v2026
  %v2028 = vsel %vm1986, %v1963, %v1962
  %v2029 = vsel %vm1988, %v1964, %v2028
  %v2030 = vsel %vm1990, %v1965, %v2029
  %v2031 = vsel %vm1992, %v1966, %v2030
  %v2032 = vsel %vm1994, %v1967, %v2031
  %v2033 = vsel %vm1996, %v1968, %v2032
  %v2034 = vsel %vm1998, %v1969, %v2033
  %v2035 = vsel %vm1986, %v1971, %v1970
  %v2036 = vsel %vm1988, %v1972, %v2035
  %v2037 = vsel %vm1990, %v1973, %v2036
  %v2038 = vsel %vm1992, %v1974, %v2037
  %v2039 = vsel %vm1994, %v1975, %v2038
  %v2040 = vsel %vm1996, %v1976, %v2039
  %v2041 = vsel %vm1998, %v1977, %v2040
  %v2042 = vsel %vm1986, %v1979, %v1978
  %v2043 = vsel %vm1988, %v1980, %v2042
  %v2044 = vsel %vm1990, %v1981, %v2043
  %v2045 = vsel %vm1992, %v1982, %v2044
  %v2046 = vsel %vm1994, %v1983, %v2045
  %v2047 = vsel %vm1996, %v1984, %v2046
  %v2048 = vsel %vm1998, %v1985, %v2047
  %v2049 = vpack.c.b16 %v2006, %v1999
  %v2050 = vpack.c.b16 %v2020, %v2013
  %v2051 = vpack.c.b16 %v2034, %v2027
  %v2052 = vpack.c.b16 %v2048, %v2041
  %v2073 = vunpack.c.l.b16 %v1842
  %v2074 = vunpack.c.l.b16 %v1843
  %v2075 = vunpack.c.l.b16 %v1844
  %v2076 = vunpack.c.l.b16 %v1845
  %v2077 = vunpack.c.l.b16 %v1846
  %v2078 = vunpack.c.l.b16 %v1847
  %v2079 = vunpack.c.l.b16 %v1848
  %v2080 = vunpack.c.l.b16 %v1849
  %v2081 = vunpack.c.l.b16 %v1850
  %v2082 = vunpack.c.l.b16 %v1851
  %v2083 = vunpack.c.l.b16 %v1852
  %v2084 = vunpack.c.l.b16 %v1853
  %v2085 = vunpack.c.l.b16 %v1854
  %v2086 = vunpack.c.l.b16 %v1855
  %v2087 = vunpack.c.l.b16 %v1856
  %v2088 = vunpack.c.l.b16 %v1857
  %v2089 = vpack.c.b16 %v2074, %v2073
  %v2090 = vpack.c.b16 %v2076, %v2075
  %v2091 = vpack.c.b16 %v2078, %v2077
  %v2092 = vpack.c.b16 %v2080, %v2079
  %v2093 = vpack.c.b16 %v2082, %v2081
  %v2094 = vpack.c.b16 %v2084, %v2083
  %v2095 = vpack.c.b16 %v2086, %v2085
  %v2096 = vpack.c.b16 %v2088, %v2087
  %2105 = vmatprep.subr.bf16.mxu0 0
  %2106 = vmatpush1.bf16.msra.mxu0 %v2089
  %2107 = vmatprep.subr.bf16.mxu0 0
  %2108 = vmatpush1.bf16.msra.mxu0 %v2090
  %2109 = vmatprep.subr.bf16.mxu0 0
  %2110 = vmatpush1.bf16.msra.mxu0 %v2091
  %2111 = vmatprep.subr.bf16.mxu0 0
  %2112 = vmatpush1.bf16.msra.mxu0 %v2092
  %2113 = vmatprep.subr.bf16.mxu0 0
  %2114 = vmatpush1.bf16.msra.mxu0 %v2093
  %2115 = vmatprep.subr.bf16.mxu0 0
  %2116 = vmatpush1.bf16.msra.mxu0 %v2094
  %2117 = vmatprep.subr.bf16.mxu0 0
  %2118 = vmatpush1.bf16.msra.mxu0 %v2095
  %2119 = vmatprep.subr.bf16.mxu0 0
  %2120 = vmatpush1.bf16.msra.mxu0 %v2096
  %2121 = vmatprep.subr.bf16.mxu0 0
  %2122 = vmatpush1.bf16.msra.mxu0 0
  %2123 = vmatprep.subr.bf16.mxu0 0
  %2124 = vmatpush1.bf16.msra.mxu0 0
  %2125 = vmatprep.subr.bf16.mxu0 0
  %2126 = vmatpush1.bf16.msra.mxu0 0
  %2127 = vmatprep.subr.bf16.mxu0 0
  %2128 = vmatpush1.bf16.msra.mxu0 0
  %2129 = vmatprep.subr.bf16.mxu0 0
  %2130 = vmatpush1.bf16.msra.mxu0 0
  %2131 = vmatprep.subr.bf16.mxu0 0
  %2132 = vmatpush1.bf16.msra.mxu0 0
  %2133 = vmatprep.subr.bf16.mxu0 0
  %2134 = vmatpush1.bf16.msra.mxu0 0
  %2135 = vmatprep.subr.bf16.mxu0 0
  %2136 = vmatpush1.bf16.msra.mxu0 0
  %2137 = vmatprep.mubr.bf16.mxu0 0
  %2138 = vmatmul.mubr.bf16.gmra.mrb[0].mxu0 %v2049
  %v2139 = vpop.f32.mrb[0].mxu0
  %v2140 = vadd.f32 0.0, %v2139
  %v2141 = vpop.f32.mrb[0].mxu0
  %v2142 = vpop.f32.mrb[0].mxu0
  %v2143 = vadd.f32 0.0, %v2142
  %v2144 = vpop.f32.mrb[0].mxu0
  %2145 = vmatprep.mubr.bf16.mxu0 0
  %2146 = vmatmul.mubr.bf16.gmra.mrb[0].mxu0 %v2050
  %v2147 = vpop.f32.mrb[0].mxu0
  %v2148 = vadd.f32 0.0, %v2147
  %v2149 = vpop.f32.mrb[0].mxu0
  %v2150 = vpop.f32.mrb[0].mxu0
  %v2151 = vadd.f32 0.0, %v2150
  %v2152 = vpop.f32.mrb[0].mxu0
  %2153 = vmatprep.mubr.bf16.mxu0 0
  %2154 = vmatmul.mubr.bf16.gmra.mrb[0].mxu0 %v2051
  %v2155 = vpop.f32.mrb[0].mxu0
  %v2156 = vadd.f32 0.0, %v2155
  %v2157 = vpop.f32.mrb[0].mxu0
  %v2158 = vpop.f32.mrb[0].mxu0
  %v2159 = vadd.f32 0.0, %v2158
  %v2160 = vpop.f32.mrb[0].mxu0
  %2161 = vmatprep.mubr.bf16.mxu0 0
  %2162 = vmatmul.mubr.bf16.gmra.mrb[0].mxu0 %v2052
  %v2163 = vpop.f32.mrb[0].mxu0
  %v2164 = vadd.f32 0.0, %v2163
  %v2165 = vpop.f32.mrb[0].mxu0
  %v2166 = vpop.f32.mrb[0].mxu0
  %v2167 = vadd.f32 0.0, %v2166
  %v2168 = vpop.f32.mrb[0].mxu0
  %2169 = vdwg.mxu0
  %v2234 = vunpack.c.l.b16 %v1698
  %v2235 = vunpack.c.l.b16 %v1699
  %v2236 = vunpack.c.l.b16 %v1700
  %v2237 = vunpack.c.l.b16 %v1701
  %v2238 = vunpack.c.l.b16 %v1702
  %v2239 = vunpack.c.l.b16 %v1703
  %v2240 = vunpack.c.l.b16 %v1704
  %v2241 = vunpack.c.l.b16 %v1705
  %v2242 = vunpack.c.l.b16 %v1706
  %v2243 = vunpack.c.l.b16 %v1707
  %v2244 = vunpack.c.l.b16 %v1708
  %v2245 = vunpack.c.l.b16 %v1709
  %v2246 = vunpack.c.l.b16 %v1710
  %v2247 = vunpack.c.l.b16 %v1711
  %v2248 = vunpack.c.l.b16 %v1712
  %v2249 = vunpack.c.l.b16 %v1713
  %v2250 = vunpack.c.l.b16 %v1714
  %v2251 = vunpack.c.l.b16 %v1715
  %v2252 = vunpack.c.l.b16 %v1716
  %v2253 = vunpack.c.l.b16 %v1717
  %v2254 = vunpack.c.l.b16 %v1718
  %v2255 = vunpack.c.l.b16 %v1719
  %v2256 = vunpack.c.l.b16 %v1720
  %v2257 = vunpack.c.l.b16 %v1721
  %v2258 = vunpack.c.l.b16 %v1722
  %v2259 = vunpack.c.l.b16 %v1723
  %v2260 = vunpack.c.l.b16 %v1724
  %v2261 = vunpack.c.l.b16 %v1725
  %v2262 = vunpack.c.l.b16 %v1726
  %v2263 = vunpack.c.l.b16 %v1727
  %v2264 = vunpack.c.l.b16 %v1728
  %v2265 = vunpack.c.l.b16 %v1729
  %v2266 = vunpack.c.l.b16 %v1730
  %v2267 = vunpack.c.l.b16 %v1731
  %v2268 = vunpack.c.l.b16 %v1732
  %v2269 = vunpack.c.l.b16 %v1733
  %v2270 = vunpack.c.l.b16 %v1734
  %v2271 = vunpack.c.l.b16 %v1735
  %v2272 = vunpack.c.l.b16 %v1736
  %v2273 = vunpack.c.l.b16 %v1737
  %v2274 = vunpack.c.l.b16 %v1738
  %v2275 = vunpack.c.l.b16 %v1739
  %v2276 = vunpack.c.l.b16 %v1740
  %v2277 = vunpack.c.l.b16 %v1741
  %v2278 = vunpack.c.l.b16 %v1742
  %v2279 = vunpack.c.l.b16 %v1743
  %v2280 = vunpack.c.l.b16 %v1744
  %v2281 = vunpack.c.l.b16 %v1745
  %v2282 = vunpack.c.l.b16 %v1746
  %v2283 = vunpack.c.l.b16 %v1747
  %v2284 = vunpack.c.l.b16 %v1748
  %v2285 = vunpack.c.l.b16 %v1749
  %v2286 = vunpack.c.l.b16 %v1750
  %v2287 = vunpack.c.l.b16 %v1751
  %v2288 = vunpack.c.l.b16 %v1752
  %v2289 = vunpack.c.l.b16 %v1753
  %v2290 = vunpack.c.l.b16 %v1754
  %v2291 = vunpack.c.l.b16 %v1755
  %v2292 = vunpack.c.l.b16 %v1756
  %v2293 = vunpack.c.l.b16 %v1757
  %v2294 = vunpack.c.l.b16 %v1758
  %v2295 = vunpack.c.l.b16 %v1759
  %v2296 = vunpack.c.l.b16 %v1760
  %v2297 = vunpack.c.l.b16 %v1761
  %v2298 = vsel %vm1986, %v2235, %v2234
  %v2299 = vsel %vm1988, %v2236, %v2298
  %v2300 = vsel %vm1990, %v2237, %v2299
  %v2301 = vsel %vm1992, %v2238, %v2300
  %v2302 = vsel %vm1994, %v2239, %v2301
  %v2303 = vsel %vm1996, %v2240, %v2302
  %v2304 = vsel %vm1998, %v2241, %v2303
  %v2305 = vsel %vm1986, %v2243, %v2242
  %v2306 = vsel %vm1988, %v2244, %v2305
  %v2307 = vsel %vm1990, %v2245, %v2306
  %v2308 = vsel %vm1992, %v2246, %v2307
  %v2309 = vsel %vm1994, %v2247, %v2308
  %v2310 = vsel %vm1996, %v2248, %v2309
  %v2311 = vsel %vm1998, %v2249, %v2310
  %v2312 = vsel %vm1986, %v2251, %v2250
  %v2313 = vsel %vm1988, %v2252, %v2312
  %v2314 = vsel %vm1990, %v2253, %v2313
  %v2315 = vsel %vm1992, %v2254, %v2314
  %v2316 = vsel %vm1994, %v2255, %v2315
  %v2317 = vsel %vm1996, %v2256, %v2316
  %v2318 = vsel %vm1998, %v2257, %v2317
  %v2319 = vsel %vm1986, %v2259, %v2258
  %v2320 = vsel %vm1988, %v2260, %v2319
  %v2321 = vsel %vm1990, %v2261, %v2320
  %v2322 = vsel %vm1992, %v2262, %v2321
  %v2323 = vsel %vm1994, %v2263, %v2322
  %v2324 = vsel %vm1996, %v2264, %v2323
  %v2325 = vsel %vm1998, %v2265, %v2324
  %v2326 = vsel %vm1986, %v2267, %v2266
  %v2327 = vsel %vm1988, %v2268, %v2326
  %v2328 = vsel %vm1990, %v2269, %v2327
  %v2329 = vsel %vm1992, %v2270, %v2328
  %v2330 = vsel %vm1994, %v2271, %v2329
  %v2331 = vsel %vm1996, %v2272, %v2330
  %v2332 = vsel %vm1998, %v2273, %v2331
  %v2333 = vsel %vm1986, %v2275, %v2274
  %v2334 = vsel %vm1988, %v2276, %v2333
  %v2335 = vsel %vm1990, %v2277, %v2334
  %v2336 = vsel %vm1992, %v2278, %v2335
  %v2337 = vsel %vm1994, %v2279, %v2336
  %v2338 = vsel %vm1996, %v2280, %v2337
  %v2339 = vsel %vm1998, %v2281, %v2338
  %v2340 = vsel %vm1986, %v2283, %v2282
  %v2341 = vsel %vm1988, %v2284, %v2340
  %v2342 = vsel %vm1990, %v2285, %v2341
  %v2343 = vsel %vm1992, %v2286, %v2342
  %v2344 = vsel %vm1994, %v2287, %v2343
  %v2345 = vsel %vm1996, %v2288, %v2344
  %v2346 = vsel %vm1998, %v2289, %v2345
  %v2347 = vsel %vm1986, %v2291, %v2290
  %v2348 = vsel %vm1988, %v2292, %v2347
  %v2349 = vsel %vm1990, %v2293, %v2348
  %v2350 = vsel %vm1992, %v2294, %v2349
  %v2351 = vsel %vm1994, %v2295, %v2350
  %v2352 = vsel %vm1996, %v2296, %v2351
  %v2353 = vsel %vm1998, %v2297, %v2352
  %v2354 = vpack.c.b16 %v2311, %v2304
  %v2355 = vpack.c.b16 %v2325, %v2318
  %v2356 = vpack.c.b16 %v2339, %v2332
  %v2357 = vpack.c.b16 %v2353, %v2346
  %v2378 = vunpack.c.l.b16 %v1762
  %v2379 = vunpack.c.l.b16 %v1763
  %v2380 = vunpack.c.l.b16 %v1764
  %v2381 = vunpack.c.l.b16 %v1765
  %v2382 = vunpack.c.l.b16 %v1766
  %v2383 = vunpack.c.l.b16 %v1767
  %v2384 = vunpack.c.l.b16 %v1768
  %v2385 = vunpack.c.l.b16 %v1769
  %v2386 = vunpack.c.l.b16 %v1770
  %v2387 = vunpack.c.l.b16 %v1771
  %v2388 = vunpack.c.l.b16 %v1772
  %v2389 = vunpack.c.l.b16 %v1773
  %v2390 = vunpack.c.l.b16 %v1774
  %v2391 = vunpack.c.l.b16 %v1775
  %v2392 = vunpack.c.l.b16 %v1776
  %v2393 = vunpack.c.l.b16 %v1777
  %v2394 = vpack.c.b16 %v2379, %v2378
  %v2395 = vpack.c.b16 %v2381, %v2380
  %v2396 = vpack.c.b16 %v2383, %v2382
  %v2397 = vpack.c.b16 %v2385, %v2384
  %v2398 = vpack.c.b16 %v2387, %v2386
  %v2399 = vpack.c.b16 %v2389, %v2388
  %v2400 = vpack.c.b16 %v2391, %v2390
  %v2401 = vpack.c.b16 %v2393, %v2392
  %2410 = vmatprep.subr.bf16.mxu0 0
  %2411 = vmatpush1.bf16.msra.mxu0 %v2394
  %2412 = vmatprep.subr.bf16.mxu0 0
  %2413 = vmatpush1.bf16.msra.mxu0 %v2395
  %2414 = vmatprep.subr.bf16.mxu0 0
  %2415 = vmatpush1.bf16.msra.mxu0 %v2396
  %2416 = vmatprep.subr.bf16.mxu0 0
  %2417 = vmatpush1.bf16.msra.mxu0 %v2397
  %2418 = vmatprep.subr.bf16.mxu0 0
  %2419 = vmatpush1.bf16.msra.mxu0 %v2398
  %2420 = vmatprep.subr.bf16.mxu0 0
  %2421 = vmatpush1.bf16.msra.mxu0 %v2399
  %2422 = vmatprep.subr.bf16.mxu0 0
  %2423 = vmatpush1.bf16.msra.mxu0 %v2400
  %2424 = vmatprep.subr.bf16.mxu0 0
  %2425 = vmatpush1.bf16.msra.mxu0 %v2401
  %2426 = vmatprep.subr.bf16.mxu0 0
  %2427 = vmatpush1.bf16.msra.mxu0 0
  %2428 = vmatprep.subr.bf16.mxu0 0
  %2429 = vmatpush1.bf16.msra.mxu0 0
  %2430 = vmatprep.subr.bf16.mxu0 0
  %2431 = vmatpush1.bf16.msra.mxu0 0
  %2432 = vmatprep.subr.bf16.mxu0 0
  %2433 = vmatpush1.bf16.msra.mxu0 0
  %2434 = vmatprep.subr.bf16.mxu0 0
  %2435 = vmatpush1.bf16.msra.mxu0 0
  %2436 = vmatprep.subr.bf16.mxu0 0
  %2437 = vmatpush1.bf16.msra.mxu0 0
  %2438 = vmatprep.subr.bf16.mxu0 0
  %2439 = vmatpush1.bf16.msra.mxu0 0
  %2440 = vmatprep.subr.bf16.mxu0 0
  %2441 = vmatpush1.bf16.msra.mxu0 0
  %2442 = vmatprep.mubr.bf16.mxu0 0
  %2443 = vmatmul.mubr.bf16.gmra.mrb[0].mxu0 %v2354
  %v2444 = vpop.f32.mrb[0].mxu0
  %v2445 = vadd.f32 %v2140, %v2444
  %v2446 = vpop.f32.mrb[0].mxu0
  %v2447 = vpop.f32.mrb[0].mxu0
  %v2448 = vadd.f32 %v2143, %v2447
  %v2449 = vpop.f32.mrb[0].mxu0
  %2450 = vmatprep.mubr.bf16.mxu0 0
  %2451 = vmatmul.mubr.bf16.gmra.mrb[0].mxu0 %v2355
  %v2452 = vpop.f32.mrb[0].mxu0
  %v2453 = vadd.f32 %v2148, %v2452
  %v2454 = vpop.f32.mrb[0].mxu0
  %v2455 = vpop.f32.mrb[0].mxu0
  %v2456 = vadd.f32 %v2151, %v2455
  %v2457 = vpop.f32.mrb[0].mxu0
  %2458 = vmatprep.mubr.bf16.mxu0 0
  %2459 = vmatmul.mubr.bf16.gmra.mrb[0].mxu0 %v2356
  %v2460 = vpop.f32.mrb[0].mxu0
  %v2461 = vadd.f32 %v2156, %v2460
  %v2462 = vpop.f32.mrb[0].mxu0
  %v2463 = vpop.f32.mrb[0].mxu0
  %v2464 = vadd.f32 %v2159, %v2463
  %v2465 = vpop.f32.mrb[0].mxu0
  %2466 = vmatprep.mubr.bf16.mxu0 0
  %2467 = vmatmul.mubr.bf16.gmra.mrb[0].mxu0 %v2357
  %v2468 = vpop.f32.mrb[0].mxu0
  %v2469 = vadd.f32 %v2164, %v2468
  %v2470 = vpop.f32.mrb[0].mxu0
  %v2471 = vpop.f32.mrb[0].mxu0
  %v2472 = vadd.f32 %v2167, %v2471
  %v2473 = vpop.f32.mrb[0].mxu0
  %2474 = vdwg.mxu0
  %v2475 = vld [vmem:[%s7] sm:$0x1]
  %v2477 = vlaneseq
  %v2478 = vshrl.u32 %v2477, 7
  %v2479 = vsub.s32 0, %v2478
  %v2480 = vrot.slane %v2475, %v2479
  %v2482 = vadd.f32 %v2445, %v2480
  %v2483 = vadd.f32 %v2448, %v2480
  %v2484 = vadd.f32 %v2453, %v2480
  %v2485 = vadd.f32 %v2456, %v2480
  %v2486 = vadd.f32 %v2461, %v2480
  %v2487 = vadd.f32 %v2464, %v2480
  %v2488 = vadd.f32 %v2469, %v2480
  %v2489 = vadd.f32 %v2472, %v2480
  %v2490 = vmax.f32 %v2482, 0.0
  %v2491 = vmax.f32 %v2483, 0.0
  %v2492 = vmax.f32 %v2484, 0.0
  %v2493 = vmax.f32 %v2485, 0.0
  %v2494 = vmax.f32 %v2486, 0.0
  %v2495 = vmax.f32 %v2487, 0.0
  %v2496 = vmax.f32 %v2488, 0.0
  %v2497 = vmax.f32 %v2489, 0.0
  %v2498 = vpack.c.bf16 %v2491, %v2490
  %v2499 = vpack.c.bf16 %v2493, %v2492
  %v2500 = vpack.c.bf16 %v2495, %v2494
  %v2501 = vpack.c.bf16 %v2497, %v2496
  %v2502 = vld [vmem:[%s8] sm:$0xf]
  %v2503 = vld [vmem:[%s8 + $0x4] sm:$0xf]
  %v2504 = vld [vmem:[%s8 + $0x8] sm:$0xf]
  %v2505 = vld [vmem:[%s8 + $0xc] sm:$0xf]
  %v2506 = vld [vmem:[%s8 + $0x10] sm:$0xf]
  %v2507 = vld [vmem:[%s8 + $0x14] sm:$0xf]
  %v2508 = vld [vmem:[%s8 + $0x18] sm:$0xf]
  %v2509 = vld [vmem:[%s8 + $0x1c] sm:$0xf]
  %v2510 = vld [vmem:[%s8 + $0x20] sm:$0xf]
  %v2511 = vld [vmem:[%s8 + $0x24] sm:$0xf]
  %v2512 = vld [vmem:[%s8 + $0x28] sm:$0xf]
  %v2513 = vld [vmem:[%s8 + $0x2c] sm:$0xf]
  %v2514 = vld [vmem:[%s8 + $0x30] sm:$0xf]
  %v2515 = vld [vmem:[%s8 + $0x34] sm:$0xf]
  %v2516 = vld [vmem:[%s8 + $0x38] sm:$0xf]
  %v2517 = vld [vmem:[%s8 + $0x3c] sm:$0xf]
  %v2518 = vld [vmem:[%s9] sm:$0x1]
  %v2520 = vlaneseq
  %v2521 = vshrl.u32 %v2520, 7
  %v2522 = vsub.s32 0, %v2521
  %v2523 = vrot.slane %v2518, %v2522
  %v2541 = vunpack.c.l.b16 %v2502
  %v2542 = vunpack.c.l.b16 %v2503
  %v2543 = vunpack.c.l.b16 %v2504
  %v2544 = vunpack.c.l.b16 %v2505
  %v2545 = vunpack.c.l.b16 %v2506
  %v2546 = vunpack.c.l.b16 %v2507
  %v2547 = vunpack.c.l.b16 %v2508
  %v2548 = vunpack.c.l.b16 %v2509
  %v2549 = vunpack.c.l.b16 %v2510
  %v2550 = vunpack.c.l.b16 %v2511
  %v2551 = vunpack.c.l.b16 %v2512
  %v2552 = vunpack.c.l.b16 %v2513
  %v2553 = vunpack.c.l.b16 %v2514
  %v2554 = vunpack.c.l.b16 %v2515
  %v2555 = vunpack.c.l.b16 %v2516
  %v2556 = vunpack.c.l.b16 %v2517
  %v2557 = vpack.c.b16 %v2542, %v2541
  %v2558 = vpack.c.b16 %v2544, %v2543
  %v2559 = vpack.c.b16 %v2546, %v2545
  %v2560 = vpack.c.b16 %v2548, %v2547
  %v2561 = vpack.c.b16 %v2550, %v2549
  %v2562 = vpack.c.b16 %v2552, %v2551
  %v2563 = vpack.c.b16 %v2554, %v2553
  %v2564 = vpack.c.b16 %v2556, %v2555
  %2573 = vmatprep.subr.bf16.mxu0 0
  %2574 = vmatpush1.bf16.msra.mxu0 %v2557
  %2575 = vmatprep.subr.bf16.mxu0 0
  %2576 = vmatpush1.bf16.msra.mxu0 %v2558
  %2577 = vmatprep.subr.bf16.mxu0 0
  %2578 = vmatpush1.bf16.msra.mxu0 %v2559
  %2579 = vmatprep.subr.bf16.mxu0 0
  %2580 = vmatpush1.bf16.msra.mxu0 %v2560
  %2581 = vmatprep.subr.bf16.mxu0 0
  %2582 = vmatpush1.bf16.msra.mxu0 %v2561
  %2583 = vmatprep.subr.bf16.mxu0 0
  %2584 = vmatpush1.bf16.msra.mxu0 %v2562
  %2585 = vmatprep.subr.bf16.mxu0 0
  %2586 = vmatpush1.bf16.msra.mxu0 %v2563
  %2587 = vmatprep.subr.bf16.mxu0 0
  %2588 = vmatpush1.bf16.msra.mxu0 %v2564
  %2589 = vmatprep.subr.bf16.mxu0 0
  %2590 = vmatpush1.bf16.msra.mxu0 0
  %2591 = vmatprep.subr.bf16.mxu0 0
  %2592 = vmatpush1.bf16.msra.mxu0 0
  %2593 = vmatprep.subr.bf16.mxu0 0
  %2594 = vmatpush1.bf16.msra.mxu0 0
  %2595 = vmatprep.subr.bf16.mxu0 0
  %2596 = vmatpush1.bf16.msra.mxu0 0
  %2597 = vmatprep.subr.bf16.mxu0 0
  %2598 = vmatpush1.bf16.msra.mxu0 0
  %2599 = vmatprep.subr.bf16.mxu0 0
  %2600 = vmatpush1.bf16.msra.mxu0 0
  %2601 = vmatprep.subr.bf16.mxu0 0
  %2602 = vmatpush1.bf16.msra.mxu0 0
  %2603 = vmatprep.subr.bf16.mxu0 0
  %2604 = vmatpush1.bf16.msra.mxu0 0
  %2605 = vmatprep.mubr.bf16.mxu0 0
  %2606 = vmatmul.mubr.bf16.gmra.mrb[0].mxu0 %v2498
  %v2607 = vpop.f32.mrb[0].mxu0
  %v2608 = vadd.f32 %v2523, %v2607
  %v2609 = vpop.f32.mrb[0].mxu0
  %v2610 = vpop.f32.mrb[0].mxu0
  %v2611 = vadd.f32 %v2523, %v2610
  %v2612 = vpop.f32.mrb[0].mxu0
  %2613 = vmatprep.mubr.bf16.mxu0 0
  %2614 = vmatmul.mubr.bf16.gmra.mrb[0].mxu0 %v2499
  %v2615 = vpop.f32.mrb[0].mxu0
  %v2616 = vadd.f32 %v2523, %v2615
  %v2617 = vpop.f32.mrb[0].mxu0
  %v2618 = vpop.f32.mrb[0].mxu0
  %v2619 = vadd.f32 %v2523, %v2618
  %v2620 = vpop.f32.mrb[0].mxu0
  %2621 = vmatprep.mubr.bf16.mxu0 0
  %2622 = vmatmul.mubr.bf16.gmra.mrb[0].mxu0 %v2500
  %v2623 = vpop.f32.mrb[0].mxu0
  %v2624 = vadd.f32 %v2523, %v2623
  %v2625 = vpop.f32.mrb[0].mxu0
  %v2626 = vpop.f32.mrb[0].mxu0
  %v2627 = vadd.f32 %v2523, %v2626
  %v2628 = vpop.f32.mrb[0].mxu0
  %2629 = vmatprep.mubr.bf16.mxu0 0
  %2630 = vmatmul.mubr.bf16.gmra.mrb[0].mxu0 %v2501
  %v2631 = vpop.f32.mrb[0].mxu0
  %v2632 = vadd.f32 %v2523, %v2631
  %v2633 = vpop.f32.mrb[0].mxu0
  %v2634 = vpop.f32.mrb[0].mxu0
  %v2635 = vadd.f32 %v2523, %v2634
  %v2636 = vpop.f32.mrb[0].mxu0
  %2637 = vdwg.mxu0
  %v2638 = vsel %vm463, %v2608, -inf
  %v2639 = vrot.slane %v2638, 4
  %v2640 = vmax.f32 %v2638, %v2639
  %v2641 = vrot.slane %v2640, 2
  %v2642 = vmax.f32 %v2640, %v2641
  %v2643 = vrot.slane %v2642, 1
  %v2644 = vmax.f32 %v2642, %v2643
  %v2645 = vsel %vm463, %v2611, -inf
  %v2646 = vrot.slane %v2645, 4
  %v2647 = vmax.f32 %v2645, %v2646
  %v2648 = vrot.slane %v2647, 2
  %v2649 = vmax.f32 %v2647, %v2648
  %v2650 = vrot.slane %v2649, 1
  %v2651 = vmax.f32 %v2649, %v2650
  %v2652 = vsel %vm463, %v2616, -inf
  %v2653 = vrot.slane %v2652, 4
  %v2654 = vmax.f32 %v2652, %v2653
  %v2655 = vrot.slane %v2654, 2
  %v2656 = vmax.f32 %v2654, %v2655
  %v2657 = vrot.slane %v2656, 1
  %v2658 = vmax.f32 %v2656, %v2657
  %v2659 = vsel %vm463, %v2619, -inf
  %v2660 = vrot.slane %v2659, 4
  %v2661 = vmax.f32 %v2659, %v2660
  %v2662 = vrot.slane %v2661, 2
  %v2663 = vmax.f32 %v2661, %v2662
  %v2664 = vrot.slane %v2663, 1
  %v2665 = vmax.f32 %v2663, %v2664
  %v2666 = vsel %vm463, %v2624, -inf
  %v2667 = vrot.slane %v2666, 4
  %v2668 = vmax.f32 %v2666, %v2667
  %v2669 = vrot.slane %v2668, 2
  %v2670 = vmax.f32 %v2668, %v2669
  %v2671 = vrot.slane %v2670, 1
  %v2672 = vmax.f32 %v2670, %v2671
  %v2673 = vsel %vm463, %v2627, -inf
  %v2674 = vrot.slane %v2673, 4
  %v2675 = vmax.f32 %v2673, %v2674
  %v2676 = vrot.slane %v2675, 2
  %v2677 = vmax.f32 %v2675, %v2676
  %v2678 = vrot.slane %v2677, 1
  %v2679 = vmax.f32 %v2677, %v2678
  %v2680 = vsel %vm463, %v2632, -inf
  %v2681 = vrot.slane %v2680, 4
  %v2682 = vmax.f32 %v2680, %v2681
  %v2683 = vrot.slane %v2682, 2
  %v2684 = vmax.f32 %v2682, %v2683
  %v2685 = vrot.slane %v2684, 1
  %v2686 = vmax.f32 %v2684, %v2685
  %v2687 = vsel %vm463, %v2635, -inf
  %v2688 = vrot.slane %v2687, 4
  %v2689 = vmax.f32 %v2687, %v2688
  %v2690 = vrot.slane %v2689, 2
  %v2691 = vmax.f32 %v2689, %v2690
  %v2692 = vrot.slane %v2691, 1
  %v2693 = vmax.f32 %v2691, %v2692
  %v2694 = vsel %vm463, %v2608, inf
  %v2695 = vrot.slane %v2694, 4
  %v2696 = vmin.f32 %v2694, %v2695
  %v2697 = vrot.slane %v2696, 2
  %v2698 = vmin.f32 %v2696, %v2697
  %v2699 = vrot.slane %v2698, 1
  %v2700 = vmin.f32 %v2698, %v2699
  %v2701 = vsel %vm463, %v2611, inf
  %v2702 = vrot.slane %v2701, 4
  %v2703 = vmin.f32 %v2701, %v2702
  %v2704 = vrot.slane %v2703, 2
  %v2705 = vmin.f32 %v2703, %v2704
  %v2706 = vrot.slane %v2705, 1
  %v2707 = vmin.f32 %v2705, %v2706
  %v2708 = vsel %vm463, %v2616, inf
  %v2709 = vrot.slane %v2708, 4
  %v2710 = vmin.f32 %v2708, %v2709
  %v2711 = vrot.slane %v2710, 2
  %v2712 = vmin.f32 %v2710, %v2711
  %v2713 = vrot.slane %v2712, 1
  %v2714 = vmin.f32 %v2712, %v2713
  %v2715 = vsel %vm463, %v2619, inf
  %v2716 = vrot.slane %v2715, 4
  %v2717 = vmin.f32 %v2715, %v2716
  %v2718 = vrot.slane %v2717, 2
  %v2719 = vmin.f32 %v2717, %v2718
  %v2720 = vrot.slane %v2719, 1
  %v2721 = vmin.f32 %v2719, %v2720
  %v2722 = vsel %vm463, %v2624, inf
  %v2723 = vrot.slane %v2722, 4
  %v2724 = vmin.f32 %v2722, %v2723
  %v2725 = vrot.slane %v2724, 2
  %v2726 = vmin.f32 %v2724, %v2725
  %v2727 = vrot.slane %v2726, 1
  %v2728 = vmin.f32 %v2726, %v2727
  %v2729 = vsel %vm463, %v2627, inf
  %v2730 = vrot.slane %v2729, 4
  %v2731 = vmin.f32 %v2729, %v2730
  %v2732 = vrot.slane %v2731, 2
  %v2733 = vmin.f32 %v2731, %v2732
  %v2734 = vrot.slane %v2733, 1
  %v2735 = vmin.f32 %v2733, %v2734
  %v2736 = vsel %vm463, %v2632, inf
  %v2737 = vrot.slane %v2736, 4
  %v2738 = vmin.f32 %v2736, %v2737
  %v2739 = vrot.slane %v2738, 2
  %v2740 = vmin.f32 %v2738, %v2739
  %v2741 = vrot.slane %v2740, 1
  %v2742 = vmin.f32 %v2740, %v2741
  %v2743 = vsel %vm463, %v2635, inf
  %v2744 = vrot.slane %v2743, 4
  %v2745 = vmin.f32 %v2743, %v2744
  %v2746 = vrot.slane %v2745, 2
  %v2747 = vmin.f32 %v2745, %v2746
  %v2748 = vrot.slane %v2747, 1
  %v2749 = vmin.f32 %v2747, %v2748
  %v2750 = vsel %vm463, %v2608, 0.0
  %v2751 = vrot.slane %v2750, 4
  %v2752 = vadd.f32 %v2750, %v2751
  %v2753 = vrot.slane %v2752, 2
  %v2754 = vadd.f32 %v2752, %v2753
  %v2755 = vrot.slane %v2754, 1
  %v2756 = vadd.f32 %v2754, %v2755
  %v2757 = vsel %vm463, %v2611, 0.0
  %v2758 = vrot.slane %v2757, 4
  %v2759 = vadd.f32 %v2757, %v2758
  %v2760 = vrot.slane %v2759, 2
  %v2761 = vadd.f32 %v2759, %v2760
  %v2762 = vrot.slane %v2761, 1
  %v2763 = vadd.f32 %v2761, %v2762
  %v2764 = vsel %vm463, %v2616, 0.0
  %v2765 = vrot.slane %v2764, 4
  %v2766 = vadd.f32 %v2764, %v2765
  %v2767 = vrot.slane %v2766, 2
  %v2768 = vadd.f32 %v2766, %v2767
  %v2769 = vrot.slane %v2768, 1
  %v2770 = vadd.f32 %v2768, %v2769
  %v2771 = vsel %vm463, %v2619, 0.0
  %v2772 = vrot.slane %v2771, 4
  %v2773 = vadd.f32 %v2771, %v2772
  %v2774 = vrot.slane %v2773, 2
  %v2775 = vadd.f32 %v2773, %v2774
  %v2776 = vrot.slane %v2775, 1
  %v2777 = vadd.f32 %v2775, %v2776
  %v2778 = vsel %vm463, %v2624, 0.0
  %v2779 = vrot.slane %v2778, 4
  %v2780 = vadd.f32 %v2778, %v2779
  %v2781 = vrot.slane %v2780, 2
  %v2782 = vadd.f32 %v2780, %v2781
  %v2783 = vrot.slane %v2782, 1
  %v2784 = vadd.f32 %v2782, %v2783
  %v2785 = vsel %vm463, %v2627, 0.0
  %v2786 = vrot.slane %v2785, 4
  %v2787 = vadd.f32 %v2785, %v2786
  %v2788 = vrot.slane %v2787, 2
  %v2789 = vadd.f32 %v2787, %v2788
  %v2790 = vrot.slane %v2789, 1
  %v2791 = vadd.f32 %v2789, %v2790
  %v2792 = vsel %vm463, %v2632, 0.0
  %v2793 = vrot.slane %v2792, 4
  %v2794 = vadd.f32 %v2792, %v2793
  %v2795 = vrot.slane %v2794, 2
  %v2796 = vadd.f32 %v2794, %v2795
  %v2797 = vrot.slane %v2796, 1
  %v2798 = vadd.f32 %v2796, %v2797
  %v2799 = vsel %vm463, %v2635, 0.0
  %v2800 = vrot.slane %v2799, 4
  %v2801 = vadd.f32 %v2799, %v2800
  %v2802 = vrot.slane %v2801, 2
  %v2803 = vadd.f32 %v2801, %v2802
  %v2804 = vrot.slane %v2803, 1
  %v2805 = vadd.f32 %v2803, %v2804
  %v2806 = vmul.f32 %v2756, 0.125
  %v2807 = vmul.f32 %v2763, 0.125
  %v2808 = vmul.f32 %v2770, 0.125
  %v2809 = vmul.f32 %v2777, 0.125
  %v2810 = vmul.f32 %v2784, 0.125
  %v2811 = vmul.f32 %v2791, 0.125
  %v2812 = vmul.f32 %v2798, 0.125
  %v2813 = vmul.f32 %v2805, 0.125
  %v2822 = vsel %vm1986, %v2651, %v2644
  %v2823 = vsel %vm1988, %v2658, %v2822
  %v2824 = vsel %vm1990, %v2665, %v2823
  %v2825 = vsel %vm1992, %v2672, %v2824
  %v2826 = vsel %vm1994, %v2679, %v2825
  %v2827 = vsel %vm1996, %v2686, %v2826
  %v2828 = vsel %vm1998, %v2693, %v2827
  %v2838 = vsel %vm1986, %v2707, %v2700
  %v2839 = vsel %vm1988, %v2714, %v2838
  %v2840 = vsel %vm1990, %v2721, %v2839
  %v2841 = vsel %vm1992, %v2728, %v2840
  %v2842 = vsel %vm1994, %v2735, %v2841
  %v2843 = vsel %vm1996, %v2742, %v2842
  %v2844 = vsel %vm1998, %v2749, %v2843
  %2845 = vrot.lane.b32.xlu0 %v2844, 64
  %v2846 = vpop.permute.xlu0 %2845
  %v2856 = vsel %vm1986, %v2763, %v2756
  %v2857 = vsel %vm1988, %v2770, %v2856
  %v2858 = vsel %vm1990, %v2777, %v2857
  %v2859 = vsel %vm1992, %v2784, %v2858
  %v2860 = vsel %vm1994, %v2791, %v2859
  %v2861 = vsel %vm1996, %v2798, %v2860
  %v2862 = vsel %vm1998, %v2805, %v2861
  %v2872 = vsel %vm1986, %v2807, %v2806
  %v2873 = vsel %vm1988, %v2808, %v2872
  %v2874 = vsel %vm1990, %v2809, %v2873
  %v2875 = vsel %vm1992, %v2810, %v2874
  %v2876 = vsel %vm1994, %v2811, %v2875
  %v2877 = vsel %vm1996, %v2812, %v2876
  %v2878 = vsel %vm1998, %v2813, %v2877
  %2879 = vrot.lane.b32.xlu0 %v2878, 64
  %v2880 = vpop.permute.xlu0 %2879
  %v2882 = vsel %vm463, %v2828, %v2846
  %v2883 = vsel %vm463, %v2862, %v2880
  %v2884 = vmax.f32 %v2882, 0.0
  %v2885 = vmax.f32 %v2883, 0.0
  %2886 = vst [vmem:[%s10] sm:$0xff] %v2884
  %2887 = vst [vmem:[%s10 + $0x8] sm:$0xff] %v2885
  // Predicated region
  $region42: #{net_forward.2} parent=0 // pred_check
    _
  $region43: #{net_forward.2} parent=0 // pred_check_branch
    %2889 = sbr.rel (0) target = $region45
  $region44: #{net_forward.2} parent=0 // pred_region
    _
  $region45: #{net_forward.2} parent=0 // pred_fallthru
    _
  // Predicated region
  $region46: #{net_forward.2} parent=0 // pred_check
    _
  $region47: #{net_forward.2} parent=0 // pred_check_branch
    %2891 = sbr.rel (0) target = $region49
  $region48: #{net_forward.2} parent=0 // pred_region
    _
  $region49: #{net_forward.2} parent=0 // pred_fallthru
    _

</llo_original>
